<compile_context>
chip_gen: v7x
topology: tpu7x:2x2x1
jax: 0.10.0
libtpu: 0.0.40
codegen_flags: <defaults>
</compile_context>

<pallas_src>
import jax
import jax.numpy as jnp
from jax.experimental import pallas as pl
from jax.experimental.pallas import tpu as pltpu

LANES = 128                      # matmul width (weights padded to one lane group)
MAX_TILE_M = 2048                # row-tile cap (multiple of 16)
SPLIT_ROWS = 1024                # above this, force >= 2 grid steps (v7x: 2 TCs)
VMEM_LIMIT_BYTES = 32 * 1024 * 1024


def _round_up(x, m):
    return ((x + m - 1) // m) * m


def _m_tiling(m):
    """Row tile (multiple of 16 = bf16 sublane pack) and padded row count."""
    m16 = _round_up(m, 16)
    n_tiles = -(-m16 // MAX_TILE_M)
    if m16 > SPLIT_ROWS:
        n_tiles = max(n_tiles, 2)            # give both v7x TensorCores work
    tile = _round_up(-(-m16 // n_tiles), 16)
    return tile, _round_up(m16, tile)


def _pad2d(a, rows, cols):
    return jnp.pad(a, ((0, rows - a.shape[0]), (0, cols - a.shape[1])))


# ---------------------------------------------------------------------------
# Pallas kernels
# ---------------------------------------------------------------------------
def _conv_relu1_pool_kernel(p_ref, w_ref, b_ref, o_ref):
    """Fused conv (im2col matmul) + bias + ReLU1 + 2x2 average pool.

    p_ref: (4, TM, K) bf16 stacked patches (one slab per 2x2 pool offset).
    w_ref: (K, 128) bf16;  b_ref: (1, 128) f32;  o_ref: (TM, C_out) bf16.
    """
    _, tm, k = p_ref.shape
    c_out = o_ref.shape[-1]
    p = p_ref[...].reshape(4 * tm, k)               # merge offset dim (TM % 16 == 0)
    y = jnp.dot(p, w_ref[...], preferred_element_type=jnp.float32) + b_ref[...]
    y = jnp.minimum(jnp.maximum(y, 0.0), 1.0)       # ReLU1 (clamp to [0,1]) per offset
    y = y[:, :c_out]                                # drop padded output channels
    acc = y[0:tm] + y[tm:2 * tm] + y[2 * tm:3 * tm] + y[3 * tm:4 * tm]
    o_ref[...] = (acc * 0.25).astype(o_ref.dtype)   # 2x2 average pool


def _tail_kernel(x_ref, w1_ref, b1_ref, w2_ref, b2_ref, w3_ref, b3_ref, o_ref):
    """Fused c5 (full-extent conv == matmul) + f6 + output; weights VMEM-resident."""
    h = jnp.dot(x_ref[...], w1_ref[...], preferred_element_type=jnp.float32) + b1_ref[...]
    h = jnp.minimum(jnp.maximum(h, 0.0), 1.0).astype(jnp.bfloat16)        # ReLU1 (c5)
    h = jnp.dot(h, w2_ref[...], preferred_element_type=jnp.float32) + b2_ref[...]
    h = jnp.minimum(jnp.maximum(h, 0.0), 1.0).astype(jnp.bfloat16)        # ReLU1 (f6)
    y = jnp.dot(h, w3_ref[...], preferred_element_type=jnp.float32) + b3_ref[...]
    o_ref[...] = y[:, :o_ref.shape[-1]].astype(o_ref.dtype)               # no activation


# ---------------------------------------------------------------------------
# im2col glue (plain JAX: pad / slice / concat / stack only, all in bf16)
# ---------------------------------------------------------------------------
def _pooled_im2col(x, kh, kw, pad, k_pad):
    """x: (N,H,W,C) bf16 -> (4, N*Hp*Wp, k_pad) stacked patches (one slab per
    2x2-pool offset; feature order (kh, kw, C); K zero-padded to k_pad)."""
    if pad:
        x = jnp.pad(x, ((0, 0), (pad, pad), (pad, pad), (0, 0)))
    n, h, w, c = x.shape
    ho, wo = h - kh + 1, w - kw + 1
    hp, wp = ho // 2, wo // 2                          # AvgPool2d floor mode
    cols = [x[:, i:i + ho, j:j + wo, :] for i in range(kh) for j in range(kw)]
    p = jnp.concatenate(cols, axis=-1)                 # (N, Ho, Wo, kh*kw*C)
    p = p[:, :2 * hp, :2 * wp, :]                      # crop odd remainder
    k = kh * kw * c
    slabs = [p[:, di::2, dj::2, :].reshape(n * hp * wp, k)
             for di in range(2) for dj in range(2)]
    stacked = jnp.stack(slabs, axis=0)                 # (4, M, K)
    if k_pad > k:
        stacked = jnp.pad(stacked, ((0, 0), (0, 0), (0, k_pad - k)))
    return stacked, hp, wp


# ---------------------------------------------------------------------------
# Pallas-call wrappers
# ---------------------------------------------------------------------------
def conv_relu1_pool(x, w_mat, b_row, *, kh, kw, pad, c_out):
    """Conv2d(stride 1) + ReLU1 + AvgPool2d(2,2) in a single pallas_call.

    x: (N,H,W,C) bf16; w_mat: (k_pad, 128) bf16 (pre-reordered); b_row: (1, 128) f32.
    Returns (N, Ho//2, Wo//2, c_out) bf16 (only real channels hit HBM).
    """
    n = x.shape[0]
    k_pad = w_mat.shape[0]
    stacked, hp, wp = _pooled_im2col(x, kh, kw, pad, k_pad)
    m = n * hp * wp
    tile_m, m_pad = _m_tiling(m)
    if m_pad > m:
        stacked = jnp.pad(stacked, ((0, 0), (0, m_pad - m), (0, 0)))

    full = lambda i: (0, 0)
    out = pl.pallas_call(
        _conv_relu1_pool_kernel,
        out_shape=jax.ShapeDtypeStruct((m_pad, c_out), jnp.bfloat16),
        grid_spec=pltpu.PrefetchScalarGridSpec(
            num_scalar_prefetch=0,
            grid=(m_pad // tile_m,),
            in_specs=[pl.BlockSpec((4, tile_m, k_pad), lambda i: (0, i, 0)),
                      pl.BlockSpec((k_pad, LANES), full),
                      pl.BlockSpec((1, LANES), full)],
            out_specs=pl.BlockSpec((tile_m, c_out), lambda i: (i, 0))),
        compiler_params=pltpu.CompilerParams(
            dimension_semantics=("parallel",),
            vmem_limit_bytes=VMEM_LIMIT_BYTES),
    )(stacked, w_mat, b_row)
    return out[:m].reshape(n, hp, wp, c_out)


def tail_fc(x_flat, w1, b1, w2, b2, w3, b3, *, n_out):
    """Fused c5 + ReLU1 + f6 + ReLU1 + output: (N, 400) bf16 -> (N, n_out) f32."""
    m = x_flat.shape[0]
    k_pad = w1.shape[0]
    tile_m, m_pad = _m_tiling(m)
    x_p = _pad2d(x_flat, m_pad, k_pad)

    full = lambda i: (0, 0)
    out = pl.pallas_call(
        _tail_kernel,
        out_shape=jax.ShapeDtypeStruct((m_pad, n_out), jnp.float32),
        grid_spec=pltpu.PrefetchScalarGridSpec(
            num_scalar_prefetch=0,
            grid=(m_pad // tile_m,),
            in_specs=[pl.BlockSpec((tile_m, k_pad), lambda i: (i, 0)),
                      pl.BlockSpec(w1.shape, full), pl.BlockSpec(b1.shape, full),
                      pl.BlockSpec(w2.shape, full), pl.BlockSpec(b2.shape, full),
                      pl.BlockSpec(w3.shape, full), pl.BlockSpec(b3.shape, full)],
            out_specs=pl.BlockSpec((tile_m, n_out), lambda i: (i, 0))),
        compiler_params=pltpu.CompilerParams(
            dimension_semantics=("parallel",),
            vmem_limit_bytes=VMEM_LIMIT_BYTES),
    )(x_p, w1, b1, w2, b2, w3, b3)
    return out[:m]


# ---------------------------------------------------------------------------
# Parameters (PyTorch layout) and one-time preparation (hoisted out of jit)
# ---------------------------------------------------------------------------
def init_params(key):
    ks = jax.random.split(key, 10)
    s = 0.05
    return {
        "c1_w": jax.random.normal(ks[0], (6, 1, 5, 5), jnp.float32) * s,
        "c1_b": jax.random.normal(ks[1], (6,), jnp.float32) * s,
        "c3_w": jax.random.normal(ks[2], (16, 6, 5, 5), jnp.float32) * s,
        "c3_b": jax.random.normal(ks[3], (16,), jnp.float32) * s,
        "c5_w": jax.random.normal(ks[4], (120, 16, 5, 5), jnp.float32) * s,
        "c5_b": jax.random.normal(ks[5], (120,), jnp.float32) * s,
        "f6_w": jax.random.normal(ks[6], (84, 120), jnp.float32) * s,
        "f6_b": jax.random.normal(ks[7], (84,), jnp.float32) * s,
        "out_w": jax.random.normal(ks[8], (10, 84), jnp.float32) * s,
        "out_b": jax.random.normal(ks[9], (10,), jnp.float32) * s,
    }


def prepare_params(params):
    """Reorder PyTorch-layout weights for NHWC im2col matmuls; zero-pad K only
    to the bf16 sublane multiple (16), N to 128 lanes; cast to bf16. Run once."""
    def conv_w(w, k_pad):
        o, c, kh, kw = w.shape
        m = w.transpose(2, 3, 1, 0).reshape(kh * kw * c, o)      # (kh,kw,C) x O
        return _pad2d(m, k_pad, LANES).astype(jnp.bfloat16)

    def fc_w(w, k_pad):                                          # PyTorch (out, in)
        return _pad2d(w.T, k_pad, LANES).astype(jnp.bfloat16)

    def bias(b):
        return jnp.pad(b, (0, LANES - b.shape[0])).reshape(1, LANES).astype(jnp.float32)

    return {
        "c1_w": conv_w(params["c1_w"], 32),    "c1_b": bias(params["c1_b"]),    # K=25->32
        "c3_w": conv_w(params["c3_w"], 160),   "c3_b": bias(params["c3_b"]),    # K=150->160
        "c5_w": conv_w(params["c5_w"], 400),   "c5_b": bias(params["c5_b"]),    # K=400
        "f6_w": fc_w(params["f6_w"], LANES),   "f6_b": bias(params["f6_b"]),    # K=120->128
        "out_w": fc_w(params["out_w"], LANES), "out_b": bias(params["out_b"]),  # K=84->128
    }


# ---------------------------------------------------------------------------
# LeNet forward
# ---------------------------------------------------------------------------
def lenet_forward(p, x):
    # x: (N, 1, 28, 28) float32 (NCHW, PyTorch convention)
    n = x.shape[0]
    x = x.transpose(0, 2, 3, 1).astype(jnp.bfloat16)                        # NHWC bf16, once
    x = conv_relu1_pool(x, p["c1_w"], p["c1_b"], kh=5, kw=5, pad=2, c_out=6)    # (N,14,14,6)
    x = conv_relu1_pool(x, p["c3_w"], p["c3_b"], kh=5, kw=5, pad=0, c_out=16)   # (N,5,5,16)
    x = x.reshape(n, -1)                                                    # NHWC-flat (N,400)
    # c5 covers the full 5x5 extent, so it is exactly a matmul on the NHWC-flat
    # activation (weights were reordered to (kh,kw,C,O) in prepare_params).
    return tail_fc(x, p["c5_w"], p["c5_b"], p["f6_w"], p["f6_b"],
                   p["out_w"], p["out_b"], n_out=10)                        # (N,10) f32


if __name__ == "__main__":
    key = jax.random.PRNGKey(0)
    pkey, xkey = jax.random.split(key)
    params = prepare_params(init_params(pkey))        # one-time weight prep (outside jit)
    # LeNet geometry fixes the spatial size: 28x28 single-channel input.
    x = jax.random.normal(xkey, (2, 1, 28, 28), jnp.float32)

    out = jax.jit(lenet_forward)(params, x)
    out = jax.block_until_ready(out)
    assert out.shape == (2, 10) and out.dtype == jnp.float32
    print("KERNEL_OK")
</pallas_src>

<mosaic_0001>
module attributes {stable_mosaic.version = 11 : i64} {
  func.func @_conv_relu1_pool_kernel(%arg0: i32, %arg1: memref<4x400x32xbf16, #tpu.memory_space<vmem>>, %arg2: memref<32x128xbf16, #tpu.memory_space<vmem>>, %arg3: memref<1x128xf32, #tpu.memory_space<vmem>>, %arg4: memref<400x6xbf16, #tpu.memory_space<vmem>>) attributes {dimension_semantics = [#tpu.dimension_semantics<parallel>], iteration_bounds = array<i64: 1>, scalar_prefetch = 0 : i64, scratch_operands = 0 : i64, tpu.core_type = #tpu.core_type<tc>, window_params = [{transform_indices = @transform_0, window_bounds = array<i64: 4, 400, 32>}, {pipeline_mode = #tpu.pipeline_mode<synchronous>, transform_indices = @transform_1, window_bounds = array<i64: 32, 128>}, {pipeline_mode = #tpu.pipeline_mode<synchronous>, transform_indices = @transform_2, window_bounds = array<i64: 1, 128>}, {transform_indices = @transform_3, window_bounds = array<i64: 400, 6>}]} {
    %c0 = arith.constant 0 : index
    %c0_0 = arith.constant 0 : index
    %c0_1 = arith.constant 0 : index
    %0 = vector.load %arg1[%c0, %c0_0, %c0_1] : memref<4x400x32xbf16, #tpu.memory_space<vmem>>, vector<4x400x32xbf16>
    %1 = vector.shape_cast %0 : vector<4x400x32xbf16> to vector<1600x32xbf16>
    %c0_2 = arith.constant 0 : index
    %c0_3 = arith.constant 0 : index
    %2 = vector.load %arg2[%c0_2, %c0_3] : memref<32x128xbf16, #tpu.memory_space<vmem>>, vector<32x128xbf16>
    %cst = arith.constant dense<0.000000e+00> : vector<1600x128xf32>
    %3 = tpu.matmul %1, %2, %cst {dimension_numbers = #tpu.dot_dimension_numbers<[1], [0], [0], [1], [0, 0, 1, 1], [], []>} : vector<1600x32xbf16>, vector<32x128xbf16>, vector<1600x128xf32> -> vector<1600x128xf32>
    %c0_4 = arith.constant 0 : index
    %c0_5 = arith.constant 0 : index
    %4 = vector.load %arg3[%c0_4, %c0_5] : memref<1x128xf32, #tpu.memory_space<vmem>>, vector<1x128xf32>
    %5 = vector.broadcast %4 : vector<1x128xf32> to vector<1600x128xf32>
    %6 = arith.addf %3, %5 : vector<1600x128xf32>
    %cst_6 = arith.constant 0.000000e+00 : f32
    %7 = vector.broadcast %cst_6 : f32 to vector<1600x128xf32>
    %8 = arith.maximumf %6, %7 : vector<1600x128xf32>
    %cst_7 = arith.constant 1.000000e+00 : f32
    %9 = vector.broadcast %cst_7 : f32 to vector<1600x128xf32>
    %10 = arith.minimumf %8, %9 : vector<1600x128xf32>
    %11 = vector.extract_strided_slice %10 {offsets = [0, 0], sizes = [1600, 6], strides = [1, 1]} : vector<1600x128xf32> to vector<1600x6xf32>
    %12 = vector.extract_strided_slice %11 {offsets = [0, 0], sizes = [400, 6], strides = [1, 1]} : vector<1600x6xf32> to vector<400x6xf32>
    %13 = vector.extract_strided_slice %11 {offsets = [400, 0], sizes = [400, 6], strides = [1, 1]} : vector<1600x6xf32> to vector<400x6xf32>
    %14 = arith.addf %12, %13 : vector<400x6xf32>
    %15 = vector.extract_strided_slice %11 {offsets = [800, 0], sizes = [400, 6], strides = [1, 1]} : vector<1600x6xf32> to vector<400x6xf32>
    %16 = arith.addf %14, %15 : vector<400x6xf32>
    %17 = vector.extract_strided_slice %11 {offsets = [1200, 0], sizes = [400, 6], strides = [1, 1]} : vector<1600x6xf32> to vector<400x6xf32>
    %18 = arith.addf %16, %17 : vector<400x6xf32>
    %cst_8 = arith.constant 2.500000e-01 : f32
    %19 = vector.broadcast %cst_8 : f32 to vector<400x6xf32>
    %20 = arith.mulf %18, %19 : vector<400x6xf32>
    %21 = arith.truncf %20 : vector<400x6xf32> to vector<400x6xbf16>
    %c0_9 = arith.constant 0 : index
    %c0_10 = arith.constant 0 : index
    %22 = vector.load %arg4[%c0_9, %c0_10] : memref<400x6xbf16, #tpu.memory_space<vmem>>, vector<400x6xbf16>
    tpu.vector_store %arg4[%c0_9, %c0_10], %21 {strides = array<i32>} : memref<400x6xbf16, #tpu.memory_space<vmem>>, vector<400x6xbf16>,
    return
  }
  func.func @transform_0(%arg0: i32) -> (i32, i32, i32) {
    %c0_i32 = arith.constant 0 : i32
    %c0_i32_0 = arith.constant 0 : i32
    %c0_i32_1 = arith.constant 0 : i32
    return %c0_i32, %arg0, %c0_i32_0 : i32, i32, i32
  }
  func.func @transform_1(%arg0: i32) -> (i32, i32) {
    %c0_i32 = arith.constant 0 : i32
    %c0_i32_0 = arith.constant 0 : i32
    %c0_i32_1 = arith.constant 0 : i32
    return %c0_i32, %c0_i32_0 : i32, i32
  }
  func.func @transform_2(%arg0: i32) -> (i32, i32) {
    %c0_i32 = arith.constant 0 : i32
    %c0_i32_0 = arith.constant 0 : i32
    %c0_i32_1 = arith.constant 0 : i32
    return %c0_i32, %c0_i32_0 : i32, i32
  }
  func.func @transform_3(%arg0: i32) -> (i32, i32) {
    %c0_i32 = arith.constant 0 : i32
    %c0_i32_0 = arith.constant 0 : i32
    return %arg0, %c0_i32 : i32, i32
  }
}

module attributes {stable_mosaic.version = 11 : i64} {
  func.func @_conv_relu1_pool_kernel(%arg0: i32, %arg1: memref<4x64x160xbf16, #tpu.memory_space<vmem>>, %arg2: memref<160x128xbf16, #tpu.memory_space<vmem>>, %arg3: memref<1x128xf32, #tpu.memory_space<vmem>>, %arg4: memref<64x16xbf16, #tpu.memory_space<vmem>>) attributes {dimension_semantics = [#tpu.dimension_semantics<parallel>], iteration_bounds = array<i64: 1>, scalar_prefetch = 0 : i64, scratch_operands = 0 : i64, tpu.core_type = #tpu.core_type<tc>, window_params = [{transform_indices = @transform_0, window_bounds = array<i64: 4, 64, 160>}, {pipeline_mode = #tpu.pipeline_mode<synchronous>, transform_indices = @transform_1, window_bounds = array<i64: 160, 128>}, {pipeline_mode = #tpu.pipeline_mode<synchronous>, transform_indices = @transform_2, window_bounds = array<i64: 1, 128>}, {transform_indices = @transform_3, window_bounds = array<i64: 64, 16>}]} {
    %c0 = arith.constant 0 : index
    %c0_0 = arith.constant 0 : index
    %c0_1 = arith.constant 0 : index
    %0 = vector.load %arg1[%c0, %c0_0, %c0_1] : memref<4x64x160xbf16, #tpu.memory_space<vmem>>, vector<4x64x160xbf16>
    %1 = vector.shape_cast %0 : vector<4x64x160xbf16> to vector<256x160xbf16>
    %c0_2 = arith.constant 0 : index
    %c0_3 = arith.constant 0 : index
    %2 = vector.load %arg2[%c0_2, %c0_3] : memref<160x128xbf16, #tpu.memory_space<vmem>>, vector<160x128xbf16>
    %cst = arith.constant dense<0.000000e+00> : vector<256x128xf32>
    %3 = tpu.matmul %1, %2, %cst {dimension_numbers = #tpu.dot_dimension_numbers<[1], [0], [0], [1], [0, 0, 1, 1], [], []>} : vector<256x160xbf16>, vector<160x128xbf16>, vector<256x128xf32> -> vector<256x128xf32>
    %c0_4 = arith.constant 0 : index
    %c0_5 = arith.constant 0 : index
    %4 = vector.load %arg3[%c0_4, %c0_5] : memref<1x128xf32, #tpu.memory_space<vmem>>, vector<1x128xf32>
    %5 = vector.broadcast %4 : vector<1x128xf32> to vector<256x128xf32>
    %6 = arith.addf %3, %5 : vector<256x128xf32>
    %cst_6 = arith.constant 0.000000e+00 : f32
    %7 = vector.broadcast %cst_6 : f32 to vector<256x128xf32>
    %8 = arith.maximumf %6, %7 : vector<256x128xf32>
    %cst_7 = arith.constant 1.000000e+00 : f32
    %9 = vector.broadcast %cst_7 : f32 to vector<256x128xf32>
    %10 = arith.minimumf %8, %9 : vector<256x128xf32>
    %11 = vector.extract_strided_slice %10 {offsets = [0, 0], sizes = [256, 16], strides = [1, 1]} : vector<256x128xf32> to vector<256x16xf32>
    %12 = vector.extract_strided_slice %11 {offsets = [0, 0], sizes = [64, 16], strides = [1, 1]} : vector<256x16xf32> to vector<64x16xf32>
    %13 = vector.extract_strided_slice %11 {offsets = [64, 0], sizes = [64, 16], strides = [1, 1]} : vector<256x16xf32> to vector<64x16xf32>
    %14 = arith.addf %12, %13 : vector<64x16xf32>
    %15 = vector.extract_strided_slice %11 {offsets = [128, 0], sizes = [64, 16], strides = [1, 1]} : vector<256x16xf32> to vector<64x16xf32>
    %16 = arith.addf %14, %15 : vector<64x16xf32>
    %17 = vector.extract_strided_slice %11 {offsets = [192, 0], sizes = [64, 16], strides = [1, 1]} : vector<256x16xf32> to vector<64x16xf32>
    %18 = arith.addf %16, %17 : vector<64x16xf32>
    %cst_8 = arith.constant 2.500000e-01 : f32
    %19 = vector.broadcast %cst_8 : f32 to vector<64x16xf32>
    %20 = arith.mulf %18, %19 : vector<64x16xf32>
    %21 = arith.truncf %20 : vector<64x16xf32> to vector<64x16xbf16>
    %c0_9 = arith.constant 0 : index
    %c0_10 = arith.constant 0 : index
    %22 = vector.load %arg4[%c0_9, %c0_10] : memref<64x16xbf16, #tpu.memory_space<vmem>>, vector<64x16xbf16>
    tpu.vector_store %arg4[%c0_9, %c0_10], %21 {strides = array<i32>} : memref<64x16xbf16, #tpu.memory_space<vmem>>, vector<64x16xbf16>,
    return
  }
  func.func @transform_0(%arg0: i32) -> (i32, i32, i32) {
    %c0_i32 = arith.constant 0 : i32
    %c0_i32_0 = arith.constant 0 : i32
    %c0_i32_1 = arith.constant 0 : i32
    return %c0_i32, %arg0, %c0_i32_0 : i32, i32, i32
  }
  func.func @transform_1(%arg0: i32) -> (i32, i32) {
    %c0_i32 = arith.constant 0 : i32
    %c0_i32_0 = arith.constant 0 : i32
    %c0_i32_1 = arith.constant 0 : i32
    return %c0_i32, %c0_i32_0 : i32, i32
  }
  func.func @transform_2(%arg0: i32) -> (i32, i32) {
    %c0_i32 = arith.constant 0 : i32
    %c0_i32_0 = arith.constant 0 : i32
    %c0_i32_1 = arith.constant 0 : i32
    return %c0_i32, %c0_i32_0 : i32, i32
  }
  func.func @transform_3(%arg0: i32) -> (i32, i32) {
    %c0_i32 = arith.constant 0 : i32
    %c0_i32_0 = arith.constant 0 : i32
    return %arg0, %c0_i32 : i32, i32
  }
}

module attributes {stable_mosaic.version = 11 : i64} {
  func.func @_tail_kernel(%arg0: i32, %arg1: memref<16x400xbf16, #tpu.memory_space<vmem>>, %arg2: memref<400x128xbf16, #tpu.memory_space<vmem>>, %arg3: memref<1x128xf32, #tpu.memory_space<vmem>>, %arg4: memref<128x128xbf16, #tpu.memory_space<vmem>>, %arg5: memref<1x128xf32, #tpu.memory_space<vmem>>, %arg6: memref<128x128xbf16, #tpu.memory_space<vmem>>, %arg7: memref<1x128xf32, #tpu.memory_space<vmem>>, %arg8: memref<16x10xf32, #tpu.memory_space<vmem>>) attributes {dimension_semantics = [#tpu.dimension_semantics<parallel>], iteration_bounds = array<i64: 1>, scalar_prefetch = 0 : i64, scratch_operands = 0 : i64, tpu.core_type = #tpu.core_type<tc>, window_params = [{transform_indices = @transform_0, window_bounds = array<i64: 16, 400>}, {pipeline_mode = #tpu.pipeline_mode<synchronous>, transform_indices = @transform_1, window_bounds = array<i64: 400, 128>}, {pipeline_mode = #tpu.pipeline_mode<synchronous>, transform_indices = @transform_2, window_bounds = array<i64: 1, 128>}, {pipeline_mode = #tpu.pipeline_mode<synchronous>, transform_indices = @transform_3, window_bounds = array<i64: 128, 128>}, {pipeline_mode = #tpu.pipeline_mode<synchronous>, transform_indices = @transform_4, window_bounds = array<i64: 1, 128>}, {pipeline_mode = #tpu.pipeline_mode<synchronous>, transform_indices = @transform_5, window_bounds = array<i64: 128, 128>}, {pipeline_mode = #tpu.pipeline_mode<synchronous>, transform_indices = @transform_6, window_bounds = array<i64: 1, 128>}, {transform_indices = @transform_7, window_bounds = array<i64: 16, 10>}]} {
    %c0 = arith.constant 0 : index
    %c0_0 = arith.constant 0 : index
    %0 = vector.load %arg1[%c0, %c0_0] : memref<16x400xbf16, #tpu.memory_space<vmem>>, vector<16x400xbf16>
    %c0_1 = arith.constant 0 : index
    %c0_2 = arith.constant 0 : index
    %1 = vector.load %arg2[%c0_1, %c0_2] : memref<400x128xbf16, #tpu.memory_space<vmem>>, vector<400x128xbf16>
    %cst = arith.constant dense<0.000000e+00> : vector<16x128xf32>
    %2 = tpu.matmul %0, %1, %cst {dimension_numbers = #tpu.dot_dimension_numbers<[1], [0], [0], [1], [0, 0, 1, 1], [], []>} : vector<16x400xbf16>, vector<400x128xbf16>, vector<16x128xf32> -> vector<16x128xf32>
    %c0_3 = arith.constant 0 : index
    %c0_4 = arith.constant 0 : index
    %3 = vector.load %arg3[%c0_3, %c0_4] : memref<1x128xf32, #tpu.memory_space<vmem>>, vector<1x128xf32>
    %4 = vector.broadcast %3 : vector<1x128xf32> to vector<16x128xf32>
    %5 = arith.addf %2, %4 : vector<16x128xf32>
    %cst_5 = arith.constant 0.000000e+00 : f32
    %6 = vector.broadcast %cst_5 : f32 to vector<16x128xf32>
    %7 = arith.maximumf %5, %6 : vector<16x128xf32>
    %cst_6 = arith.constant 1.000000e+00 : f32
    %8 = vector.broadcast %cst_6 : f32 to vector<16x128xf32>
    %9 = arith.minimumf %7, %8 : vector<16x128xf32>
    %10 = arith.truncf %9 : vector<16x128xf32> to vector<16x128xbf16>
    %c0_7 = arith.constant 0 : index
    %c0_8 = arith.constant 0 : index
    %11 = vector.load %arg4[%c0_7, %c0_8] : memref<128x128xbf16, #tpu.memory_space<vmem>>, vector<128x128xbf16>
    %cst_9 = arith.constant dense<0.000000e+00> : vector<16x128xf32>
    %12 = tpu.matmul %10, %11, %cst_9 {dimension_numbers = #tpu.dot_dimension_numbers<[1], [0], [0], [1], [0, 0, 1, 1], [], []>} : vector<16x128xbf16>, vector<128x128xbf16>, vector<16x128xf32> -> vector<16x128xf32>
    %c0_10 = arith.constant 0 : index
    %c0_11 = arith.constant 0 : index
    %13 = vector.load %arg5[%c0_10, %c0_11] : memref<1x128xf32, #tpu.memory_space<vmem>>, vector<1x128xf32>
    %14 = vector.broadcast %13 : vector<1x128xf32> to vector<16x128xf32>
    %15 = arith.addf %12, %14 : vector<16x128xf32>
    %cst_12 = arith.constant 0.000000e+00 : f32
    %16 = vector.broadcast %cst_12 : f32 to vector<16x128xf32>
    %17 = arith.maximumf %15, %16 : vector<16x128xf32>
    %cst_13 = arith.constant 1.000000e+00 : f32
    %18 = vector.broadcast %cst_13 : f32 to vector<16x128xf32>
    %19 = arith.minimumf %17, %18 : vector<16x128xf32>
    %20 = arith.truncf %19 : vector<16x128xf32> to vector<16x128xbf16>
    %c0_14 = arith.constant 0 : index
    %c0_15 = arith.constant 0 : index
    %21 = vector.load %arg6[%c0_14, %c0_15] : memref<128x128xbf16, #tpu.memory_space<vmem>>, vector<128x128xbf16>
    %cst_16 = arith.constant dense<0.000000e+00> : vector<16x128xf32>
    %22 = tpu.matmul %20, %21, %cst_16 {dimension_numbers = #tpu.dot_dimension_numbers<[1], [0], [0], [1], [0, 0, 1, 1], [], []>} : vector<16x128xbf16>, vector<128x128xbf16>, vector<16x128xf32> -> vector<16x128xf32>
    %c0_17 = arith.constant 0 : index
    %c0_18 = arith.constant 0 : index
    %23 = vector.load %arg7[%c0_17, %c0_18] : memref<1x128xf32, #tpu.memory_space<vmem>>, vector<1x128xf32>
    %24 = vector.broadcast %23 : vector<1x128xf32> to vector<16x128xf32>
    %25 = arith.addf %22, %24 : vector<16x128xf32>
    %26 = vector.extract_strided_slice %25 {offsets = [0, 0], sizes = [16, 10], strides = [1, 1]} : vector<16x128xf32> to vector<16x10xf32>
    %c0_19 = arith.constant 0 : index
    %c0_20 = arith.constant 0 : index
    %27 = vector.load %arg8[%c0_19, %c0_20] : memref<16x10xf32, #tpu.memory_space<vmem>>, vector<16x10xf32>
    tpu.vector_store %arg8[%c0_19, %c0_20], %26 {strides = array<i32>} : memref<16x10xf32, #tpu.memory_space<vmem>>, vector<16x10xf32>,
    return
  }
  func.func @transform_0(%arg0: i32) -> (i32, i32) {
    %c0_i32 = arith.constant 0 : i32
    %c0_i32_0 = arith.constant 0 : i32
    return %arg0, %c0_i32 : i32, i32
  }
  func.func @transform_1(%arg0: i32) -> (i32, i32) {
    %c0_i32 = arith.constant 0 : i32
    %c0_i32_0 = arith.constant 0 : i32
    %c0_i32_1 = arith.constant 0 : i32
    return %c0_i32, %c0_i32_0 : i32, i32
  }
  func.func @transform_2(%arg0: i32) -> (i32, i32) {
    %c0_i32 = arith.constant 0 : i32
    %c0_i32_0 = arith.constant 0 : i32
    %c0_i32_1 = arith.constant 0 : i32
    return %c0_i32, %c0_i32_0 : i32, i32
  }
  func.func @transform_3(%arg0: i32) -> (i32, i32) {
    %c0_i32 = arith.constant 0 : i32
    %c0_i32_0 = arith.constant 0 : i32
    %c0_i32_1 = arith.constant 0 : i32
    return %c0_i32, %c0_i32_0 : i32, i32
  }
  func.func @transform_4(%arg0: i32) -> (i32, i32) {
    %c0_i32 = arith.constant 0 : i32
    %c0_i32_0 = arith.constant 0 : i32
    %c0_i32_1 = arith.constant 0 : i32
    return %c0_i32, %c0_i32_0 : i32, i32
  }
  func.func @transform_5(%arg0: i32) -> (i32, i32) {
    %c0_i32 = arith.constant 0 : i32
    %c0_i32_0 = arith.constant 0 : i32
    %c0_i32_1 = arith.constant 0 : i32
    return %c0_i32, %c0_i32_0 : i32, i32
  }
  func.func @transform_6(%arg0: i32) -> (i32, i32) {
    %c0_i32 = arith.constant 0 : i32
    %c0_i32_0 = arith.constant 0 : i32
    %c0_i32_1 = arith.constant 0 : i32
    return %c0_i32, %c0_i32_0 : i32, i32
  }
  func.func @transform_7(%arg0: i32) -> (i32, i32) {
    %c0_i32 = arith.constant 0 : i32
    %c0_i32_0 = arith.constant 0 : i32
    return %arg0, %c0_i32 : i32, i32
  }
}

</mosaic_0001>

<llo_original>
// kernel: lenet_forward.3
$region0: #{lenet_forward.3}
  #allocation0 [shape = 'u32[]', space=smem, size = 0x4, offset = 0x4, fixed_abs, tag = 'smem constant byte address 0x4 - core index']
  #allocation1 [shape = 'u32[144,128]{1,0:T(1,128)}', space=vmem, size = 0x12000, scoped, tag = 'internal scratch']
  %s0 = inlined_call_operand.vmem [shape: bf16[4,400,32], index: 0, kind: input, shape index: {}]
  %s1 = inlined_call_operand.vmem [shape: bf16[32,128], index: 1, kind: input, shape index: {}]
  %s2 = inlined_call_operand.vmem [shape: f32[1,128], index: 2, kind: input, shape index: {}]
  %s3 = inlined_call_operand.vmem [shape: bf16[400,6], index: 3, kind: output, shape index: {}]
  %s4 = sld [smem:[#allocation0]]
  $region22: #{lenet_forward.3} parent=0
    _
  %s6 = ssub.s32 1, %s4
  %s7 = scalar_select 0, %s6, %s4
  // Predicated region
  $region2: #{lenet_forward.3} parent=0 // pred_check
    _
  $region3: #{lenet_forward.3} parent=0 // pred_check_branch
    %9 = sbr.rel (0) target = $region5
  $region4: #{lenet_forward.3} parent=0 // pred_region
    _
  $region5: #{lenet_forward.3} parent=0 // pred_fallthru
    _
  // Predicated region
  $region6: #{lenet_forward.3} parent=0 // pred_check
    _
  $region7: #{lenet_forward.3} parent=0 // pred_check_branch
    %11 = sbr.rel (0) target = $region9
  $region8: #{lenet_forward.3} parent=0 // pred_region
    _
  $region9: #{lenet_forward.3} parent=0 // pred_fallthru
    _
  // Predicated region
  $region10: #{lenet_forward.3} parent=0 // pred_check
    _
  $region11: #{lenet_forward.3} parent=0 // pred_check_branch
    %13 = sbr.rel (0) target = $region13
  $region12: #{lenet_forward.3} parent=0 // pred_region
    _
  $region13: #{lenet_forward.3} parent=0 // pred_fallthru
    _
  %v15 = vld [vmem:[%s0] sm:$0xf]
  %v16 = vld [vmem:[%s0 + $0x4] sm:$0xf]
  %v17 = vld [vmem:[%s0 + $0x8] sm:$0xf]
  %v18 = vld [vmem:[%s0 + $0xc] sm:$0xf]
  %v19 = vld [vmem:[%s0 + $0x10] sm:$0xf]
  %v20 = vld [vmem:[%s0 + $0x14] sm:$0xf]
  %v21 = vld [vmem:[%s0 + $0x18] sm:$0xf]
  %v22 = vld [vmem:[%s0 + $0x1c] sm:$0xf]
  %v23 = vld [vmem:[%s0 + $0x20] sm:$0xf]
  %v24 = vld [vmem:[%s0 + $0x24] sm:$0xf]
  %v25 = vld [vmem:[%s0 + $0x28] sm:$0xf]
  %v26 = vld [vmem:[%s0 + $0x2c] sm:$0xf]
  %v27 = vld [vmem:[%s0 + $0x30] sm:$0xf]
  %v28 = vld [vmem:[%s0 + $0x34] sm:$0xf]
  %v29 = vld [vmem:[%s0 + $0x38] sm:$0xf]
  %v30 = vld [vmem:[%s0 + $0x3c] sm:$0xf]
  %v31 = vld [vmem:[%s0 + $0x40] sm:$0xf]
  %v32 = vld [vmem:[%s0 + $0x44] sm:$0xf]
  %v33 = vld [vmem:[%s0 + $0x48] sm:$0xf]
  %v34 = vld [vmem:[%s0 + $0x4c] sm:$0xf]
  %v35 = vld [vmem:[%s0 + $0x50] sm:$0xf]
  %v36 = vld [vmem:[%s0 + $0x54] sm:$0xf]
  %v37 = vld [vmem:[%s0 + $0x58] sm:$0xf]
  %v38 = vld [vmem:[%s0 + $0x5c] sm:$0xf]
  %v39 = vld [vmem:[%s0 + $0x60] sm:$0xf]
  %v40 = vld [vmem:[%s0 + $0x64] sm:$0xf]
  %v41 = vld [vmem:[%s0 + $0x68] sm:$0xf]
  %v42 = vld [vmem:[%s0 + $0x6c] sm:$0xf]
  %v43 = vld [vmem:[%s0 + $0x70] sm:$0xf]
  %v44 = vld [vmem:[%s0 + $0x74] sm:$0xf]
  %v45 = vld [vmem:[%s0 + $0x78] sm:$0xf]
  %v46 = vld [vmem:[%s0 + $0x7c] sm:$0xf]
  %v47 = vld [vmem:[%s0 + $0x80] sm:$0xf]
  %v48 = vld [vmem:[%s0 + $0x84] sm:$0xf]
  %v49 = vld [vmem:[%s0 + $0x88] sm:$0xf]
  %v50 = vld [vmem:[%s0 + $0x8c] sm:$0xf]
  %v51 = vld [vmem:[%s0 + $0x90] sm:$0xf]
  %v52 = vld [vmem:[%s0 + $0x94] sm:$0xf]
  %v53 = vld [vmem:[%s0 + $0x98] sm:$0xf]
  %v54 = vld [vmem:[%s0 + $0x9c] sm:$0xf]
  %v55 = vld [vmem:[%s0 + $0xa0] sm:$0xf]
  %v56 = vld [vmem:[%s0 + $0xa4] sm:$0xf]
  %v57 = vld [vmem:[%s0 + $0xa8] sm:$0xf]
  %v58 = vld [vmem:[%s0 + $0xac] sm:$0xf]
  %v59 = vld [vmem:[%s0 + $0xb0] sm:$0xf]
  %v60 = vld [vmem:[%s0 + $0xb4] sm:$0xf]
  %v61 = vld [vmem:[%s0 + $0xb8] sm:$0xf]
  %v62 = vld [vmem:[%s0 + $0xbc] sm:$0xf]
  %v63 = vld [vmem:[%s0 + $0xc0] sm:$0xf]
  %v64 = vld [vmem:[%s0 + $0xc4] sm:$0xf]
  %v65 = vld [vmem:[%s0 + $0xc8] sm:$0xf]
  %v66 = vld [vmem:[%s0 + $0xcc] sm:$0xf]
  %v67 = vld [vmem:[%s0 + $0xd0] sm:$0xf]
  %v68 = vld [vmem:[%s0 + $0xd4] sm:$0xf]
  %v69 = vld [vmem:[%s0 + $0xd8] sm:$0xf]
  %v70 = vld [vmem:[%s0 + $0xdc] sm:$0xf]
  %v71 = vld [vmem:[%s0 + $0xe0] sm:$0xf]
  %v72 = vld [vmem:[%s0 + $0xe4] sm:$0xf]
  %v73 = vld [vmem:[%s0 + $0xe8] sm:$0xf]
  %v74 = vld [vmem:[%s0 + $0xec] sm:$0xf]
  %v75 = vld [vmem:[%s0 + $0xf0] sm:$0xf]
  %v76 = vld [vmem:[%s0 + $0xf4] sm:$0xf]
  %v77 = vld [vmem:[%s0 + $0xf8] sm:$0xf]
  %v78 = vld [vmem:[%s0 + $0xfc] sm:$0xf]
  %v79 = vld [vmem:[%s0 + $0x100] sm:$0xf]
  %v80 = vld [vmem:[%s0 + $0x104] sm:$0xf]
  %v81 = vld [vmem:[%s0 + $0x108] sm:$0xf]
  %v82 = vld [vmem:[%s0 + $0x10c] sm:$0xf]
  %v83 = vld [vmem:[%s0 + $0x110] sm:$0xf]
  %v84 = vld [vmem:[%s0 + $0x114] sm:$0xf]
  %v85 = vld [vmem:[%s0 + $0x118] sm:$0xf]
  %v86 = vld [vmem:[%s0 + $0x11c] sm:$0xf]
  %v87 = vld [vmem:[%s0 + $0x120] sm:$0xf]
  %v88 = vld [vmem:[%s0 + $0x124] sm:$0xf]
  %v89 = vld [vmem:[%s0 + $0x128] sm:$0xf]
  %v90 = vld [vmem:[%s0 + $0x12c] sm:$0xf]
  %v91 = vld [vmem:[%s0 + $0x130] sm:$0xf]
  %v92 = vld [vmem:[%s0 + $0x134] sm:$0xf]
  %v93 = vld [vmem:[%s0 + $0x138] sm:$0xf]
  %v94 = vld [vmem:[%s0 + $0x13c] sm:$0xf]
  %v95 = vld [vmem:[%s0 + $0x140] sm:$0xf]
  %v96 = vld [vmem:[%s0 + $0x144] sm:$0xf]
  %v97 = vld [vmem:[%s0 + $0x148] sm:$0xf]
  %v98 = vld [vmem:[%s0 + $0x14c] sm:$0xf]
  %v99 = vld [vmem:[%s0 + $0x150] sm:$0xf]
  %v100 = vld [vmem:[%s0 + $0x154] sm:$0xf]
  %v101 = vld [vmem:[%s0 + $0x158] sm:$0xf]
  %v102 = vld [vmem:[%s0 + $0x15c] sm:$0xf]
  %v103 = vld [vmem:[%s0 + $0x160] sm:$0xf]
  %v104 = vld [vmem:[%s0 + $0x164] sm:$0xf]
  %v105 = vld [vmem:[%s0 + $0x168] sm:$0xf]
  %v106 = vld [vmem:[%s0 + $0x16c] sm:$0xf]
  %v107 = vld [vmem:[%s0 + $0x170] sm:$0xf]
  %v108 = vld [vmem:[%s0 + $0x174] sm:$0xf]
  %v109 = vld [vmem:[%s0 + $0x178] sm:$0xf]
  %v110 = vld [vmem:[%s0 + $0x17c] sm:$0xf]
  %v111 = vld [vmem:[%s0 + $0x180] sm:$0xf]
  %v112 = vld [vmem:[%s0 + $0x184] sm:$0xf]
  %v113 = vld [vmem:[%s0 + $0x188] sm:$0xf]
  %v114 = vld [vmem:[%s0 + $0x18c] sm:$0xf]
  %v115 = vld [vmem:[%s0 + $0x190] sm:$0xf]
  %v116 = vld [vmem:[%s0 + $0x194] sm:$0xf]
  %v117 = vld [vmem:[%s0 + $0x198] sm:$0xf]
  %v118 = vld [vmem:[%s0 + $0x19c] sm:$0xf]
  %v119 = vld [vmem:[%s0 + $0x1a0] sm:$0xf]
  %v120 = vld [vmem:[%s0 + $0x1a4] sm:$0xf]
  %v121 = vld [vmem:[%s0 + $0x1a8] sm:$0xf]
  %v122 = vld [vmem:[%s0 + $0x1ac] sm:$0xf]
  %v123 = vld [vmem:[%s0 + $0x1b0] sm:$0xf]
  %v124 = vld [vmem:[%s0 + $0x1b4] sm:$0xf]
  %v125 = vld [vmem:[%s0 + $0x1b8] sm:$0xf]
  %v126 = vld [vmem:[%s0 + $0x1bc] sm:$0xf]
  %v127 = vld [vmem:[%s0 + $0x1c0] sm:$0xf]
  %v128 = vld [vmem:[%s0 + $0x1c4] sm:$0xf]
  %v129 = vld [vmem:[%s0 + $0x1c8] sm:$0xf]
  %v130 = vld [vmem:[%s0 + $0x1cc] sm:$0xf]
  %v131 = vld [vmem:[%s0 + $0x1d0] sm:$0xf]
  %v132 = vld [vmem:[%s0 + $0x1d4] sm:$0xf]
  %v133 = vld [vmem:[%s0 + $0x1d8] sm:$0xf]
  %v134 = vld [vmem:[%s0 + $0x1dc] sm:$0xf]
  %v135 = vld [vmem:[%s0 + $0x1e0] sm:$0xf]
  %v136 = vld [vmem:[%s0 + $0x1e4] sm:$0xf]
  %v137 = vld [vmem:[%s0 + $0x1e8] sm:$0xf]
  %v138 = vld [vmem:[%s0 + $0x1ec] sm:$0xf]
  %v139 = vld [vmem:[%s0 + $0x1f0] sm:$0xf]
  %v140 = vld [vmem:[%s0 + $0x1f4] sm:$0xf]
  %v141 = vld [vmem:[%s0 + $0x1f8] sm:$0xf]
  %v142 = vld [vmem:[%s0 + $0x1fc] sm:$0xf]
  %v143 = vld [vmem:[%s0 + $0x200] sm:$0xf]
  %v144 = vld [vmem:[%s0 + $0x204] sm:$0xf]
  %v145 = vld [vmem:[%s0 + $0x208] sm:$0xf]
  %v146 = vld [vmem:[%s0 + $0x20c] sm:$0xf]
  %v147 = vld [vmem:[%s0 + $0x210] sm:$0xf]
  %v148 = vld [vmem:[%s0 + $0x214] sm:$0xf]
  %v149 = vld [vmem:[%s0 + $0x218] sm:$0xf]
  %v150 = vld [vmem:[%s0 + $0x21c] sm:$0xf]
  %v151 = vld [vmem:[%s0 + $0x220] sm:$0xf]
  %v152 = vld [vmem:[%s0 + $0x224] sm:$0xf]
  %v153 = vld [vmem:[%s0 + $0x228] sm:$0xf]
  %v154 = vld [vmem:[%s0 + $0x22c] sm:$0xf]
  %v155 = vld [vmem:[%s0 + $0x230] sm:$0xf]
  %v156 = vld [vmem:[%s0 + $0x234] sm:$0xf]
  %v157 = vld [vmem:[%s0 + $0x238] sm:$0xf]
  %v158 = vld [vmem:[%s0 + $0x23c] sm:$0xf]
  %v159 = vld [vmem:[%s0 + $0x240] sm:$0xf]
  %v160 = vld [vmem:[%s0 + $0x244] sm:$0xf]
  %v161 = vld [vmem:[%s0 + $0x248] sm:$0xf]
  %v162 = vld [vmem:[%s0 + $0x24c] sm:$0xf]
  %v163 = vld [vmem:[%s0 + $0x250] sm:$0xf]
  %v164 = vld [vmem:[%s0 + $0x254] sm:$0xf]
  %v165 = vld [vmem:[%s0 + $0x258] sm:$0xf]
  %v166 = vld [vmem:[%s0 + $0x25c] sm:$0xf]
  %v167 = vld [vmem:[%s0 + $0x260] sm:$0xf]
  %v168 = vld [vmem:[%s0 + $0x264] sm:$0xf]
  %v169 = vld [vmem:[%s0 + $0x268] sm:$0xf]
  %v170 = vld [vmem:[%s0 + $0x26c] sm:$0xf]
  %v171 = vld [vmem:[%s0 + $0x270] sm:$0xf]
  %v172 = vld [vmem:[%s0 + $0x274] sm:$0xf]
  %v173 = vld [vmem:[%s0 + $0x278] sm:$0xf]
  %v174 = vld [vmem:[%s0 + $0x27c] sm:$0xf]
  %v175 = vld [vmem:[%s0 + $0x280] sm:$0xf]
  %v176 = vld [vmem:[%s0 + $0x284] sm:$0xf]
  %v177 = vld [vmem:[%s0 + $0x288] sm:$0xf]
  %v178 = vld [vmem:[%s0 + $0x28c] sm:$0xf]
  %v179 = vld [vmem:[%s0 + $0x290] sm:$0xf]
  %v180 = vld [vmem:[%s0 + $0x294] sm:$0xf]
  %v181 = vld [vmem:[%s0 + $0x298] sm:$0xf]
  %v182 = vld [vmem:[%s0 + $0x29c] sm:$0xf]
  %v183 = vld [vmem:[%s0 + $0x2a0] sm:$0xf]
  %v184 = vld [vmem:[%s0 + $0x2a4] sm:$0xf]
  %v185 = vld [vmem:[%s0 + $0x2a8] sm:$0xf]
  %v186 = vld [vmem:[%s0 + $0x2ac] sm:$0xf]
  %v187 = vld [vmem:[%s0 + $0x2b0] sm:$0xf]
  %v188 = vld [vmem:[%s0 + $0x2b4] sm:$0xf]
  %v189 = vld [vmem:[%s0 + $0x2b8] sm:$0xf]
  %v190 = vld [vmem:[%s0 + $0x2bc] sm:$0xf]
  %v191 = vld [vmem:[%s0 + $0x2c0] sm:$0xf]
  %v192 = vld [vmem:[%s0 + $0x2c4] sm:$0xf]
  %v193 = vld [vmem:[%s0 + $0x2c8] sm:$0xf]
  %v194 = vld [vmem:[%s0 + $0x2cc] sm:$0xf]
  %v195 = vld [vmem:[%s0 + $0x2d0] sm:$0xf]
  %v196 = vld [vmem:[%s0 + $0x2d4] sm:$0xf]
  %v197 = vld [vmem:[%s0 + $0x2d8] sm:$0xf]
  %v198 = vld [vmem:[%s0 + $0x2dc] sm:$0xf]
  %v199 = vld [vmem:[%s0 + $0x2e0] sm:$0xf]
  %v200 = vld [vmem:[%s0 + $0x2e4] sm:$0xf]
  %v201 = vld [vmem:[%s0 + $0x2e8] sm:$0xf]
  %v202 = vld [vmem:[%s0 + $0x2ec] sm:$0xf]
  %v203 = vld [vmem:[%s0 + $0x2f0] sm:$0xf]
  %v204 = vld [vmem:[%s0 + $0x2f4] sm:$0xf]
  %v205 = vld [vmem:[%s0 + $0x2f8] sm:$0xf]
  %v206 = vld [vmem:[%s0 + $0x2fc] sm:$0xf]
  %v207 = vld [vmem:[%s0 + $0x300] sm:$0xf]
  %v208 = vld [vmem:[%s0 + $0x304] sm:$0xf]
  %v209 = vld [vmem:[%s0 + $0x308] sm:$0xf]
  %v210 = vld [vmem:[%s0 + $0x30c] sm:$0xf]
  %v211 = vld [vmem:[%s0 + $0x310] sm:$0xf]
  %v212 = vld [vmem:[%s0 + $0x314] sm:$0xf]
  %v213 = vld [vmem:[%s0 + $0x318] sm:$0xf]
  %v214 = vld [vmem:[%s0 + $0x31c] sm:$0xf]
  %v215 = vld [vmem:[%s1] sm:$0xf]
  %v216 = vld [vmem:[%s1 + $0x4] sm:$0xf]
  %v217 = vld [vmem:[%s1 + $0x8] sm:$0xf]
  %v218 = vld [vmem:[%s1 + $0xc] sm:$0xf]
  %v219 = vld [vmem:[%s2] sm:$0x1]
  %v221 = vlaneseq
  %v222 = vshrl.u32 %v221, 7
  %v223 = vsub.s32 0, %v222
  %v224 = vrot.slane %v219, %v223
  %v426 = vunpack.c.l.b16 %v15
  %v427 = vunpack.c.l.b16 %v16
  %v428 = vunpack.c.l.b16 %v17
  %v429 = vunpack.c.l.b16 %v18
  %v430 = vunpack.c.l.b16 %v19
  %v431 = vunpack.c.l.b16 %v20
  %v432 = vunpack.c.l.b16 %v21
  %v433 = vunpack.c.l.b16 %v22
  %v434 = vunpack.c.l.b16 %v23
  %v435 = vunpack.c.l.b16 %v24
  %v436 = vunpack.c.l.b16 %v25
  %v437 = vunpack.c.l.b16 %v26
  %v438 = vunpack.c.l.b16 %v27
  %v439 = vunpack.c.l.b16 %v28
  %v440 = vunpack.c.l.b16 %v29
  %v441 = vunpack.c.l.b16 %v30
  %v442 = vunpack.c.l.b16 %v31
  %v443 = vunpack.c.l.b16 %v32
  %v444 = vunpack.c.l.b16 %v33
  %v445 = vunpack.c.l.b16 %v34
  %v446 = vunpack.c.l.b16 %v35
  %v447 = vunpack.c.l.b16 %v36
  %v448 = vunpack.c.l.b16 %v37
  %v449 = vunpack.c.l.b16 %v38
  %v450 = vunpack.c.l.b16 %v39
  %v451 = vunpack.c.l.b16 %v40
  %v452 = vunpack.c.l.b16 %v41
  %v453 = vunpack.c.l.b16 %v42
  %v454 = vunpack.c.l.b16 %v43
  %v455 = vunpack.c.l.b16 %v44
  %v456 = vunpack.c.l.b16 %v45
  %v457 = vunpack.c.l.b16 %v46
  %v458 = vunpack.c.l.b16 %v47
  %v459 = vunpack.c.l.b16 %v48
  %v460 = vunpack.c.l.b16 %v49
  %v461 = vunpack.c.l.b16 %v50
  %v462 = vunpack.c.l.b16 %v51
  %v463 = vunpack.c.l.b16 %v52
  %v464 = vunpack.c.l.b16 %v53
  %v465 = vunpack.c.l.b16 %v54
  %v466 = vunpack.c.l.b16 %v55
  %v467 = vunpack.c.l.b16 %v56
  %v468 = vunpack.c.l.b16 %v57
  %v469 = vunpack.c.l.b16 %v58
  %v470 = vunpack.c.l.b16 %v59
  %v471 = vunpack.c.l.b16 %v60
  %v472 = vunpack.c.l.b16 %v61
  %v473 = vunpack.c.l.b16 %v62
  %v474 = vunpack.c.l.b16 %v63
  %v475 = vunpack.c.l.b16 %v64
  %v476 = vunpack.c.l.b16 %v65
  %v477 = vunpack.c.l.b16 %v66
  %v478 = vunpack.c.l.b16 %v67
  %v479 = vunpack.c.l.b16 %v68
  %v480 = vunpack.c.l.b16 %v69
  %v481 = vunpack.c.l.b16 %v70
  %v482 = vunpack.c.l.b16 %v71
  %v483 = vunpack.c.l.b16 %v72
  %v484 = vunpack.c.l.b16 %v73
  %v485 = vunpack.c.l.b16 %v74
  %v486 = vunpack.c.l.b16 %v75
  %v487 = vunpack.c.l.b16 %v76
  %v488 = vunpack.c.l.b16 %v77
  %v489 = vunpack.c.l.b16 %v78
  %v490 = vunpack.c.l.b16 %v79
  %v491 = vunpack.c.l.b16 %v80
  %v492 = vunpack.c.l.b16 %v81
  %v493 = vunpack.c.l.b16 %v82
  %v494 = vunpack.c.l.b16 %v83
  %v495 = vunpack.c.l.b16 %v84
  %v496 = vunpack.c.l.b16 %v85
  %v497 = vunpack.c.l.b16 %v86
  %v498 = vunpack.c.l.b16 %v87
  %v499 = vunpack.c.l.b16 %v88
  %v500 = vunpack.c.l.b16 %v89
  %v501 = vunpack.c.l.b16 %v90
  %v502 = vunpack.c.l.b16 %v91
  %v503 = vunpack.c.l.b16 %v92
  %v504 = vunpack.c.l.b16 %v93
  %v505 = vunpack.c.l.b16 %v94
  %v506 = vunpack.c.l.b16 %v95
  %v507 = vunpack.c.l.b16 %v96
  %v508 = vunpack.c.l.b16 %v97
  %v509 = vunpack.c.l.b16 %v98
  %v510 = vunpack.c.l.b16 %v99
  %v511 = vunpack.c.l.b16 %v100
  %v512 = vunpack.c.l.b16 %v101
  %v513 = vunpack.c.l.b16 %v102
  %v514 = vunpack.c.l.b16 %v103
  %v515 = vunpack.c.l.b16 %v104
  %v516 = vunpack.c.l.b16 %v105
  %v517 = vunpack.c.l.b16 %v106
  %v518 = vunpack.c.l.b16 %v107
  %v519 = vunpack.c.l.b16 %v108
  %v520 = vunpack.c.l.b16 %v109
  %v521 = vunpack.c.l.b16 %v110
  %v522 = vunpack.c.l.b16 %v111
  %v523 = vunpack.c.l.b16 %v112
  %v524 = vunpack.c.l.b16 %v113
  %v525 = vunpack.c.l.b16 %v114
  %v526 = vunpack.c.l.b16 %v115
  %v527 = vunpack.c.l.b16 %v116
  %v528 = vunpack.c.l.b16 %v117
  %v529 = vunpack.c.l.b16 %v118
  %v530 = vunpack.c.l.b16 %v119
  %v531 = vunpack.c.l.b16 %v120
  %v532 = vunpack.c.l.b16 %v121
  %v533 = vunpack.c.l.b16 %v122
  %v534 = vunpack.c.l.b16 %v123
  %v535 = vunpack.c.l.b16 %v124
  %v536 = vunpack.c.l.b16 %v125
  %v537 = vunpack.c.l.b16 %v126
  %v538 = vunpack.c.l.b16 %v127
  %v539 = vunpack.c.l.b16 %v128
  %v540 = vunpack.c.l.b16 %v129
  %v541 = vunpack.c.l.b16 %v130
  %v542 = vunpack.c.l.b16 %v131
  %v543 = vunpack.c.l.b16 %v132
  %v544 = vunpack.c.l.b16 %v133
  %v545 = vunpack.c.l.b16 %v134
  %v546 = vunpack.c.l.b16 %v135
  %v547 = vunpack.c.l.b16 %v136
  %v548 = vunpack.c.l.b16 %v137
  %v549 = vunpack.c.l.b16 %v138
  %v550 = vunpack.c.l.b16 %v139
  %v551 = vunpack.c.l.b16 %v140
  %v552 = vunpack.c.l.b16 %v141
  %v553 = vunpack.c.l.b16 %v142
  %v554 = vunpack.c.l.b16 %v143
  %v555 = vunpack.c.l.b16 %v144
  %v556 = vunpack.c.l.b16 %v145
  %v557 = vunpack.c.l.b16 %v146
  %v558 = vunpack.c.l.b16 %v147
  %v559 = vunpack.c.l.b16 %v148
  %v560 = vunpack.c.l.b16 %v149
  %v561 = vunpack.c.l.b16 %v150
  %v562 = vunpack.c.l.b16 %v151
  %v563 = vunpack.c.l.b16 %v152
  %v564 = vunpack.c.l.b16 %v153
  %v565 = vunpack.c.l.b16 %v154
  %v566 = vunpack.c.l.b16 %v155
  %v567 = vunpack.c.l.b16 %v156
  %v568 = vunpack.c.l.b16 %v157
  %v569 = vunpack.c.l.b16 %v158
  %v570 = vunpack.c.l.b16 %v159
  %v571 = vunpack.c.l.b16 %v160
  %v572 = vunpack.c.l.b16 %v161
  %v573 = vunpack.c.l.b16 %v162
  %v574 = vunpack.c.l.b16 %v163
  %v575 = vunpack.c.l.b16 %v164
  %v576 = vunpack.c.l.b16 %v165
  %v577 = vunpack.c.l.b16 %v166
  %v578 = vunpack.c.l.b16 %v167
  %v579 = vunpack.c.l.b16 %v168
  %v580 = vunpack.c.l.b16 %v169
  %v581 = vunpack.c.l.b16 %v170
  %v582 = vunpack.c.l.b16 %v171
  %v583 = vunpack.c.l.b16 %v172
  %v584 = vunpack.c.l.b16 %v173
  %v585 = vunpack.c.l.b16 %v174
  %v586 = vunpack.c.l.b16 %v175
  %v587 = vunpack.c.l.b16 %v176
  %v588 = vunpack.c.l.b16 %v177
  %v589 = vunpack.c.l.b16 %v178
  %v590 = vunpack.c.l.b16 %v179
  %v591 = vunpack.c.l.b16 %v180
  %v592 = vunpack.c.l.b16 %v181
  %v593 = vunpack.c.l.b16 %v182
  %v594 = vunpack.c.l.b16 %v183
  %v595 = vunpack.c.l.b16 %v184
  %v596 = vunpack.c.l.b16 %v185
  %v597 = vunpack.c.l.b16 %v186
  %v598 = vunpack.c.l.b16 %v187
  %v599 = vunpack.c.l.b16 %v188
  %v600 = vunpack.c.l.b16 %v189
  %v601 = vunpack.c.l.b16 %v190
  %v602 = vunpack.c.l.b16 %v191
  %v603 = vunpack.c.l.b16 %v192
  %v604 = vunpack.c.l.b16 %v193
  %v605 = vunpack.c.l.b16 %v194
  %v606 = vunpack.c.l.b16 %v195
  %v607 = vunpack.c.l.b16 %v196
  %v608 = vunpack.c.l.b16 %v197
  %v609 = vunpack.c.l.b16 %v198
  %v610 = vunpack.c.l.b16 %v199
  %v611 = vunpack.c.l.b16 %v200
  %v612 = vunpack.c.l.b16 %v201
  %v613 = vunpack.c.l.b16 %v202
  %v614 = vunpack.c.l.b16 %v203
  %v615 = vunpack.c.l.b16 %v204
  %v616 = vunpack.c.l.b16 %v205
  %v617 = vunpack.c.l.b16 %v206
  %v618 = vunpack.c.l.b16 %v207
  %v619 = vunpack.c.l.b16 %v208
  %v620 = vunpack.c.l.b16 %v209
  %v621 = vunpack.c.l.b16 %v210
  %v622 = vunpack.c.l.b16 %v211
  %v623 = vunpack.c.l.b16 %v212
  %v624 = vunpack.c.l.b16 %v213
  %v625 = vunpack.c.l.b16 %v214
  %v626 = vpack.c.b16 %v427, %v426
  %v627 = vpack.c.b16 %v429, %v428
  %v628 = vpack.c.b16 %v431, %v430
  %v629 = vpack.c.b16 %v433, %v432
  %v630 = vpack.c.b16 %v435, %v434
  %v631 = vpack.c.b16 %v437, %v436
  %v632 = vpack.c.b16 %v439, %v438
  %v633 = vpack.c.b16 %v441, %v440
  %v634 = vpack.c.b16 %v443, %v442
  %v635 = vpack.c.b16 %v445, %v444
  %v636 = vpack.c.b16 %v447, %v446
  %v637 = vpack.c.b16 %v449, %v448
  %v638 = vpack.c.b16 %v451, %v450
  %v639 = vpack.c.b16 %v453, %v452
  %v640 = vpack.c.b16 %v455, %v454
  %v641 = vpack.c.b16 %v457, %v456
  %v642 = vpack.c.b16 %v459, %v458
  %v643 = vpack.c.b16 %v461, %v460
  %v644 = vpack.c.b16 %v463, %v462
  %v645 = vpack.c.b16 %v465, %v464
  %v646 = vpack.c.b16 %v467, %v466
  %v647 = vpack.c.b16 %v469, %v468
  %v648 = vpack.c.b16 %v471, %v470
  %v649 = vpack.c.b16 %v473, %v472
  %v650 = vpack.c.b16 %v475, %v474
  %v651 = vpack.c.b16 %v477, %v476
  %v652 = vpack.c.b16 %v479, %v478
  %v653 = vpack.c.b16 %v481, %v480
  %v654 = vpack.c.b16 %v483, %v482
  %v655 = vpack.c.b16 %v485, %v484
  %v656 = vpack.c.b16 %v487, %v486
  %v657 = vpack.c.b16 %v489, %v488
  %v658 = vpack.c.b16 %v491, %v490
  %v659 = vpack.c.b16 %v493, %v492
  %v660 = vpack.c.b16 %v495, %v494
  %v661 = vpack.c.b16 %v497, %v496
  %v662 = vpack.c.b16 %v499, %v498
  %v663 = vpack.c.b16 %v501, %v500
  %v664 = vpack.c.b16 %v503, %v502
  %v665 = vpack.c.b16 %v505, %v504
  %v666 = vpack.c.b16 %v507, %v506
  %v667 = vpack.c.b16 %v509, %v508
  %v668 = vpack.c.b16 %v511, %v510
  %v669 = vpack.c.b16 %v513, %v512
  %v670 = vpack.c.b16 %v515, %v514
  %v671 = vpack.c.b16 %v517, %v516
  %v672 = vpack.c.b16 %v519, %v518
  %v673 = vpack.c.b16 %v521, %v520
  %v674 = vpack.c.b16 %v523, %v522
  %v675 = vpack.c.b16 %v525, %v524
  %v676 = vpack.c.b16 %v527, %v526
  %v677 = vpack.c.b16 %v529, %v528
  %v678 = vpack.c.b16 %v531, %v530
  %v679 = vpack.c.b16 %v533, %v532
  %v680 = vpack.c.b16 %v535, %v534
  %v681 = vpack.c.b16 %v537, %v536
  %v682 = vpack.c.b16 %v539, %v538
  %v683 = vpack.c.b16 %v541, %v540
  %v684 = vpack.c.b16 %v543, %v542
  %v685 = vpack.c.b16 %v545, %v544
  %v686 = vpack.c.b16 %v547, %v546
  %v687 = vpack.c.b16 %v549, %v548
  %v688 = vpack.c.b16 %v551, %v550
  %v689 = vpack.c.b16 %v553, %v552
  %v690 = vpack.c.b16 %v555, %v554
  %v691 = vpack.c.b16 %v557, %v556
  %v692 = vpack.c.b16 %v559, %v558
  %v693 = vpack.c.b16 %v561, %v560
  %v694 = vpack.c.b16 %v563, %v562
  %v695 = vpack.c.b16 %v565, %v564
  %v696 = vpack.c.b16 %v567, %v566
  %v697 = vpack.c.b16 %v569, %v568
  %v698 = vpack.c.b16 %v571, %v570
  %v699 = vpack.c.b16 %v573, %v572
  %v700 = vpack.c.b16 %v575, %v574
  %v701 = vpack.c.b16 %v577, %v576
  %v702 = vpack.c.b16 %v579, %v578
  %v703 = vpack.c.b16 %v581, %v580
  %v704 = vpack.c.b16 %v583, %v582
  %v705 = vpack.c.b16 %v585, %v584
  %v706 = vpack.c.b16 %v587, %v586
  %v707 = vpack.c.b16 %v589, %v588
  %v708 = vpack.c.b16 %v591, %v590
  %v709 = vpack.c.b16 %v593, %v592
  %v710 = vpack.c.b16 %v595, %v594
  %v711 = vpack.c.b16 %v597, %v596
  %v712 = vpack.c.b16 %v599, %v598
  %v713 = vpack.c.b16 %v601, %v600
  %v714 = vpack.c.b16 %v603, %v602
  %v715 = vpack.c.b16 %v605, %v604
  %v716 = vpack.c.b16 %v607, %v606
  %v717 = vpack.c.b16 %v609, %v608
  %v718 = vpack.c.b16 %v611, %v610
  %v719 = vpack.c.b16 %v613, %v612
  %v720 = vpack.c.b16 %v615, %v614
  %v721 = vpack.c.b16 %v617, %v616
  %v722 = vpack.c.b16 %v619, %v618
  %v723 = vpack.c.b16 %v621, %v620
  %v724 = vpack.c.b16 %v623, %v622
  %v725 = vpack.c.b16 %v625, %v624
  %v730 = vunpack.c.l.b16 %v215
  %v731 = vunpack.c.l.b16 %v216
  %v732 = vunpack.c.l.b16 %v217
  %v733 = vunpack.c.l.b16 %v218
  %v734 = vpack.c.b16 %v731, %v730
  %v735 = vpack.c.b16 %v733, %v732
  %vm738 = vcmask 261120
  %v740 = vsel %vm738, %v626, 0
  %v743 = vsel %vm738, %v627, 0
  %v746 = vsel %vm738, %v628, 0
  %v749 = vsel %vm738, %v629, 0
  %v752 = vsel %vm738, %v630, 0
  %v755 = vsel %vm738, %v631, 0
  %v758 = vsel %vm738, %v632, 0
  %v761 = vsel %vm738, %v633, 0
  %v764 = vsel %vm738, %v634, 0
  %v767 = vsel %vm738, %v635, 0
  %v770 = vsel %vm738, %v636, 0
  %v773 = vsel %vm738, %v637, 0
  %v776 = vsel %vm738, %v638, 0
  %v779 = vsel %vm738, %v639, 0
  %v782 = vsel %vm738, %v640, 0
  %v785 = vsel %vm738, %v641, 0
  %v788 = vsel %vm738, %v642, 0
  %v791 = vsel %vm738, %v643, 0
  %v794 = vsel %vm738, %v644, 0
  %v797 = vsel %vm738, %v645, 0
  %v800 = vsel %vm738, %v646, 0
  %v803 = vsel %vm738, %v647, 0
  %v806 = vsel %vm738, %v648, 0
  %v809 = vsel %vm738, %v649, 0
  %v812 = vsel %vm738, %v650, 0
  %v815 = vsel %vm738, %v651, 0
  %v818 = vsel %vm738, %v652, 0
  %v821 = vsel %vm738, %v653, 0
  %v824 = vsel %vm738, %v654, 0
  %v827 = vsel %vm738, %v655, 0
  %v830 = vsel %vm738, %v656, 0
  %v833 = vsel %vm738, %v657, 0
  %v836 = vsel %vm738, %v658, 0
  %v839 = vsel %vm738, %v659, 0
  %v842 = vsel %vm738, %v660, 0
  %v845 = vsel %vm738, %v661, 0
  %v848 = vsel %vm738, %v662, 0
  %v851 = vsel %vm738, %v663, 0
  %v854 = vsel %vm738, %v664, 0
  %v857 = vsel %vm738, %v665, 0
  %v860 = vsel %vm738, %v666, 0
  %v863 = vsel %vm738, %v667, 0
  %v866 = vsel %vm738, %v668, 0
  %v869 = vsel %vm738, %v669, 0
  %v872 = vsel %vm738, %v670, 0
  %v875 = vsel %vm738, %v671, 0
  %v878 = vsel %vm738, %v672, 0
  %v881 = vsel %vm738, %v673, 0
  %v884 = vsel %vm738, %v674, 0
  %v887 = vsel %vm738, %v675, 0
  %v890 = vsel %vm738, %v676, 0
  %v893 = vsel %vm738, %v677, 0
  %v896 = vsel %vm738, %v678, 0
  %v899 = vsel %vm738, %v679, 0
  %v902 = vsel %vm738, %v680, 0
  %v905 = vsel %vm738, %v681, 0
  %v908 = vsel %vm738, %v682, 0
  %v911 = vsel %vm738, %v683, 0
  %v914 = vsel %vm738, %v684, 0
  %v917 = vsel %vm738, %v685, 0
  %v920 = vsel %vm738, %v686, 0
  %v923 = vsel %vm738, %v687, 0
  %v926 = vsel %vm738, %v688, 0
  %v929 = vsel %vm738, %v689, 0
  %v932 = vsel %vm738, %v690, 0
  %v935 = vsel %vm738, %v691, 0
  %v938 = vsel %vm738, %v692, 0
  %v941 = vsel %vm738, %v693, 0
  %v944 = vsel %vm738, %v694, 0
  %v947 = vsel %vm738, %v695, 0
  %v950 = vsel %vm738, %v696, 0
  %v953 = vsel %vm738, %v697, 0
  %v956 = vsel %vm738, %v698, 0
  %v959 = vsel %vm738, %v699, 0
  %v962 = vsel %vm738, %v700, 0
  %v965 = vsel %vm738, %v701, 0
  %v968 = vsel %vm738, %v702, 0
  %v971 = vsel %vm738, %v703, 0
  %v974 = vsel %vm738, %v704, 0
  %v977 = vsel %vm738, %v705, 0
  %v980 = vsel %vm738, %v706, 0
  %v983 = vsel %vm738, %v707, 0
  %v986 = vsel %vm738, %v708, 0
  %v989 = vsel %vm738, %v709, 0
  %v992 = vsel %vm738, %v710, 0
  %v995 = vsel %vm738, %v711, 0
  %v998 = vsel %vm738, %v712, 0
  %v1001 = vsel %vm738, %v713, 0
  %v1004 = vsel %vm738, %v714, 0
  %v1007 = vsel %vm738, %v715, 0
  %v1010 = vsel %vm738, %v716, 0
  %v1013 = vsel %vm738, %v717, 0
  %v1016 = vsel %vm738, %v718, 0
  %v1019 = vsel %vm738, %v719, 0
  %v1022 = vsel %vm738, %v720, 0
  %v1025 = vsel %vm738, %v721, 0
  %v1028 = vsel %vm738, %v722, 0
  %v1031 = vsel %vm738, %v723, 0
  %v1034 = vsel %vm738, %v724, 0
  %v1037 = vsel %vm738, %v725, 0
  %1039 = vmatprep.subr.bf16.mxu0 0
  %1040 = vmatpush1.bf16.msra.mxu0 %v734
  %1041 = vmatprep.subr.bf16.mxu0 0
  %1042 = vmatpush1.bf16.msra.mxu0 %v735
  %1043 = vmatprep.subr.bf16.mxu0 0
  %1044 = vmatpush1.bf16.msra.mxu0 0
  %1045 = vmatprep.subr.bf16.mxu0 0
  %1046 = vmatpush1.bf16.msra.mxu0 0
  %1047 = vmatprep.subr.bf16.mxu0 0
  %1048 = vmatpush1.bf16.msra.mxu0 0
  %1049 = vmatprep.subr.bf16.mxu0 0
  %1050 = vmatpush1.bf16.msra.mxu0 0
  %1051 = vmatprep.subr.bf16.mxu0 0
  %1052 = vmatpush1.bf16.msra.mxu0 0
  %1053 = vmatprep.subr.bf16.mxu0 0
  %1054 = vmatpush1.bf16.msra.mxu0 0
  %1055 = vmatprep.subr.bf16.mxu0 0
  %1056 = vmatpush1.bf16.msra.mxu0 0
  %1057 = vmatprep.subr.bf16.mxu0 0
  %1058 = vmatpush1.bf16.msra.mxu0 0
  %1059 = vmatprep.subr.bf16.mxu0 0
  %1060 = vmatpush1.bf16.msra.mxu0 0
  %1061 = vmatprep.subr.bf16.mxu0 0
  %1062 = vmatpush1.bf16.msra.mxu0 0
  %1063 = vmatprep.subr.bf16.mxu0 0
  %1064 = vmatpush1.bf16.msra.mxu0 0
  %1065 = vmatprep.subr.bf16.mxu0 0
  %1066 = vmatpush1.bf16.msra.mxu0 0
  %1067 = vmatprep.subr.bf16.mxu0 0
  %1068 = vmatpush1.bf16.msra.mxu0 0
  %1069 = vmatprep.subr.bf16.mxu0 0
  %1070 = vmatpush1.bf16.msra.mxu0 0
  %1071 = vmatprep.mubr.bf16.mxu0 0
  %1072 = vmatmul.mubr.bf16.gmra.mrb[0].mxu0 %v740
  %v1073 = vpop.f32.mrb[0].mxu0
  %v1074 = vadd.f32 %v224, %v1073
  %v1075 = vpop.f32.mrb[0].mxu0
  %v1076 = vpop.f32.mrb[0].mxu0
  %v1077 = vadd.f32 %v224, %v1076
  %v1078 = vpop.f32.mrb[0].mxu0
  %1079 = vmatprep.mubr.bf16.mxu0 0
  %1080 = vmatmul.mubr.bf16.gmra.mrb[0].mxu0 %v743
  %v1081 = vpop.f32.mrb[0].mxu0
  %v1082 = vadd.f32 %v224, %v1081
  %v1083 = vpop.f32.mrb[0].mxu0
  %v1084 = vpop.f32.mrb[0].mxu0
  %v1085 = vadd.f32 %v224, %v1084
  %v1086 = vpop.f32.mrb[0].mxu0
  %1087 = vmatprep.mubr.bf16.mxu0 0
  %1088 = vmatmul.mubr.bf16.gmra.mrb[0].mxu0 %v746
  %v1089 = vpop.f32.mrb[0].mxu0
  %v1090 = vadd.f32 %v224, %v1089
  %v1091 = vpop.f32.mrb[0].mxu0
  %v1092 = vpop.f32.mrb[0].mxu0
  %v1093 = vadd.f32 %v224, %v1092
  %v1094 = vpop.f32.mrb[0].mxu0
  %1095 = vmatprep.mubr.bf16.mxu0 0
  %1096 = vmatmul.mubr.bf16.gmra.mrb[0].mxu0 %v749
  %v1097 = vpop.f32.mrb[0].mxu0
  %v1098 = vadd.f32 %v224, %v1097
  %v1099 = vpop.f32.mrb[0].mxu0
  %v1100 = vpop.f32.mrb[0].mxu0
  %v1101 = vadd.f32 %v224, %v1100
  %v1102 = vpop.f32.mrb[0].mxu0
  %1103 = vmatprep.mubr.bf16.mxu0 0
  %1104 = vmatmul.mubr.bf16.gmra.mrb[0].mxu0 %v752
  %v1105 = vpop.f32.mrb[0].mxu0
  %v1106 = vadd.f32 %v224, %v1105
  %v1107 = vpop.f32.mrb[0].mxu0
  %v1108 = vpop.f32.mrb[0].mxu0
  %v1109 = vadd.f32 %v224, %v1108
  %v1110 = vpop.f32.mrb[0].mxu0
  %1111 = vmatprep.mubr.bf16.mxu0 0
  %1112 = vmatmul.mubr.bf16.gmra.mrb[0].mxu0 %v755
  %v1113 = vpop.f32.mrb[0].mxu0
  %v1114 = vadd.f32 %v224, %v1113
  %v1115 = vpop.f32.mrb[0].mxu0
  %v1116 = vpop.f32.mrb[0].mxu0
  %v1117 = vadd.f32 %v224, %v1116
  %v1118 = vpop.f32.mrb[0].mxu0
  %1119 = vmatprep.mubr.bf16.mxu0 0
  %1120 = vmatmul.mubr.bf16.gmra.mrb[0].mxu0 %v758
  %v1121 = vpop.f32.mrb[0].mxu0
  %v1122 = vadd.f32 %v224, %v1121
  %v1123 = vpop.f32.mrb[0].mxu0
  %v1124 = vpop.f32.mrb[0].mxu0
  %v1125 = vadd.f32 %v224, %v1124
  %v1126 = vpop.f32.mrb[0].mxu0
  %1127 = vmatprep.mubr.bf16.mxu0 0
  %1128 = vmatmul.mubr.bf16.gmra.mrb[0].mxu0 %v761
  %v1129 = vpop.f32.mrb[0].mxu0
  %v1130 = vadd.f32 %v224, %v1129
  %v1131 = vpop.f32.mrb[0].mxu0
  %v1132 = vpop.f32.mrb[0].mxu0
  %v1133 = vadd.f32 %v224, %v1132
  %v1134 = vpop.f32.mrb[0].mxu0
  %1135 = vmatprep.mubr.bf16.mxu0 0
  %1136 = vmatmul.mubr.bf16.gmra.mrb[0].mxu0 %v764
  %v1137 = vpop.f32.mrb[0].mxu0
  %v1138 = vadd.f32 %v224, %v1137
  %v1139 = vpop.f32.mrb[0].mxu0
  %v1140 = vpop.f32.mrb[0].mxu0
  %v1141 = vadd.f32 %v224, %v1140
  %v1142 = vpop.f32.mrb[0].mxu0
  %1143 = vmatprep.mubr.bf16.mxu0 0
  %1144 = vmatmul.mubr.bf16.gmra.mrb[0].mxu0 %v767
  %v1145 = vpop.f32.mrb[0].mxu0
  %v1146 = vadd.f32 %v224, %v1145
  %v1147 = vpop.f32.mrb[0].mxu0
  %v1148 = vpop.f32.mrb[0].mxu0
  %v1149 = vadd.f32 %v224, %v1148
  %v1150 = vpop.f32.mrb[0].mxu0
  %1151 = vmatprep.mubr.bf16.mxu0 0
  %1152 = vmatmul.mubr.bf16.gmra.mrb[0].mxu0 %v770
  %v1153 = vpop.f32.mrb[0].mxu0
  %v1154 = vadd.f32 %v224, %v1153
  %v1155 = vpop.f32.mrb[0].mxu0
  %v1156 = vpop.f32.mrb[0].mxu0
  %v1157 = vadd.f32 %v224, %v1156
  %v1158 = vpop.f32.mrb[0].mxu0
  %1159 = vmatprep.mubr.bf16.mxu0 0
  %1160 = vmatmul.mubr.bf16.gmra.mrb[0].mxu0 %v773
  %v1161 = vpop.f32.mrb[0].mxu0
  %v1162 = vadd.f32 %v224, %v1161
  %v1163 = vpop.f32.mrb[0].mxu0
  %v1164 = vpop.f32.mrb[0].mxu0
  %v1165 = vadd.f32 %v224, %v1164
  %v1166 = vpop.f32.mrb[0].mxu0
  %1167 = vmatprep.mubr.bf16.mxu0 0
  %1168 = vmatmul.mubr.bf16.gmra.mrb[0].mxu0 %v776
  %v1169 = vpop.f32.mrb[0].mxu0
  %v1170 = vadd.f32 %v224, %v1169
  %v1171 = vpop.f32.mrb[0].mxu0
  %v1172 = vpop.f32.mrb[0].mxu0
  %v1173 = vadd.f32 %v224, %v1172
  %v1174 = vpop.f32.mrb[0].mxu0
  %1175 = vmatprep.mubr.bf16.mxu0 0
  %1176 = vmatmul.mubr.bf16.gmra.mrb[0].mxu0 %v779
  %v1177 = vpop.f32.mrb[0].mxu0
  %v1178 = vadd.f32 %v224, %v1177
  %v1179 = vpop.f32.mrb[0].mxu0
  %v1180 = vpop.f32.mrb[0].mxu0
  %v1181 = vadd.f32 %v224, %v1180
  %v1182 = vpop.f32.mrb[0].mxu0
  %1183 = vmatprep.mubr.bf16.mxu0 0
  %1184 = vmatmul.mubr.bf16.gmra.mrb[0].mxu0 %v782
  %v1185 = vpop.f32.mrb[0].mxu0
  %v1186 = vadd.f32 %v224, %v1185
  %v1187 = vpop.f32.mrb[0].mxu0
  %v1188 = vpop.f32.mrb[0].mxu0
  %v1189 = vadd.f32 %v224, %v1188
  %v1190 = vpop.f32.mrb[0].mxu0
  %1191 = vmatprep.mubr.bf16.mxu0 0
  %1192 = vmatmul.mubr.bf16.gmra.mrb[0].mxu0 %v785
  %v1193 = vpop.f32.mrb[0].mxu0
  %v1194 = vadd.f32 %v224, %v1193
  %v1195 = vpop.f32.mrb[0].mxu0
  %v1196 = vpop.f32.mrb[0].mxu0
  %v1197 = vadd.f32 %v224, %v1196
  %v1198 = vpop.f32.mrb[0].mxu0
  %1199 = vmatprep.mubr.bf16.mxu0 0
  %1200 = vmatmul.mubr.bf16.gmra.mrb[0].mxu0 %v788
  %v1201 = vpop.f32.mrb[0].mxu0
  %v1202 = vadd.f32 %v224, %v1201
  %v1203 = vpop.f32.mrb[0].mxu0
  %v1204 = vpop.f32.mrb[0].mxu0
  %v1205 = vadd.f32 %v224, %v1204
  %v1206 = vpop.f32.mrb[0].mxu0
  %1207 = vmatprep.mubr.bf16.mxu0 0
  %1208 = vmatmul.mubr.bf16.gmra.mrb[0].mxu0 %v791
  %v1209 = vpop.f32.mrb[0].mxu0
  %v1210 = vadd.f32 %v224, %v1209
  %v1211 = vpop.f32.mrb[0].mxu0
  %v1212 = vpop.f32.mrb[0].mxu0
  %v1213 = vadd.f32 %v224, %v1212
  %v1214 = vpop.f32.mrb[0].mxu0
  %1215 = vmatprep.mubr.bf16.mxu0 0
  %1216 = vmatmul.mubr.bf16.gmra.mrb[0].mxu0 %v794
  %v1217 = vpop.f32.mrb[0].mxu0
  %v1218 = vadd.f32 %v224, %v1217
  %v1219 = vpop.f32.mrb[0].mxu0
  %v1220 = vpop.f32.mrb[0].mxu0
  %v1221 = vadd.f32 %v224, %v1220
  %v1222 = vpop.f32.mrb[0].mxu0
  %1223 = vmatprep.mubr.bf16.mxu0 0
  %1224 = vmatmul.mubr.bf16.gmra.mrb[0].mxu0 %v797
  %v1225 = vpop.f32.mrb[0].mxu0
  %v1226 = vadd.f32 %v224, %v1225
  %v1227 = vpop.f32.mrb[0].mxu0
  %v1228 = vpop.f32.mrb[0].mxu0
  %v1229 = vadd.f32 %v224, %v1228
  %v1230 = vpop.f32.mrb[0].mxu0
  %1231 = vmatprep.mubr.bf16.mxu0 0
  %1232 = vmatmul.mubr.bf16.gmra.mrb[0].mxu0 %v800
  %v1233 = vpop.f32.mrb[0].mxu0
  %v1234 = vadd.f32 %v224, %v1233
  %v1235 = vpop.f32.mrb[0].mxu0
  %v1236 = vpop.f32.mrb[0].mxu0
  %v1237 = vadd.f32 %v224, %v1236
  %v1238 = vpop.f32.mrb[0].mxu0
  %1239 = vmatprep.mubr.bf16.mxu0 0
  %1240 = vmatmul.mubr.bf16.gmra.mrb[0].mxu0 %v803
  %v1241 = vpop.f32.mrb[0].mxu0
  %v1242 = vadd.f32 %v224, %v1241
  %v1243 = vpop.f32.mrb[0].mxu0
  %v1244 = vpop.f32.mrb[0].mxu0
  %v1245 = vadd.f32 %v224, %v1244
  %v1246 = vpop.f32.mrb[0].mxu0
  %1247 = vmatprep.mubr.bf16.mxu0 0
  %1248 = vmatmul.mubr.bf16.gmra.mrb[0].mxu0 %v806
  %v1249 = vpop.f32.mrb[0].mxu0
  %v1250 = vadd.f32 %v224, %v1249
  %v1251 = vpop.f32.mrb[0].mxu0
  %v1252 = vpop.f32.mrb[0].mxu0
  %v1253 = vadd.f32 %v224, %v1252
  %v1254 = vpop.f32.mrb[0].mxu0
  %1255 = vmatprep.mubr.bf16.mxu0 0
  %1256 = vmatmul.mubr.bf16.gmra.mrb[0].mxu0 %v809
  %v1257 = vpop.f32.mrb[0].mxu0
  %v1258 = vadd.f32 %v224, %v1257
  %v1259 = vpop.f32.mrb[0].mxu0
  %v1260 = vpop.f32.mrb[0].mxu0
  %v1261 = vadd.f32 %v224, %v1260
  %v1262 = vpop.f32.mrb[0].mxu0
  %1263 = vmatprep.mubr.bf16.mxu0 0
  %1264 = vmatmul.mubr.bf16.gmra.mrb[0].mxu0 %v812
  %v1265 = vpop.f32.mrb[0].mxu0
  %v1266 = vadd.f32 %v224, %v1265
  %v1267 = vpop.f32.mrb[0].mxu0
  %v1268 = vpop.f32.mrb[0].mxu0
  %v1269 = vadd.f32 %v224, %v1268
  %v1270 = vpop.f32.mrb[0].mxu0
  %1271 = vmatprep.mubr.bf16.mxu0 0
  %1272 = vmatmul.mubr.bf16.gmra.mrb[0].mxu0 %v815
  %v1273 = vpop.f32.mrb[0].mxu0
  %v1274 = vadd.f32 %v224, %v1273
  %v1275 = vpop.f32.mrb[0].mxu0
  %v1276 = vpop.f32.mrb[0].mxu0
  %v1277 = vadd.f32 %v224, %v1276
  %v1278 = vpop.f32.mrb[0].mxu0
  %1279 = vmatprep.mubr.bf16.mxu0 0
  %1280 = vmatmul.mubr.bf16.gmra.mrb[0].mxu0 %v818
  %v1281 = vpop.f32.mrb[0].mxu0
  %v1282 = vadd.f32 %v224, %v1281
  %v1283 = vpop.f32.mrb[0].mxu0
  %v1284 = vpop.f32.mrb[0].mxu0
  %v1285 = vadd.f32 %v224, %v1284
  %v1286 = vpop.f32.mrb[0].mxu0
  %1287 = vmatprep.mubr.bf16.mxu0 0
  %1288 = vmatmul.mubr.bf16.gmra.mrb[0].mxu0 %v821
  %v1289 = vpop.f32.mrb[0].mxu0
  %v1290 = vadd.f32 %v224, %v1289
  %v1291 = vpop.f32.mrb[0].mxu0
  %v1292 = vpop.f32.mrb[0].mxu0
  %v1293 = vadd.f32 %v224, %v1292
  %v1294 = vpop.f32.mrb[0].mxu0
  %1295 = vmatprep.mubr.bf16.mxu0 0
  %1296 = vmatmul.mubr.bf16.gmra.mrb[0].mxu0 %v824
  %v1297 = vpop.f32.mrb[0].mxu0
  %v1298 = vadd.f32 %v224, %v1297
  %v1299 = vpop.f32.mrb[0].mxu0
  %v1300 = vpop.f32.mrb[0].mxu0
  %v1301 = vadd.f32 %v224, %v1300
  %v1302 = vpop.f32.mrb[0].mxu0
  %1303 = vmatprep.mubr.bf16.mxu0 0
  %1304 = vmatmul.mubr.bf16.gmra.mrb[0].mxu0 %v827
  %v1305 = vpop.f32.mrb[0].mxu0
  %v1306 = vadd.f32 %v224, %v1305
  %v1307 = vpop.f32.mrb[0].mxu0
  %v1308 = vpop.f32.mrb[0].mxu0
  %v1309 = vadd.f32 %v224, %v1308
  %v1310 = vpop.f32.mrb[0].mxu0
  %1311 = vmatprep.mubr.bf16.mxu0 0
  %1312 = vmatmul.mubr.bf16.gmra.mrb[0].mxu0 %v830
  %v1313 = vpop.f32.mrb[0].mxu0
  %v1314 = vadd.f32 %v224, %v1313
  %v1315 = vpop.f32.mrb[0].mxu0
  %v1316 = vpop.f32.mrb[0].mxu0
  %v1317 = vadd.f32 %v224, %v1316
  %v1318 = vpop.f32.mrb[0].mxu0
  %1319 = vmatprep.mubr.bf16.mxu0 0
  %1320 = vmatmul.mubr.bf16.gmra.mrb[0].mxu0 %v833
  %v1321 = vpop.f32.mrb[0].mxu0
  %v1322 = vadd.f32 %v224, %v1321
  %v1323 = vpop.f32.mrb[0].mxu0
  %v1324 = vpop.f32.mrb[0].mxu0
  %v1325 = vadd.f32 %v224, %v1324
  %v1326 = vpop.f32.mrb[0].mxu0
  %1327 = vmatprep.mubr.bf16.mxu0 0
  %1328 = vmatmul.mubr.bf16.gmra.mrb[0].mxu0 %v836
  %v1329 = vpop.f32.mrb[0].mxu0
  %v1330 = vadd.f32 %v224, %v1329
  %v1331 = vpop.f32.mrb[0].mxu0
  %v1332 = vpop.f32.mrb[0].mxu0
  %v1333 = vadd.f32 %v224, %v1332
  %v1334 = vpop.f32.mrb[0].mxu0
  %1335 = vmatprep.mubr.bf16.mxu0 0
  %1336 = vmatmul.mubr.bf16.gmra.mrb[0].mxu0 %v839
  %v1337 = vpop.f32.mrb[0].mxu0
  %v1338 = vadd.f32 %v224, %v1337
  %v1339 = vpop.f32.mrb[0].mxu0
  %v1340 = vpop.f32.mrb[0].mxu0
  %v1341 = vadd.f32 %v224, %v1340
  %v1342 = vpop.f32.mrb[0].mxu0
  %1343 = vmatprep.mubr.bf16.mxu0 0
  %1344 = vmatmul.mubr.bf16.gmra.mrb[0].mxu0 %v842
  %v1345 = vpop.f32.mrb[0].mxu0
  %v1346 = vadd.f32 %v224, %v1345
  %v1347 = vpop.f32.mrb[0].mxu0
  %v1348 = vpop.f32.mrb[0].mxu0
  %v1349 = vadd.f32 %v224, %v1348
  %v1350 = vpop.f32.mrb[0].mxu0
  %1351 = vmatprep.mubr.bf16.mxu0 0
  %1352 = vmatmul.mubr.bf16.gmra.mrb[0].mxu0 %v845
  %v1353 = vpop.f32.mrb[0].mxu0
  %v1354 = vadd.f32 %v224, %v1353
  %v1355 = vpop.f32.mrb[0].mxu0
  %v1356 = vpop.f32.mrb[0].mxu0
  %v1357 = vadd.f32 %v224, %v1356
  %v1358 = vpop.f32.mrb[0].mxu0
  %1359 = vmatprep.mubr.bf16.mxu0 0
  %1360 = vmatmul.mubr.bf16.gmra.mrb[0].mxu0 %v848
  %v1361 = vpop.f32.mrb[0].mxu0
  %v1362 = vadd.f32 %v224, %v1361
  %v1363 = vpop.f32.mrb[0].mxu0
  %v1364 = vpop.f32.mrb[0].mxu0
  %v1365 = vadd.f32 %v224, %v1364
  %v1366 = vpop.f32.mrb[0].mxu0
  %1367 = vmatprep.mubr.bf16.mxu0 0
  %1368 = vmatmul.mubr.bf16.gmra.mrb[0].mxu0 %v851
  %v1369 = vpop.f32.mrb[0].mxu0
  %v1370 = vadd.f32 %v224, %v1369
  %v1371 = vpop.f32.mrb[0].mxu0
  %v1372 = vpop.f32.mrb[0].mxu0
  %v1373 = vadd.f32 %v224, %v1372
  %v1374 = vpop.f32.mrb[0].mxu0
  %1375 = vmatprep.mubr.bf16.mxu0 0
  %1376 = vmatmul.mubr.bf16.gmra.mrb[0].mxu0 %v854
  %v1377 = vpop.f32.mrb[0].mxu0
  %v1378 = vadd.f32 %v224, %v1377
  %v1379 = vpop.f32.mrb[0].mxu0
  %v1380 = vpop.f32.mrb[0].mxu0
  %v1381 = vadd.f32 %v224, %v1380
  %v1382 = vpop.f32.mrb[0].mxu0
  %1383 = vmatprep.mubr.bf16.mxu0 0
  %1384 = vmatmul.mubr.bf16.gmra.mrb[0].mxu0 %v857
  %v1385 = vpop.f32.mrb[0].mxu0
  %v1386 = vadd.f32 %v224, %v1385
  %v1387 = vpop.f32.mrb[0].mxu0
  %v1388 = vpop.f32.mrb[0].mxu0
  %v1389 = vadd.f32 %v224, %v1388
  %v1390 = vpop.f32.mrb[0].mxu0
  %1391 = vmatprep.mubr.bf16.mxu0 0
  %1392 = vmatmul.mubr.bf16.gmra.mrb[0].mxu0 %v860
  %v1393 = vpop.f32.mrb[0].mxu0
  %v1394 = vadd.f32 %v224, %v1393
  %v1395 = vpop.f32.mrb[0].mxu0
  %v1396 = vpop.f32.mrb[0].mxu0
  %v1397 = vadd.f32 %v224, %v1396
  %v1398 = vpop.f32.mrb[0].mxu0
  %1399 = vmatprep.mubr.bf16.mxu0 0
  %1400 = vmatmul.mubr.bf16.gmra.mrb[0].mxu0 %v863
  %v1401 = vpop.f32.mrb[0].mxu0
  %v1402 = vadd.f32 %v224, %v1401
  %v1403 = vpop.f32.mrb[0].mxu0
  %v1404 = vpop.f32.mrb[0].mxu0
  %v1405 = vadd.f32 %v224, %v1404
  %v1406 = vpop.f32.mrb[0].mxu0
  %1407 = vmatprep.mubr.bf16.mxu0 0
  %1408 = vmatmul.mubr.bf16.gmra.mrb[0].mxu0 %v866
  %v1409 = vpop.f32.mrb[0].mxu0
  %v1410 = vadd.f32 %v224, %v1409
  %v1411 = vpop.f32.mrb[0].mxu0
  %v1412 = vpop.f32.mrb[0].mxu0
  %v1413 = vadd.f32 %v224, %v1412
  %v1414 = vpop.f32.mrb[0].mxu0
  %1415 = vmatprep.mubr.bf16.mxu0 0
  %1416 = vmatmul.mubr.bf16.gmra.mrb[0].mxu0 %v869
  %v1417 = vpop.f32.mrb[0].mxu0
  %v1418 = vadd.f32 %v224, %v1417
  %v1419 = vpop.f32.mrb[0].mxu0
  %v1420 = vpop.f32.mrb[0].mxu0
  %v1421 = vadd.f32 %v224, %v1420
  %v1422 = vpop.f32.mrb[0].mxu0
  %1423 = vmatprep.mubr.bf16.mxu0 0
  %1424 = vmatmul.mubr.bf16.gmra.mrb[0].mxu0 %v872
  %v1425 = vpop.f32.mrb[0].mxu0
  %v1426 = vadd.f32 %v224, %v1425
  %v1427 = vpop.f32.mrb[0].mxu0
  %v1428 = vpop.f32.mrb[0].mxu0
  %v1429 = vadd.f32 %v224, %v1428
  %v1430 = vpop.f32.mrb[0].mxu0
  %1431 = vmatprep.mubr.bf16.mxu0 0
  %1432 = vmatmul.mubr.bf16.gmra.mrb[0].mxu0 %v875
  %v1433 = vpop.f32.mrb[0].mxu0
  %v1434 = vadd.f32 %v224, %v1433
  %v1435 = vpop.f32.mrb[0].mxu0
  %v1436 = vpop.f32.mrb[0].mxu0
  %v1437 = vadd.f32 %v224, %v1436
  %v1438 = vpop.f32.mrb[0].mxu0
  %1439 = vmatprep.mubr.bf16.mxu0 0
  %1440 = vmatmul.mubr.bf16.gmra.mrb[0].mxu0 %v878
  %v1441 = vpop.f32.mrb[0].mxu0
  %v1442 = vadd.f32 %v224, %v1441
  %v1443 = vpop.f32.mrb[0].mxu0
  %v1444 = vpop.f32.mrb[0].mxu0
  %v1445 = vadd.f32 %v224, %v1444
  %v1446 = vpop.f32.mrb[0].mxu0
  %1447 = vmatprep.mubr.bf16.mxu0 0
  %1448 = vmatmul.mubr.bf16.gmra.mrb[0].mxu0 %v881
  %v1449 = vpop.f32.mrb[0].mxu0
  %v1450 = vadd.f32 %v224, %v1449
  %v1451 = vpop.f32.mrb[0].mxu0
  %v1452 = vpop.f32.mrb[0].mxu0
  %v1453 = vadd.f32 %v224, %v1452
  %v1454 = vpop.f32.mrb[0].mxu0
  %1455 = vmatprep.mubr.bf16.mxu0 0
  %1456 = vmatmul.mubr.bf16.gmra.mrb[0].mxu0 %v884
  %v1457 = vpop.f32.mrb[0].mxu0
  %v1458 = vadd.f32 %v224, %v1457
  %v1459 = vpop.f32.mrb[0].mxu0
  %v1460 = vpop.f32.mrb[0].mxu0
  %v1461 = vadd.f32 %v224, %v1460
  %v1462 = vpop.f32.mrb[0].mxu0
  %1463 = vmatprep.mubr.bf16.mxu0 0
  %1464 = vmatmul.mubr.bf16.gmra.mrb[0].mxu0 %v887
  %v1465 = vpop.f32.mrb[0].mxu0
  %v1466 = vadd.f32 %v224, %v1465
  %v1467 = vpop.f32.mrb[0].mxu0
  %v1468 = vpop.f32.mrb[0].mxu0
  %v1469 = vadd.f32 %v224, %v1468
  %v1470 = vpop.f32.mrb[0].mxu0
  %1471 = vmatprep.mubr.bf16.mxu0 0
  %1472 = vmatmul.mubr.bf16.gmra.mrb[0].mxu0 %v890
  %v1473 = vpop.f32.mrb[0].mxu0
  %v1474 = vadd.f32 %v224, %v1473
  %v1475 = vpop.f32.mrb[0].mxu0
  %v1476 = vpop.f32.mrb[0].mxu0
  %v1477 = vadd.f32 %v224, %v1476
  %v1478 = vpop.f32.mrb[0].mxu0
  %1479 = vmatprep.mubr.bf16.mxu0 0
  %1480 = vmatmul.mubr.bf16.gmra.mrb[0].mxu0 %v893
  %v1481 = vpop.f32.mrb[0].mxu0
  %v1482 = vadd.f32 %v224, %v1481
  %v1483 = vpop.f32.mrb[0].mxu0
  %v1484 = vpop.f32.mrb[0].mxu0
  %v1485 = vadd.f32 %v224, %v1484
  %v1486 = vpop.f32.mrb[0].mxu0
  %1487 = vmatprep.mubr.bf16.mxu0 0
  %1488 = vmatmul.mubr.bf16.gmra.mrb[0].mxu0 %v896
  %v1489 = vpop.f32.mrb[0].mxu0
  %v1490 = vadd.f32 %v224, %v1489
  %v1491 = vpop.f32.mrb[0].mxu0
  %v1492 = vpop.f32.mrb[0].mxu0
  %v1493 = vadd.f32 %v224, %v1492
  %v1494 = vpop.f32.mrb[0].mxu0
  %1495 = vmatprep.mubr.bf16.mxu0 0
  %1496 = vmatmul.mubr.bf16.gmra.mrb[0].mxu0 %v899
  %v1497 = vpop.f32.mrb[0].mxu0
  %v1498 = vadd.f32 %v224, %v1497
  %v1499 = vpop.f32.mrb[0].mxu0
  %v1500 = vpop.f32.mrb[0].mxu0
  %v1501 = vadd.f32 %v224, %v1500
  %v1502 = vpop.f32.mrb[0].mxu0
  %1503 = vmatprep.mubr.bf16.mxu0 0
  %1504 = vmatmul.mubr.bf16.gmra.mrb[0].mxu0 %v902
  %v1505 = vpop.f32.mrb[0].mxu0
  %v1506 = vadd.f32 %v224, %v1505
  %v1507 = vpop.f32.mrb[0].mxu0
  %v1508 = vpop.f32.mrb[0].mxu0
  %v1509 = vadd.f32 %v224, %v1508
  %v1510 = vpop.f32.mrb[0].mxu0
  %1511 = vmatprep.mubr.bf16.mxu0 0
  %1512 = vmatmul.mubr.bf16.gmra.mrb[0].mxu0 %v905
  %v1513 = vpop.f32.mrb[0].mxu0
  %v1514 = vadd.f32 %v224, %v1513
  %v1515 = vpop.f32.mrb[0].mxu0
  %v1516 = vpop.f32.mrb[0].mxu0
  %v1517 = vadd.f32 %v224, %v1516
  %v1518 = vpop.f32.mrb[0].mxu0
  %1519 = vmatprep.mubr.bf16.mxu0 0
  %1520 = vmatmul.mubr.bf16.gmra.mrb[0].mxu0 %v908
  %v1521 = vpop.f32.mrb[0].mxu0
  %v1522 = vadd.f32 %v224, %v1521
  %v1523 = vpop.f32.mrb[0].mxu0
  %v1524 = vpop.f32.mrb[0].mxu0
  %v1525 = vadd.f32 %v224, %v1524
  %v1526 = vpop.f32.mrb[0].mxu0
  %1527 = vmatprep.mubr.bf16.mxu0 0
  %1528 = vmatmul.mubr.bf16.gmra.mrb[0].mxu0 %v911
  %v1529 = vpop.f32.mrb[0].mxu0
  %v1530 = vadd.f32 %v224, %v1529
  %v1531 = vpop.f32.mrb[0].mxu0
  %v1532 = vpop.f32.mrb[0].mxu0
  %v1533 = vadd.f32 %v224, %v1532
  %v1534 = vpop.f32.mrb[0].mxu0
  %1535 = vmatprep.mubr.bf16.mxu0 0
  %1536 = vmatmul.mubr.bf16.gmra.mrb[0].mxu0 %v914
  %v1537 = vpop.f32.mrb[0].mxu0
  %v1538 = vadd.f32 %v224, %v1537
  %v1539 = vpop.f32.mrb[0].mxu0
  %v1540 = vpop.f32.mrb[0].mxu0
  %v1541 = vadd.f32 %v224, %v1540
  %v1542 = vpop.f32.mrb[0].mxu0
  %1543 = vmatprep.mubr.bf16.mxu0 0
  %1544 = vmatmul.mubr.bf16.gmra.mrb[0].mxu0 %v917
  %v1545 = vpop.f32.mrb[0].mxu0
  %v1546 = vadd.f32 %v224, %v1545
  %v1547 = vpop.f32.mrb[0].mxu0
  %v1548 = vpop.f32.mrb[0].mxu0
  %v1549 = vadd.f32 %v224, %v1548
  %v1550 = vpop.f32.mrb[0].mxu0
  %1551 = vmatprep.mubr.bf16.mxu0 0
  %1552 = vmatmul.mubr.bf16.gmra.mrb[0].mxu0 %v920
  %v1553 = vpop.f32.mrb[0].mxu0
  %v1554 = vadd.f32 %v224, %v1553
  %v1555 = vpop.f32.mrb[0].mxu0
  %v1556 = vpop.f32.mrb[0].mxu0
  %v1557 = vadd.f32 %v224, %v1556
  %v1558 = vpop.f32.mrb[0].mxu0
  %1559 = vmatprep.mubr.bf16.mxu0 0
  %1560 = vmatmul.mubr.bf16.gmra.mrb[0].mxu0 %v923
  %v1561 = vpop.f32.mrb[0].mxu0
  %v1562 = vadd.f32 %v224, %v1561
  %v1563 = vpop.f32.mrb[0].mxu0
  %v1564 = vpop.f32.mrb[0].mxu0
  %v1565 = vadd.f32 %v224, %v1564
  %v1566 = vpop.f32.mrb[0].mxu0
  %1567 = vmatprep.mubr.bf16.mxu0 0
  %1568 = vmatmul.mubr.bf16.gmra.mrb[0].mxu0 %v926
  %v1569 = vpop.f32.mrb[0].mxu0
  %v1570 = vadd.f32 %v224, %v1569
  %v1571 = vpop.f32.mrb[0].mxu0
  %v1572 = vpop.f32.mrb[0].mxu0
  %v1573 = vadd.f32 %v224, %v1572
  %v1574 = vpop.f32.mrb[0].mxu0
  %1575 = vmatprep.mubr.bf16.mxu0 0
  %1576 = vmatmul.mubr.bf16.gmra.mrb[0].mxu0 %v929
  %v1577 = vpop.f32.mrb[0].mxu0
  %v1578 = vadd.f32 %v224, %v1577
  %v1579 = vpop.f32.mrb[0].mxu0
  %v1580 = vpop.f32.mrb[0].mxu0
  %v1581 = vadd.f32 %v224, %v1580
  %v1582 = vpop.f32.mrb[0].mxu0
  %1583 = vmatprep.mubr.bf16.mxu0 0
  %1584 = vmatmul.mubr.bf16.gmra.mrb[0].mxu0 %v932
  %v1585 = vpop.f32.mrb[0].mxu0
  %v1586 = vadd.f32 %v224, %v1585
  %v1587 = vpop.f32.mrb[0].mxu0
  %v1588 = vpop.f32.mrb[0].mxu0
  %v1589 = vadd.f32 %v224, %v1588
  %v1590 = vpop.f32.mrb[0].mxu0
  %1591 = vmatprep.mubr.bf16.mxu0 0
  %1592 = vmatmul.mubr.bf16.gmra.mrb[0].mxu0 %v935
  %v1593 = vpop.f32.mrb[0].mxu0
  %v1594 = vadd.f32 %v224, %v1593
  %v1595 = vpop.f32.mrb[0].mxu0
  %v1596 = vpop.f32.mrb[0].mxu0
  %v1597 = vadd.f32 %v224, %v1596
  %v1598 = vpop.f32.mrb[0].mxu0
  %1599 = vmatprep.mubr.bf16.mxu0 0
  %1600 = vmatmul.mubr.bf16.gmra.mrb[0].mxu0 %v938
  %v1601 = vpop.f32.mrb[0].mxu0
  %v1602 = vadd.f32 %v224, %v1601
  %v1603 = vpop.f32.mrb[0].mxu0
  %v1604 = vpop.f32.mrb[0].mxu0
  %v1605 = vadd.f32 %v224, %v1604
  %v1606 = vpop.f32.mrb[0].mxu0
  %1607 = vmatprep.mubr.bf16.mxu0 0
  %1608 = vmatmul.mubr.bf16.gmra.mrb[0].mxu0 %v941
  %v1609 = vpop.f32.mrb[0].mxu0
  %v1610 = vadd.f32 %v224, %v1609
  %v1611 = vpop.f32.mrb[0].mxu0
  %v1612 = vpop.f32.mrb[0].mxu0
  %v1613 = vadd.f32 %v224, %v1612
  %v1614 = vpop.f32.mrb[0].mxu0
  %1615 = vmatprep.mubr.bf16.mxu0 0
  %1616 = vmatmul.mubr.bf16.gmra.mrb[0].mxu0 %v944
  %v1617 = vpop.f32.mrb[0].mxu0
  %v1618 = vadd.f32 %v224, %v1617
  %v1619 = vpop.f32.mrb[0].mxu0
  %v1620 = vpop.f32.mrb[0].mxu0
  %v1621 = vadd.f32 %v224, %v1620
  %v1622 = vpop.f32.mrb[0].mxu0
  %1623 = vmatprep.mubr.bf16.mxu0 0
  %1624 = vmatmul.mubr.bf16.gmra.mrb[0].mxu0 %v947
  %v1625 = vpop.f32.mrb[0].mxu0
  %v1626 = vadd.f32 %v224, %v1625
  %v1627 = vpop.f32.mrb[0].mxu0
  %v1628 = vpop.f32.mrb[0].mxu0
  %v1629 = vadd.f32 %v224, %v1628
  %v1630 = vpop.f32.mrb[0].mxu0
  %1631 = vmatprep.mubr.bf16.mxu0 0
  %1632 = vmatmul.mubr.bf16.gmra.mrb[0].mxu0 %v950
  %v1633 = vpop.f32.mrb[0].mxu0
  %v1634 = vadd.f32 %v224, %v1633
  %v1635 = vpop.f32.mrb[0].mxu0
  %v1636 = vpop.f32.mrb[0].mxu0
  %v1637 = vadd.f32 %v224, %v1636
  %v1638 = vpop.f32.mrb[0].mxu0
  %1639 = vmatprep.mubr.bf16.mxu0 0
  %1640 = vmatmul.mubr.bf16.gmra.mrb[0].mxu0 %v953
  %v1641 = vpop.f32.mrb[0].mxu0
  %v1642 = vadd.f32 %v224, %v1641
  %v1643 = vpop.f32.mrb[0].mxu0
  %v1644 = vpop.f32.mrb[0].mxu0
  %v1645 = vadd.f32 %v224, %v1644
  %v1646 = vpop.f32.mrb[0].mxu0
  %1647 = vmatprep.mubr.bf16.mxu0 0
  %1648 = vmatmul.mubr.bf16.gmra.mrb[0].mxu0 %v956
  %v1649 = vpop.f32.mrb[0].mxu0
  %v1650 = vadd.f32 %v224, %v1649
  %v1651 = vpop.f32.mrb[0].mxu0
  %v1652 = vpop.f32.mrb[0].mxu0
  %v1653 = vadd.f32 %v224, %v1652
  %v1654 = vpop.f32.mrb[0].mxu0
  %1655 = vmatprep.mubr.bf16.mxu0 0
  %1656 = vmatmul.mubr.bf16.gmra.mrb[0].mxu0 %v959
  %v1657 = vpop.f32.mrb[0].mxu0
  %v1658 = vadd.f32 %v224, %v1657
  %v1659 = vpop.f32.mrb[0].mxu0
  %v1660 = vpop.f32.mrb[0].mxu0
  %v1661 = vadd.f32 %v224, %v1660
  %v1662 = vpop.f32.mrb[0].mxu0
  %1663 = vmatprep.mubr.bf16.mxu0 0
  %1664 = vmatmul.mubr.bf16.gmra.mrb[0].mxu0 %v962
  %v1665 = vpop.f32.mrb[0].mxu0
  %v1666 = vadd.f32 %v224, %v1665
  %v1667 = vpop.f32.mrb[0].mxu0
  %v1668 = vpop.f32.mrb[0].mxu0
  %v1669 = vadd.f32 %v224, %v1668
  %v1670 = vpop.f32.mrb[0].mxu0
  %1671 = vmatprep.mubr.bf16.mxu0 0
  %1672 = vmatmul.mubr.bf16.gmra.mrb[0].mxu0 %v965
  %v1673 = vpop.f32.mrb[0].mxu0
  %v1674 = vadd.f32 %v224, %v1673
  %v1675 = vpop.f32.mrb[0].mxu0
  %v1676 = vpop.f32.mrb[0].mxu0
  %v1677 = vadd.f32 %v224, %v1676
  %v1678 = vpop.f32.mrb[0].mxu0
  %1679 = vmatprep.mubr.bf16.mxu0 0
  %1680 = vmatmul.mubr.bf16.gmra.mrb[0].mxu0 %v968
  %v1681 = vpop.f32.mrb[0].mxu0
  %v1682 = vadd.f32 %v224, %v1681
  %v1683 = vpop.f32.mrb[0].mxu0
  %v1684 = vpop.f32.mrb[0].mxu0
  %v1685 = vadd.f32 %v224, %v1684
  %v1686 = vpop.f32.mrb[0].mxu0
  %1687 = vmatprep.mubr.bf16.mxu0 0
  %1688 = vmatmul.mubr.bf16.gmra.mrb[0].mxu0 %v971
  %v1689 = vpop.f32.mrb[0].mxu0
  %v1690 = vadd.f32 %v224, %v1689
  %v1691 = vpop.f32.mrb[0].mxu0
  %v1692 = vpop.f32.mrb[0].mxu0
  %v1693 = vadd.f32 %v224, %v1692
  %v1694 = vpop.f32.mrb[0].mxu0
  %1695 = vmatprep.mubr.bf16.mxu0 0
  %1696 = vmatmul.mubr.bf16.gmra.mrb[0].mxu0 %v974
  %v1697 = vpop.f32.mrb[0].mxu0
  %v1698 = vadd.f32 %v224, %v1697
  %v1699 = vpop.f32.mrb[0].mxu0
  %v1700 = vpop.f32.mrb[0].mxu0
  %v1701 = vadd.f32 %v224, %v1700
  %v1702 = vpop.f32.mrb[0].mxu0
  %1703 = vmatprep.mubr.bf16.mxu0 0
  %1704 = vmatmul.mubr.bf16.gmra.mrb[0].mxu0 %v977
  %v1705 = vpop.f32.mrb[0].mxu0
  %v1706 = vadd.f32 %v224, %v1705
  %v1707 = vpop.f32.mrb[0].mxu0
  %v1708 = vpop.f32.mrb[0].mxu0
  %v1709 = vadd.f32 %v224, %v1708
  %v1710 = vpop.f32.mrb[0].mxu0
  %1711 = vmatprep.mubr.bf16.mxu0 0
  %1712 = vmatmul.mubr.bf16.gmra.mrb[0].mxu0 %v980
  %v1713 = vpop.f32.mrb[0].mxu0
  %v1714 = vadd.f32 %v224, %v1713
  %v1715 = vpop.f32.mrb[0].mxu0
  %v1716 = vpop.f32.mrb[0].mxu0
  %v1717 = vadd.f32 %v224, %v1716
  %v1718 = vpop.f32.mrb[0].mxu0
  %1719 = vmatprep.mubr.bf16.mxu0 0
  %1720 = vmatmul.mubr.bf16.gmra.mrb[0].mxu0 %v983
  %v1721 = vpop.f32.mrb[0].mxu0
  %v1722 = vadd.f32 %v224, %v1721
  %v1723 = vpop.f32.mrb[0].mxu0
  %v1724 = vpop.f32.mrb[0].mxu0
  %v1725 = vadd.f32 %v224, %v1724
  %v1726 = vpop.f32.mrb[0].mxu0
  %1727 = vmatprep.mubr.bf16.mxu0 0
  %1728 = vmatmul.mubr.bf16.gmra.mrb[0].mxu0 %v986
  %v1729 = vpop.f32.mrb[0].mxu0
  %v1730 = vadd.f32 %v224, %v1729
  %v1731 = vpop.f32.mrb[0].mxu0
  %v1732 = vpop.f32.mrb[0].mxu0
  %v1733 = vadd.f32 %v224, %v1732
  %v1734 = vpop.f32.mrb[0].mxu0
  %1735 = vmatprep.mubr.bf16.mxu0 0
  %1736 = vmatmul.mubr.bf16.gmra.mrb[0].mxu0 %v989
  %v1737 = vpop.f32.mrb[0].mxu0
  %v1738 = vadd.f32 %v224, %v1737
  %v1739 = vpop.f32.mrb[0].mxu0
  %v1740 = vpop.f32.mrb[0].mxu0
  %v1741 = vadd.f32 %v224, %v1740
  %v1742 = vpop.f32.mrb[0].mxu0
  %1743 = vmatprep.mubr.bf16.mxu0 0
  %1744 = vmatmul.mubr.bf16.gmra.mrb[0].mxu0 %v992
  %v1745 = vpop.f32.mrb[0].mxu0
  %v1746 = vadd.f32 %v224, %v1745
  %v1747 = vpop.f32.mrb[0].mxu0
  %v1748 = vpop.f32.mrb[0].mxu0
  %v1749 = vadd.f32 %v224, %v1748
  %v1750 = vpop.f32.mrb[0].mxu0
  %1751 = vmatprep.mubr.bf16.mxu0 0
  %1752 = vmatmul.mubr.bf16.gmra.mrb[0].mxu0 %v995
  %v1753 = vpop.f32.mrb[0].mxu0
  %v1754 = vadd.f32 %v224, %v1753
  %v1755 = vpop.f32.mrb[0].mxu0
  %v1756 = vpop.f32.mrb[0].mxu0
  %v1757 = vadd.f32 %v224, %v1756
  %v1758 = vpop.f32.mrb[0].mxu0
  %1759 = vmatprep.mubr.bf16.mxu0 0
  %1760 = vmatmul.mubr.bf16.gmra.mrb[0].mxu0 %v998
  %v1761 = vpop.f32.mrb[0].mxu0
  %v1762 = vadd.f32 %v224, %v1761
  %v1763 = vpop.f32.mrb[0].mxu0
  %v1764 = vpop.f32.mrb[0].mxu0
  %v1765 = vadd.f32 %v224, %v1764
  %v1766 = vpop.f32.mrb[0].mxu0
  %1767 = vmatprep.mubr.bf16.mxu0 0
  %1768 = vmatmul.mubr.bf16.gmra.mrb[0].mxu0 %v1001
  %v1769 = vpop.f32.mrb[0].mxu0
  %v1770 = vadd.f32 %v224, %v1769
  %v1771 = vpop.f32.mrb[0].mxu0
  %v1772 = vpop.f32.mrb[0].mxu0
  %v1773 = vadd.f32 %v224, %v1772
  %v1774 = vpop.f32.mrb[0].mxu0
  %1775 = vmatprep.mubr.bf16.mxu0 0
  %1776 = vmatmul.mubr.bf16.gmra.mrb[0].mxu0 %v1004
  %v1777 = vpop.f32.mrb[0].mxu0
  %v1778 = vadd.f32 %v224, %v1777
  %v1779 = vpop.f32.mrb[0].mxu0
  %v1780 = vpop.f32.mrb[0].mxu0
  %v1781 = vadd.f32 %v224, %v1780
  %v1782 = vpop.f32.mrb[0].mxu0
  %1783 = vmatprep.mubr.bf16.mxu0 0
  %1784 = vmatmul.mubr.bf16.gmra.mrb[0].mxu0 %v1007
  %v1785 = vpop.f32.mrb[0].mxu0
  %v1786 = vadd.f32 %v224, %v1785
  %v1787 = vpop.f32.mrb[0].mxu0
  %v1788 = vpop.f32.mrb[0].mxu0
  %v1789 = vadd.f32 %v224, %v1788
  %v1790 = vpop.f32.mrb[0].mxu0
  %1791 = vmatprep.mubr.bf16.mxu0 0
  %1792 = vmatmul.mubr.bf16.gmra.mrb[0].mxu0 %v1010
  %v1793 = vpop.f32.mrb[0].mxu0
  %v1794 = vadd.f32 %v224, %v1793
  %v1795 = vpop.f32.mrb[0].mxu0
  %v1796 = vpop.f32.mrb[0].mxu0
  %v1797 = vadd.f32 %v224, %v1796
  %v1798 = vpop.f32.mrb[0].mxu0
  %1799 = vmatprep.mubr.bf16.mxu0 0
  %1800 = vmatmul.mubr.bf16.gmra.mrb[0].mxu0 %v1013
  %v1801 = vpop.f32.mrb[0].mxu0
  %v1802 = vadd.f32 %v224, %v1801
  %v1803 = vpop.f32.mrb[0].mxu0
  %v1804 = vpop.f32.mrb[0].mxu0
  %v1805 = vadd.f32 %v224, %v1804
  %v1806 = vpop.f32.mrb[0].mxu0
  %1807 = vmatprep.mubr.bf16.mxu0 0
  %1808 = vmatmul.mubr.bf16.gmra.mrb[0].mxu0 %v1016
  %v1809 = vpop.f32.mrb[0].mxu0
  %v1810 = vadd.f32 %v224, %v1809
  %v1811 = vpop.f32.mrb[0].mxu0
  %v1812 = vpop.f32.mrb[0].mxu0
  %v1813 = vadd.f32 %v224, %v1812
  %v1814 = vpop.f32.mrb[0].mxu0
  %1815 = vmatprep.mubr.bf16.mxu0 0
  %1816 = vmatmul.mubr.bf16.gmra.mrb[0].mxu0 %v1019
  %v1817 = vpop.f32.mrb[0].mxu0
  %v1818 = vadd.f32 %v224, %v1817
  %v1819 = vpop.f32.mrb[0].mxu0
  %v1820 = vpop.f32.mrb[0].mxu0
  %v1821 = vadd.f32 %v224, %v1820
  %v1822 = vpop.f32.mrb[0].mxu0
  %1823 = vmatprep.mubr.bf16.mxu0 0
  %1824 = vmatmul.mubr.bf16.gmra.mrb[0].mxu0 %v1022
  %v1825 = vpop.f32.mrb[0].mxu0
  %v1826 = vadd.f32 %v224, %v1825
  %v1827 = vpop.f32.mrb[0].mxu0
  %v1828 = vpop.f32.mrb[0].mxu0
  %v1829 = vadd.f32 %v224, %v1828
  %v1830 = vpop.f32.mrb[0].mxu0
  %1831 = vmatprep.mubr.bf16.mxu0 0
  %1832 = vmatmul.mubr.bf16.gmra.mrb[0].mxu0 %v1025
  %v1833 = vpop.f32.mrb[0].mxu0
  %v1834 = vadd.f32 %v224, %v1833
  %v1835 = vpop.f32.mrb[0].mxu0
  %v1836 = vpop.f32.mrb[0].mxu0
  %v1837 = vadd.f32 %v224, %v1836
  %v1838 = vpop.f32.mrb[0].mxu0
  %1839 = vmatprep.mubr.bf16.mxu0 0
  %1840 = vmatmul.mubr.bf16.gmra.mrb[0].mxu0 %v1028
  %v1841 = vpop.f32.mrb[0].mxu0
  %v1842 = vadd.f32 %v224, %v1841
  %v1843 = vpop.f32.mrb[0].mxu0
  %v1844 = vpop.f32.mrb[0].mxu0
  %v1845 = vadd.f32 %v224, %v1844
  %v1846 = vpop.f32.mrb[0].mxu0
  %1847 = vmatprep.mubr.bf16.mxu0 0
  %1848 = vmatmul.mubr.bf16.gmra.mrb[0].mxu0 %v1031
  %v1849 = vpop.f32.mrb[0].mxu0
  %v1850 = vadd.f32 %v224, %v1849
  %v1851 = vpop.f32.mrb[0].mxu0
  %v1852 = vpop.f32.mrb[0].mxu0
  %v1853 = vadd.f32 %v224, %v1852
  %v1854 = vpop.f32.mrb[0].mxu0
  %1855 = vmatprep.mubr.bf16.mxu0 0
  %1856 = vmatmul.mubr.bf16.gmra.mrb[0].mxu0 %v1034
  %v1857 = vpop.f32.mrb[0].mxu0
  %v1858 = vadd.f32 %v224, %v1857
  %v1859 = vpop.f32.mrb[0].mxu0
  %v1860 = vpop.f32.mrb[0].mxu0
  %v1861 = vadd.f32 %v224, %v1860
  %v1862 = vpop.f32.mrb[0].mxu0
  %1863 = vmatprep.mubr.bf16.mxu0 0
  %1864 = vmatmul.mubr.bf16.gmra.mrb[0].mxu0 %v1037
  %v1865 = vpop.f32.mrb[0].mxu0
  %v1866 = vadd.f32 %v224, %v1865
  %v1867 = vpop.f32.mrb[0].mxu0
  %v1868 = vpop.f32.mrb[0].mxu0
  %v1869 = vadd.f32 %v224, %v1868
  %v1870 = vpop.f32.mrb[0].mxu0
  %1871 = vdwg.mxu0
  %v1872 = vmax.f32 %v1074, 0.0
  %v1873 = vmax.f32 %v1077, 0.0
  %v1874 = vmax.f32 %v1082, 0.0
  %v1875 = vmax.f32 %v1085, 0.0
  %v1876 = vmax.f32 %v1090, 0.0
  %v1877 = vmax.f32 %v1093, 0.0
  %v1878 = vmax.f32 %v1098, 0.0
  %v1879 = vmax.f32 %v1101, 0.0
  %v1880 = vmax.f32 %v1106, 0.0
  %v1881 = vmax.f32 %v1109, 0.0
  %v1882 = vmax.f32 %v1114, 0.0
  %v1883 = vmax.f32 %v1117, 0.0
  %v1884 = vmax.f32 %v1122, 0.0
  %v1885 = vmax.f32 %v1125, 0.0
  %v1886 = vmax.f32 %v1130, 0.0
  %v1887 = vmax.f32 %v1133, 0.0
  %v1888 = vmax.f32 %v1138, 0.0
  %v1889 = vmax.f32 %v1141, 0.0
  %v1890 = vmax.f32 %v1146, 0.0
  %v1891 = vmax.f32 %v1149, 0.0
  %v1892 = vmax.f32 %v1154, 0.0
  %v1893 = vmax.f32 %v1157, 0.0
  %v1894 = vmax.f32 %v1162, 0.0
  %v1895 = vmax.f32 %v1165, 0.0
  %v1896 = vmax.f32 %v1170, 0.0
  %v1897 = vmax.f32 %v1173, 0.0
  %v1898 = vmax.f32 %v1178, 0.0
  %v1899 = vmax.f32 %v1181, 0.0
  %v1900 = vmax.f32 %v1186, 0.0
  %v1901 = vmax.f32 %v1189, 0.0
  %v1902 = vmax.f32 %v1194, 0.0
  %v1903 = vmax.f32 %v1197, 0.0
  %v1904 = vmax.f32 %v1202, 0.0
  %v1905 = vmax.f32 %v1205, 0.0
  %v1906 = vmax.f32 %v1210, 0.0
  %v1907 = vmax.f32 %v1213, 0.0
  %v1908 = vmax.f32 %v1218, 0.0
  %v1909 = vmax.f32 %v1221, 0.0
  %v1910 = vmax.f32 %v1226, 0.0
  %v1911 = vmax.f32 %v1229, 0.0
  %v1912 = vmax.f32 %v1234, 0.0
  %v1913 = vmax.f32 %v1237, 0.0
  %v1914 = vmax.f32 %v1242, 0.0
  %v1915 = vmax.f32 %v1245, 0.0
  %v1916 = vmax.f32 %v1250, 0.0
  %v1917 = vmax.f32 %v1253, 0.0
  %v1918 = vmax.f32 %v1258, 0.0
  %v1919 = vmax.f32 %v1261, 0.0
  %v1920 = vmax.f32 %v1266, 0.0
  %v1921 = vmax.f32 %v1269, 0.0
  %v1922 = vmax.f32 %v1274, 0.0
  %v1923 = vmax.f32 %v1277, 0.0
  %v1924 = vmax.f32 %v1282, 0.0
  %v1925 = vmax.f32 %v1285, 0.0
  %v1926 = vmax.f32 %v1290, 0.0
  %v1927 = vmax.f32 %v1293, 0.0
  %v1928 = vmax.f32 %v1298, 0.0
  %v1929 = vmax.f32 %v1301, 0.0
  %v1930 = vmax.f32 %v1306, 0.0
  %v1931 = vmax.f32 %v1309, 0.0
  %v1932 = vmax.f32 %v1314, 0.0
  %v1933 = vmax.f32 %v1317, 0.0
  %v1934 = vmax.f32 %v1322, 0.0
  %v1935 = vmax.f32 %v1325, 0.0
  %v1936 = vmax.f32 %v1330, 0.0
  %v1937 = vmax.f32 %v1333, 0.0
  %v1938 = vmax.f32 %v1338, 0.0
  %v1939 = vmax.f32 %v1341, 0.0
  %v1940 = vmax.f32 %v1346, 0.0
  %v1941 = vmax.f32 %v1349, 0.0
  %v1942 = vmax.f32 %v1354, 0.0
  %v1943 = vmax.f32 %v1357, 0.0
  %v1944 = vmax.f32 %v1362, 0.0
  %v1945 = vmax.f32 %v1365, 0.0
  %v1946 = vmax.f32 %v1370, 0.0
  %v1947 = vmax.f32 %v1373, 0.0
  %v1948 = vmax.f32 %v1378, 0.0
  %v1949 = vmax.f32 %v1381, 0.0
  %v1950 = vmax.f32 %v1386, 0.0
  %v1951 = vmax.f32 %v1389, 0.0
  %v1952 = vmax.f32 %v1394, 0.0
  %v1953 = vmax.f32 %v1397, 0.0
  %v1954 = vmax.f32 %v1402, 0.0
  %v1955 = vmax.f32 %v1405, 0.0
  %v1956 = vmax.f32 %v1410, 0.0
  %v1957 = vmax.f32 %v1413, 0.0
  %v1958 = vmax.f32 %v1418, 0.0
  %v1959 = vmax.f32 %v1421, 0.0
  %v1960 = vmax.f32 %v1426, 0.0
  %v1961 = vmax.f32 %v1429, 0.0
  %v1962 = vmax.f32 %v1434, 0.0
  %v1963 = vmax.f32 %v1437, 0.0
  %v1964 = vmax.f32 %v1442, 0.0
  %v1965 = vmax.f32 %v1445, 0.0
  %v1966 = vmax.f32 %v1450, 0.0
  %v1967 = vmax.f32 %v1453, 0.0
  %v1968 = vmax.f32 %v1458, 0.0
  %v1969 = vmax.f32 %v1461, 0.0
  %v1970 = vmax.f32 %v1466, 0.0
  %v1971 = vmax.f32 %v1469, 0.0
  %v1972 = vmax.f32 %v1474, 0.0
  %v1973 = vmax.f32 %v1477, 0.0
  %v1974 = vmax.f32 %v1482, 0.0
  %v1975 = vmax.f32 %v1485, 0.0
  %v1976 = vmax.f32 %v1490, 0.0
  %v1977 = vmax.f32 %v1493, 0.0
  %v1978 = vmax.f32 %v1498, 0.0
  %v1979 = vmax.f32 %v1501, 0.0
  %v1980 = vmax.f32 %v1506, 0.0
  %v1981 = vmax.f32 %v1509, 0.0
  %v1982 = vmax.f32 %v1514, 0.0
  %v1983 = vmax.f32 %v1517, 0.0
  %v1984 = vmax.f32 %v1522, 0.0
  %v1985 = vmax.f32 %v1525, 0.0
  %v1986 = vmax.f32 %v1530, 0.0
  %v1987 = vmax.f32 %v1533, 0.0
  %v1988 = vmax.f32 %v1538, 0.0
  %v1989 = vmax.f32 %v1541, 0.0
  %v1990 = vmax.f32 %v1546, 0.0
  %v1991 = vmax.f32 %v1549, 0.0
  %v1992 = vmax.f32 %v1554, 0.0
  %v1993 = vmax.f32 %v1557, 0.0
  %v1994 = vmax.f32 %v1562, 0.0
  %v1995 = vmax.f32 %v1565, 0.0
  %v1996 = vmax.f32 %v1570, 0.0
  %v1997 = vmax.f32 %v1573, 0.0
  %v1998 = vmax.f32 %v1578, 0.0
  %v1999 = vmax.f32 %v1581, 0.0
  %v2000 = vmax.f32 %v1586, 0.0
  %v2001 = vmax.f32 %v1589, 0.0
  %v2002 = vmax.f32 %v1594, 0.0
  %v2003 = vmax.f32 %v1597, 0.0
  %v2004 = vmax.f32 %v1602, 0.0
  %v2005 = vmax.f32 %v1605, 0.0
  %v2006 = vmax.f32 %v1610, 0.0
  %v2007 = vmax.f32 %v1613, 0.0
  %v2008 = vmax.f32 %v1618, 0.0
  %v2009 = vmax.f32 %v1621, 0.0
  %v2010 = vmax.f32 %v1626, 0.0
  %v2011 = vmax.f32 %v1629, 0.0
  %v2012 = vmax.f32 %v1634, 0.0
  %v2013 = vmax.f32 %v1637, 0.0
  %v2014 = vmax.f32 %v1642, 0.0
  %v2015 = vmax.f32 %v1645, 0.0
  %v2016 = vmax.f32 %v1650, 0.0
  %v2017 = vmax.f32 %v1653, 0.0
  %v2018 = vmax.f32 %v1658, 0.0
  %v2019 = vmax.f32 %v1661, 0.0
  %v2020 = vmax.f32 %v1666, 0.0
  %v2021 = vmax.f32 %v1669, 0.0
  %v2022 = vmax.f32 %v1674, 0.0
  %v2023 = vmax.f32 %v1677, 0.0
  %v2024 = vmax.f32 %v1682, 0.0
  %v2025 = vmax.f32 %v1685, 0.0
  %v2026 = vmax.f32 %v1690, 0.0
  %v2027 = vmax.f32 %v1693, 0.0
  %v2028 = vmax.f32 %v1698, 0.0
  %v2029 = vmax.f32 %v1701, 0.0
  %v2030 = vmax.f32 %v1706, 0.0
  %v2031 = vmax.f32 %v1709, 0.0
  %v2032 = vmax.f32 %v1714, 0.0
  %v2033 = vmax.f32 %v1717, 0.0
  %v2034 = vmax.f32 %v1722, 0.0
  %v2035 = vmax.f32 %v1725, 0.0
  %v2036 = vmax.f32 %v1730, 0.0
  %v2037 = vmax.f32 %v1733, 0.0
  %v2038 = vmax.f32 %v1738, 0.0
  %v2039 = vmax.f32 %v1741, 0.0
  %v2040 = vmax.f32 %v1746, 0.0
  %v2041 = vmax.f32 %v1749, 0.0
  %v2042 = vmax.f32 %v1754, 0.0
  %v2043 = vmax.f32 %v1757, 0.0
  %v2044 = vmax.f32 %v1762, 0.0
  %v2045 = vmax.f32 %v1765, 0.0
  %v2046 = vmax.f32 %v1770, 0.0
  %v2047 = vmax.f32 %v1773, 0.0
  %v2048 = vmax.f32 %v1778, 0.0
  %v2049 = vmax.f32 %v1781, 0.0
  %v2050 = vmax.f32 %v1786, 0.0
  %v2051 = vmax.f32 %v1789, 0.0
  %v2052 = vmax.f32 %v1794, 0.0
  %v2053 = vmax.f32 %v1797, 0.0
  %v2054 = vmax.f32 %v1802, 0.0
  %v2055 = vmax.f32 %v1805, 0.0
  %v2056 = vmax.f32 %v1810, 0.0
  %v2057 = vmax.f32 %v1813, 0.0
  %v2058 = vmax.f32 %v1818, 0.0
  %v2059 = vmax.f32 %v1821, 0.0
  %v2060 = vmax.f32 %v1826, 0.0
  %v2061 = vmax.f32 %v1829, 0.0
  %v2062 = vmax.f32 %v1834, 0.0
  %v2063 = vmax.f32 %v1837, 0.0
  %v2064 = vmax.f32 %v1842, 0.0
  %v2065 = vmax.f32 %v1845, 0.0
  %v2066 = vmax.f32 %v1850, 0.0
  %v2067 = vmax.f32 %v1853, 0.0
  %v2068 = vmax.f32 %v1858, 0.0
  %v2069 = vmax.f32 %v1861, 0.0
  %v2070 = vmax.f32 %v1866, 0.0
  %v2071 = vmax.f32 %v1869, 0.0
  %v2072 = vmin.f32 %v1872, 1.0
  %v2073 = vmin.f32 %v1873, 1.0
  %v2074 = vmin.f32 %v1874, 1.0
  %v2075 = vmin.f32 %v1875, 1.0
  %v2076 = vmin.f32 %v1876, 1.0
  %v2077 = vmin.f32 %v1877, 1.0
  %v2078 = vmin.f32 %v1878, 1.0
  %v2079 = vmin.f32 %v1879, 1.0
  %v2080 = vmin.f32 %v1880, 1.0
  %v2081 = vmin.f32 %v1881, 1.0
  %v2082 = vmin.f32 %v1882, 1.0
  %v2083 = vmin.f32 %v1883, 1.0
  %v2084 = vmin.f32 %v1884, 1.0
  %v2085 = vmin.f32 %v1885, 1.0
  %v2086 = vmin.f32 %v1886, 1.0
  %v2087 = vmin.f32 %v1887, 1.0
  %v2088 = vmin.f32 %v1888, 1.0
  %v2089 = vmin.f32 %v1889, 1.0
  %v2090 = vmin.f32 %v1890, 1.0
  %v2091 = vmin.f32 %v1891, 1.0
  %v2092 = vmin.f32 %v1892, 1.0
  %v2093 = vmin.f32 %v1893, 1.0
  %v2094 = vmin.f32 %v1894, 1.0
  %v2095 = vmin.f32 %v1895, 1.0
  %v2096 = vmin.f32 %v1896, 1.0
  %v2097 = vmin.f32 %v1897, 1.0
  %v2098 = vmin.f32 %v1898, 1.0
  %v2099 = vmin.f32 %v1899, 1.0
  %v2100 = vmin.f32 %v1900, 1.0
  %v2101 = vmin.f32 %v1901, 1.0
  %v2102 = vmin.f32 %v1902, 1.0
  %v2103 = vmin.f32 %v1903, 1.0
  %v2104 = vmin.f32 %v1904, 1.0
  %v2105 = vmin.f32 %v1905, 1.0
  %v2106 = vmin.f32 %v1906, 1.0
  %v2107 = vmin.f32 %v1907, 1.0
  %v2108 = vmin.f32 %v1908, 1.0
  %v2109 = vmin.f32 %v1909, 1.0
  %v2110 = vmin.f32 %v1910, 1.0
  %v2111 = vmin.f32 %v1911, 1.0
  %v2112 = vmin.f32 %v1912, 1.0
  %v2113 = vmin.f32 %v1913, 1.0
  %v2114 = vmin.f32 %v1914, 1.0
  %v2115 = vmin.f32 %v1915, 1.0
  %v2116 = vmin.f32 %v1916, 1.0
  %v2117 = vmin.f32 %v1917, 1.0
  %v2118 = vmin.f32 %v1918, 1.0
  %v2119 = vmin.f32 %v1919, 1.0
  %v2120 = vmin.f32 %v1920, 1.0
  %v2121 = vmin.f32 %v1921, 1.0
  %v2122 = vmin.f32 %v1922, 1.0
  %v2123 = vmin.f32 %v1923, 1.0
  %v2124 = vmin.f32 %v1924, 1.0
  %v2125 = vmin.f32 %v1925, 1.0
  %v2126 = vmin.f32 %v1926, 1.0
  %v2127 = vmin.f32 %v1927, 1.0
  %v2128 = vmin.f32 %v1928, 1.0
  %v2129 = vmin.f32 %v1929, 1.0
  %v2130 = vmin.f32 %v1930, 1.0
  %v2131 = vmin.f32 %v1931, 1.0
  %v2132 = vmin.f32 %v1932, 1.0
  %v2133 = vmin.f32 %v1933, 1.0
  %v2134 = vmin.f32 %v1934, 1.0
  %v2135 = vmin.f32 %v1935, 1.0
  %v2136 = vmin.f32 %v1936, 1.0
  %v2137 = vmin.f32 %v1937, 1.0
  %v2138 = vmin.f32 %v1938, 1.0
  %v2139 = vmin.f32 %v1939, 1.0
  %v2140 = vmin.f32 %v1940, 1.0
  %v2141 = vmin.f32 %v1941, 1.0
  %v2142 = vmin.f32 %v1942, 1.0
  %v2143 = vmin.f32 %v1943, 1.0
  %v2144 = vmin.f32 %v1944, 1.0
  %v2145 = vmin.f32 %v1945, 1.0
  %v2146 = vmin.f32 %v1946, 1.0
  %v2147 = vmin.f32 %v1947, 1.0
  %v2148 = vmin.f32 %v1948, 1.0
  %v2149 = vmin.f32 %v1949, 1.0
  %v2150 = vmin.f32 %v1950, 1.0
  %v2151 = vmin.f32 %v1951, 1.0
  %v2152 = vmin.f32 %v1952, 1.0
  %v2153 = vmin.f32 %v1953, 1.0
  %v2154 = vmin.f32 %v1954, 1.0
  %v2155 = vmin.f32 %v1955, 1.0
  %v2156 = vmin.f32 %v1956, 1.0
  %v2157 = vmin.f32 %v1957, 1.0
  %v2158 = vmin.f32 %v1958, 1.0
  %v2159 = vmin.f32 %v1959, 1.0
  %v2160 = vmin.f32 %v1960, 1.0
  %v2161 = vmin.f32 %v1961, 1.0
  %v2162 = vmin.f32 %v1962, 1.0
  %v2163 = vmin.f32 %v1963, 1.0
  %v2164 = vmin.f32 %v1964, 1.0
  %v2165 = vmin.f32 %v1965, 1.0
  %v2166 = vmin.f32 %v1966, 1.0
  %v2167 = vmin.f32 %v1967, 1.0
  %v2168 = vmin.f32 %v1968, 1.0
  %v2169 = vmin.f32 %v1969, 1.0
  %v2170 = vmin.f32 %v1970, 1.0
  %v2171 = vmin.f32 %v1971, 1.0
  %v2172 = vmin.f32 %v1972, 1.0
  %v2173 = vmin.f32 %v1973, 1.0
  %v2174 = vmin.f32 %v1974, 1.0
  %v2175 = vmin.f32 %v1975, 1.0
  %v2176 = vmin.f32 %v1976, 1.0
  %v2177 = vmin.f32 %v1977, 1.0
  %v2178 = vmin.f32 %v1978, 1.0
  %v2179 = vmin.f32 %v1979, 1.0
  %v2180 = vmin.f32 %v1980, 1.0
  %v2181 = vmin.f32 %v1981, 1.0
  %v2182 = vmin.f32 %v1982, 1.0
  %v2183 = vmin.f32 %v1983, 1.0
  %v2184 = vmin.f32 %v1984, 1.0
  %v2185 = vmin.f32 %v1985, 1.0
  %v2186 = vmin.f32 %v1986, 1.0
  %v2187 = vmin.f32 %v1987, 1.0
  %v2188 = vmin.f32 %v1988, 1.0
  %v2189 = vmin.f32 %v1989, 1.0
  %v2190 = vmin.f32 %v1990, 1.0
  %v2191 = vmin.f32 %v1991, 1.0
  %v2192 = vmin.f32 %v1992, 1.0
  %v2193 = vmin.f32 %v1993, 1.0
  %v2194 = vmin.f32 %v1994, 1.0
  %v2195 = vmin.f32 %v1995, 1.0
  %v2196 = vmin.f32 %v1996, 1.0
  %v2197 = vmin.f32 %v1997, 1.0
  %v2198 = vmin.f32 %v1998, 1.0
  %v2199 = vmin.f32 %v1999, 1.0
  %v2200 = vmin.f32 %v2000, 1.0
  %v2201 = vmin.f32 %v2001, 1.0
  %v2202 = vmin.f32 %v2002, 1.0
  %v2203 = vmin.f32 %v2003, 1.0
  %v2204 = vmin.f32 %v2004, 1.0
  %v2205 = vmin.f32 %v2005, 1.0
  %v2206 = vmin.f32 %v2006, 1.0
  %v2207 = vmin.f32 %v2007, 1.0
  %v2208 = vmin.f32 %v2008, 1.0
  %v2209 = vmin.f32 %v2009, 1.0
  %v2210 = vmin.f32 %v2010, 1.0
  %v2211 = vmin.f32 %v2011, 1.0
  %v2212 = vmin.f32 %v2012, 1.0
  %v2213 = vmin.f32 %v2013, 1.0
  %v2214 = vmin.f32 %v2014, 1.0
  %v2215 = vmin.f32 %v2015, 1.0
  %v2216 = vmin.f32 %v2016, 1.0
  %v2217 = vmin.f32 %v2017, 1.0
  %v2218 = vmin.f32 %v2018, 1.0
  %v2219 = vmin.f32 %v2019, 1.0
  %v2220 = vmin.f32 %v2020, 1.0
  %v2221 = vmin.f32 %v2021, 1.0
  %v2222 = vmin.f32 %v2022, 1.0
  %v2223 = vmin.f32 %v2023, 1.0
  %v2224 = vmin.f32 %v2024, 1.0
  %v2225 = vmin.f32 %v2025, 1.0
  %v2226 = vmin.f32 %v2026, 1.0
  %v2227 = vmin.f32 %v2027, 1.0
  %v2228 = vmin.f32 %v2028, 1.0
  %v2229 = vmin.f32 %v2029, 1.0
  %v2230 = vmin.f32 %v2030, 1.0
  %v2231 = vmin.f32 %v2031, 1.0
  %v2232 = vmin.f32 %v2032, 1.0
  %v2233 = vmin.f32 %v2033, 1.0
  %v2234 = vmin.f32 %v2034, 1.0
  %v2235 = vmin.f32 %v2035, 1.0
  %v2236 = vmin.f32 %v2036, 1.0
  %v2237 = vmin.f32 %v2037, 1.0
  %v2238 = vmin.f32 %v2038, 1.0
  %v2239 = vmin.f32 %v2039, 1.0
  %v2240 = vmin.f32 %v2040, 1.0
  %v2241 = vmin.f32 %v2041, 1.0
  %v2242 = vmin.f32 %v2042, 1.0
  %v2243 = vmin.f32 %v2043, 1.0
  %v2244 = vmin.f32 %v2044, 1.0
  %v2245 = vmin.f32 %v2045, 1.0
  %v2246 = vmin.f32 %v2046, 1.0
  %v2247 = vmin.f32 %v2047, 1.0
  %v2248 = vmin.f32 %v2048, 1.0
  %v2249 = vmin.f32 %v2049, 1.0
  %v2250 = vmin.f32 %v2050, 1.0
  %v2251 = vmin.f32 %v2051, 1.0
  %v2252 = vmin.f32 %v2052, 1.0
  %v2253 = vmin.f32 %v2053, 1.0
  %v2254 = vmin.f32 %v2054, 1.0
  %v2255 = vmin.f32 %v2055, 1.0
  %v2256 = vmin.f32 %v2056, 1.0
  %v2257 = vmin.f32 %v2057, 1.0
  %v2258 = vmin.f32 %v2058, 1.0
  %v2259 = vmin.f32 %v2059, 1.0
  %v2260 = vmin.f32 %v2060, 1.0
  %v2261 = vmin.f32 %v2061, 1.0
  %v2262 = vmin.f32 %v2062, 1.0
  %v2263 = vmin.f32 %v2063, 1.0
  %v2264 = vmin.f32 %v2064, 1.0
  %v2265 = vmin.f32 %v2065, 1.0
  %v2266 = vmin.f32 %v2066, 1.0
  %v2267 = vmin.f32 %v2067, 1.0
  %v2268 = vmin.f32 %v2068, 1.0
  %v2269 = vmin.f32 %v2069, 1.0
  %v2270 = vmin.f32 %v2070, 1.0
  %v2271 = vmin.f32 %v2071, 1.0
  %v2272 = vadd.f32 %v2072, %v2122
  %v2273 = vadd.f32 %v2073, %v2123
  %v2274 = vadd.f32 %v2074, %v2124
  %v2275 = vadd.f32 %v2075, %v2125
  %v2276 = vadd.f32 %v2076, %v2126
  %v2277 = vadd.f32 %v2077, %v2127
  %v2278 = vadd.f32 %v2078, %v2128
  %v2279 = vadd.f32 %v2079, %v2129
  %v2280 = vadd.f32 %v2080, %v2130
  %v2281 = vadd.f32 %v2081, %v2131
  %v2282 = vadd.f32 %v2082, %v2132
  %v2283 = vadd.f32 %v2083, %v2133
  %v2284 = vadd.f32 %v2084, %v2134
  %v2285 = vadd.f32 %v2085, %v2135
  %v2286 = vadd.f32 %v2086, %v2136
  %v2287 = vadd.f32 %v2087, %v2137
  %v2288 = vadd.f32 %v2088, %v2138
  %v2289 = vadd.f32 %v2089, %v2139
  %v2290 = vadd.f32 %v2090, %v2140
  %v2291 = vadd.f32 %v2091, %v2141
  %v2292 = vadd.f32 %v2092, %v2142
  %v2293 = vadd.f32 %v2093, %v2143
  %v2294 = vadd.f32 %v2094, %v2144
  %v2295 = vadd.f32 %v2095, %v2145
  %v2296 = vadd.f32 %v2096, %v2146
  %v2297 = vadd.f32 %v2097, %v2147
  %v2298 = vadd.f32 %v2098, %v2148
  %v2299 = vadd.f32 %v2099, %v2149
  %v2300 = vadd.f32 %v2100, %v2150
  %v2301 = vadd.f32 %v2101, %v2151
  %v2302 = vadd.f32 %v2102, %v2152
  %v2303 = vadd.f32 %v2103, %v2153
  %v2304 = vadd.f32 %v2104, %v2154
  %v2305 = vadd.f32 %v2105, %v2155
  %v2306 = vadd.f32 %v2106, %v2156
  %v2307 = vadd.f32 %v2107, %v2157
  %v2308 = vadd.f32 %v2108, %v2158
  %v2309 = vadd.f32 %v2109, %v2159
  %v2310 = vadd.f32 %v2110, %v2160
  %v2311 = vadd.f32 %v2111, %v2161
  %v2312 = vadd.f32 %v2112, %v2162
  %v2313 = vadd.f32 %v2113, %v2163
  %v2314 = vadd.f32 %v2114, %v2164
  %v2315 = vadd.f32 %v2115, %v2165
  %v2316 = vadd.f32 %v2116, %v2166
  %v2317 = vadd.f32 %v2117, %v2167
  %v2318 = vadd.f32 %v2118, %v2168
  %v2319 = vadd.f32 %v2119, %v2169
  %v2320 = vadd.f32 %v2120, %v2170
  %v2321 = vadd.f32 %v2121, %v2171
  %v2322 = vadd.f32 %v2272, %v2172
  %v2323 = vadd.f32 %v2273, %v2173
  %v2324 = vadd.f32 %v2274, %v2174
  %v2325 = vadd.f32 %v2275, %v2175
  %v2326 = vadd.f32 %v2276, %v2176
  %v2327 = vadd.f32 %v2277, %v2177
  %v2328 = vadd.f32 %v2278, %v2178
  %v2329 = vadd.f32 %v2279, %v2179
  %v2330 = vadd.f32 %v2280, %v2180
  %v2331 = vadd.f32 %v2281, %v2181
  %v2332 = vadd.f32 %v2282, %v2182
  %v2333 = vadd.f32 %v2283, %v2183
  %v2334 = vadd.f32 %v2284, %v2184
  %v2335 = vadd.f32 %v2285, %v2185
  %v2336 = vadd.f32 %v2286, %v2186
  %v2337 = vadd.f32 %v2287, %v2187
  %v2338 = vadd.f32 %v2288, %v2188
  %v2339 = vadd.f32 %v2289, %v2189
  %v2340 = vadd.f32 %v2290, %v2190
  %v2341 = vadd.f32 %v2291, %v2191
  %v2342 = vadd.f32 %v2292, %v2192
  %v2343 = vadd.f32 %v2293, %v2193
  %v2344 = vadd.f32 %v2294, %v2194
  %v2345 = vadd.f32 %v2295, %v2195
  %v2346 = vadd.f32 %v2296, %v2196
  %v2347 = vadd.f32 %v2297, %v2197
  %v2348 = vadd.f32 %v2298, %v2198
  %v2349 = vadd.f32 %v2299, %v2199
  %v2350 = vadd.f32 %v2300, %v2200
  %v2351 = vadd.f32 %v2301, %v2201
  %v2352 = vadd.f32 %v2302, %v2202
  %v2353 = vadd.f32 %v2303, %v2203
  %v2354 = vadd.f32 %v2304, %v2204
  %v2355 = vadd.f32 %v2305, %v2205
  %v2356 = vadd.f32 %v2306, %v2206
  %v2357 = vadd.f32 %v2307, %v2207
  %v2358 = vadd.f32 %v2308, %v2208
  %v2359 = vadd.f32 %v2309, %v2209
  %v2360 = vadd.f32 %v2310, %v2210
  %v2361 = vadd.f32 %v2311, %v2211
  %v2362 = vadd.f32 %v2312, %v2212
  %v2363 = vadd.f32 %v2313, %v2213
  %v2364 = vadd.f32 %v2314, %v2214
  %v2365 = vadd.f32 %v2315, %v2215
  %v2366 = vadd.f32 %v2316, %v2216
  %v2367 = vadd.f32 %v2317, %v2217
  %v2368 = vadd.f32 %v2318, %v2218
  %v2369 = vadd.f32 %v2319, %v2219
  %v2370 = vadd.f32 %v2320, %v2220
  %v2371 = vadd.f32 %v2321, %v2221
  %v2372 = vadd.f32 %v2322, %v2222
  %v2373 = vadd.f32 %v2323, %v2223
  %v2374 = vadd.f32 %v2324, %v2224
  %v2375 = vadd.f32 %v2325, %v2225
  %v2376 = vadd.f32 %v2326, %v2226
  %v2377 = vadd.f32 %v2327, %v2227
  %v2378 = vadd.f32 %v2328, %v2228
  %v2379 = vadd.f32 %v2329, %v2229
  %v2380 = vadd.f32 %v2330, %v2230
  %v2381 = vadd.f32 %v2331, %v2231
  %v2382 = vadd.f32 %v2332, %v2232
  %v2383 = vadd.f32 %v2333, %v2233
  %v2384 = vadd.f32 %v2334, %v2234
  %v2385 = vadd.f32 %v2335, %v2235
  %v2386 = vadd.f32 %v2336, %v2236
  %v2387 = vadd.f32 %v2337, %v2237
  %v2388 = vadd.f32 %v2338, %v2238
  %v2389 = vadd.f32 %v2339, %v2239
  %v2390 = vadd.f32 %v2340, %v2240
  %v2391 = vadd.f32 %v2341, %v2241
  %v2392 = vadd.f32 %v2342, %v2242
  %v2393 = vadd.f32 %v2343, %v2243
  %v2394 = vadd.f32 %v2344, %v2244
  %v2395 = vadd.f32 %v2345, %v2245
  %v2396 = vadd.f32 %v2346, %v2246
  %v2397 = vadd.f32 %v2347, %v2247
  %v2398 = vadd.f32 %v2348, %v2248
  %v2399 = vadd.f32 %v2349, %v2249
  %v2400 = vadd.f32 %v2350, %v2250
  %v2401 = vadd.f32 %v2351, %v2251
  %v2402 = vadd.f32 %v2352, %v2252
  %v2403 = vadd.f32 %v2353, %v2253
  %v2404 = vadd.f32 %v2354, %v2254
  %v2405 = vadd.f32 %v2355, %v2255
  %v2406 = vadd.f32 %v2356, %v2256
  %v2407 = vadd.f32 %v2357, %v2257
  %v2408 = vadd.f32 %v2358, %v2258
  %v2409 = vadd.f32 %v2359, %v2259
  %v2410 = vadd.f32 %v2360, %v2260
  %v2411 = vadd.f32 %v2361, %v2261
  %v2412 = vadd.f32 %v2362, %v2262
  %v2413 = vadd.f32 %v2363, %v2263
  %v2414 = vadd.f32 %v2364, %v2264
  %v2415 = vadd.f32 %v2365, %v2265
  %v2416 = vadd.f32 %v2366, %v2266
  %v2417 = vadd.f32 %v2367, %v2267
  %v2418 = vadd.f32 %v2368, %v2268
  %v2419 = vadd.f32 %v2369, %v2269
  %v2420 = vadd.f32 %v2370, %v2270
  %v2421 = vadd.f32 %v2371, %v2271
  %v2422 = vmul.f32 %v2372, 0.25
  %v2423 = vmul.f32 %v2373, 0.25
  %v2424 = vmul.f32 %v2374, 0.25
  %v2425 = vmul.f32 %v2375, 0.25
  %v2426 = vmul.f32 %v2376, 0.25
  %v2427 = vmul.f32 %v2377, 0.25
  %v2428 = vmul.f32 %v2378, 0.25
  %v2429 = vmul.f32 %v2379, 0.25
  %v2430 = vmul.f32 %v2380, 0.25
  %v2431 = vmul.f32 %v2381, 0.25
  %v2432 = vmul.f32 %v2382, 0.25
  %v2433 = vmul.f32 %v2383, 0.25
  %v2434 = vmul.f32 %v2384, 0.25
  %v2435 = vmul.f32 %v2385, 0.25
  %v2436 = vmul.f32 %v2386, 0.25
  %v2437 = vmul.f32 %v2387, 0.25
  %v2438 = vmul.f32 %v2388, 0.25
  %v2439 = vmul.f32 %v2389, 0.25
  %v2440 = vmul.f32 %v2390, 0.25
  %v2441 = vmul.f32 %v2391, 0.25
  %v2442 = vmul.f32 %v2392, 0.25
  %v2443 = vmul.f32 %v2393, 0.25
  %v2444 = vmul.f32 %v2394, 0.25
  %v2445 = vmul.f32 %v2395, 0.25
  %v2446 = vmul.f32 %v2396, 0.25
  %v2447 = vmul.f32 %v2397, 0.25
  %v2448 = vmul.f32 %v2398, 0.25
  %v2449 = vmul.f32 %v2399, 0.25
  %v2450 = vmul.f32 %v2400, 0.25
  %v2451 = vmul.f32 %v2401, 0.25
  %v2452 = vmul.f32 %v2402, 0.25
  %v2453 = vmul.f32 %v2403, 0.25
  %v2454 = vmul.f32 %v2404, 0.25
  %v2455 = vmul.f32 %v2405, 0.25
  %v2456 = vmul.f32 %v2406, 0.25
  %v2457 = vmul.f32 %v2407, 0.25
  %v2458 = vmul.f32 %v2408, 0.25
  %v2459 = vmul.f32 %v2409, 0.25
  %v2460 = vmul.f32 %v2410, 0.25
  %v2461 = vmul.f32 %v2411, 0.25
  %v2462 = vmul.f32 %v2412, 0.25
  %v2463 = vmul.f32 %v2413, 0.25
  %v2464 = vmul.f32 %v2414, 0.25
  %v2465 = vmul.f32 %v2415, 0.25
  %v2466 = vmul.f32 %v2416, 0.25
  %v2467 = vmul.f32 %v2417, 0.25
  %v2468 = vmul.f32 %v2418, 0.25
  %v2469 = vmul.f32 %v2419, 0.25
  %v2470 = vmul.f32 %v2420, 0.25
  %v2471 = vmul.f32 %v2421, 0.25
  %v2472 = vpack.c.bf16 %v2423, %v2422
  %v2473 = vpack.c.bf16 %v2425, %v2424
  %v2474 = vpack.c.bf16 %v2427, %v2426
  %v2475 = vpack.c.bf16 %v2429, %v2428
  %v2476 = vpack.c.bf16 %v2431, %v2430
  %v2477 = vpack.c.bf16 %v2433, %v2432
  %v2478 = vpack.c.bf16 %v2435, %v2434
  %v2479 = vpack.c.bf16 %v2437, %v2436
  %v2480 = vpack.c.bf16 %v2439, %v2438
  %v2481 = vpack.c.bf16 %v2441, %v2440
  %v2482 = vpack.c.bf16 %v2443, %v2442
  %v2483 = vpack.c.bf16 %v2445, %v2444
  %v2484 = vpack.c.bf16 %v2447, %v2446
  %v2485 = vpack.c.bf16 %v2449, %v2448
  %v2486 = vpack.c.bf16 %v2451, %v2450
  %v2487 = vpack.c.bf16 %v2453, %v2452
  %v2488 = vpack.c.bf16 %v2455, %v2454
  %v2489 = vpack.c.bf16 %v2457, %v2456
  %v2490 = vpack.c.bf16 %v2459, %v2458
  %v2491 = vpack.c.bf16 %v2461, %v2460
  %v2492 = vpack.c.bf16 %v2463, %v2462
  %v2493 = vpack.c.bf16 %v2465, %v2464
  %v2494 = vpack.c.bf16 %v2467, %v2466
  %v2495 = vpack.c.bf16 %v2469, %v2468
  %v2496 = vpack.c.bf16 %v2471, %v2470
  %v2522 = vunpack.c.l.b16 %v2472
  %v2523 = vunpack.c.h.b16 %v2472
  %v2524 = vunpack.c.l.b16 %v2473
  %v2525 = vunpack.c.h.b16 %v2473
  %v2526 = vunpack.c.l.b16 %v2474
  %v2527 = vunpack.c.h.b16 %v2474
  %v2528 = vunpack.c.l.b16 %v2475
  %v2529 = vunpack.c.h.b16 %v2475
  %v2530 = vunpack.c.l.b16 %v2476
  %v2531 = vunpack.c.h.b16 %v2476
  %v2532 = vunpack.c.l.b16 %v2477
  %v2533 = vunpack.c.h.b16 %v2477
  %v2534 = vunpack.c.l.b16 %v2478
  %v2535 = vunpack.c.h.b16 %v2478
  %v2536 = vunpack.c.l.b16 %v2479
  %v2537 = vunpack.c.h.b16 %v2479
  %v2538 = vunpack.c.l.b16 %v2480
  %v2539 = vunpack.c.h.b16 %v2480
  %v2540 = vunpack.c.l.b16 %v2481
  %v2541 = vunpack.c.h.b16 %v2481
  %v2542 = vunpack.c.l.b16 %v2482
  %v2543 = vunpack.c.h.b16 %v2482
  %v2544 = vunpack.c.l.b16 %v2483
  %v2545 = vunpack.c.h.b16 %v2483
  %v2546 = vunpack.c.l.b16 %v2484
  %v2547 = vunpack.c.h.b16 %v2484
  %v2548 = vunpack.c.l.b16 %v2485
  %v2549 = vunpack.c.h.b16 %v2485
  %v2550 = vunpack.c.l.b16 %v2486
  %v2551 = vunpack.c.h.b16 %v2486
  %v2552 = vunpack.c.l.b16 %v2487
  %v2553 = vunpack.c.h.b16 %v2487
  %v2554 = vunpack.c.l.b16 %v2488
  %v2555 = vunpack.c.h.b16 %v2488
  %v2556 = vunpack.c.l.b16 %v2489
  %v2557 = vunpack.c.h.b16 %v2489
  %v2558 = vunpack.c.l.b16 %v2490
  %v2559 = vunpack.c.h.b16 %v2490
  %v2560 = vunpack.c.l.b16 %v2491
  %v2561 = vunpack.c.h.b16 %v2491
  %v2562 = vunpack.c.l.b16 %v2492
  %v2563 = vunpack.c.h.b16 %v2492
  %v2564 = vunpack.c.l.b16 %v2493
  %v2565 = vunpack.c.h.b16 %v2493
  %v2566 = vunpack.c.l.b16 %v2494
  %v2567 = vunpack.c.h.b16 %v2494
  %v2568 = vunpack.c.l.b16 %v2495
  %v2569 = vunpack.c.h.b16 %v2495
  %v2570 = vunpack.c.l.b16 %v2496
  %v2571 = vunpack.c.h.b16 %v2496
  %v2572 = vpack.c.b16 %v2522, %v2522
  %v2573 = vpack.c.b16 %v2523, %v2523
  %v2574 = vpack.c.b16 %v2524, %v2524
  %v2575 = vpack.c.b16 %v2525, %v2525
  %v2576 = vpack.c.b16 %v2526, %v2526
  %v2577 = vpack.c.b16 %v2527, %v2527
  %v2578 = vpack.c.b16 %v2528, %v2528
  %v2579 = vpack.c.b16 %v2529, %v2529
  %v2580 = vpack.c.b16 %v2530, %v2530
  %v2581 = vpack.c.b16 %v2531, %v2531
  %v2582 = vpack.c.b16 %v2532, %v2532
  %v2583 = vpack.c.b16 %v2533, %v2533
  %v2584 = vpack.c.b16 %v2534, %v2534
  %v2585 = vpack.c.b16 %v2535, %v2535
  %v2586 = vpack.c.b16 %v2536, %v2536
  %v2587 = vpack.c.b16 %v2537, %v2537
  %v2588 = vpack.c.b16 %v2538, %v2538
  %v2589 = vpack.c.b16 %v2539, %v2539
  %v2590 = vpack.c.b16 %v2540, %v2540
  %v2591 = vpack.c.b16 %v2541, %v2541
  %v2592 = vpack.c.b16 %v2542, %v2542
  %v2593 = vpack.c.b16 %v2543, %v2543
  %v2594 = vpack.c.b16 %v2544, %v2544
  %v2595 = vpack.c.b16 %v2545, %v2545
  %v2596 = vpack.c.b16 %v2546, %v2546
  %v2597 = vpack.c.b16 %v2547, %v2547
  %v2598 = vpack.c.b16 %v2548, %v2548
  %v2599 = vpack.c.b16 %v2549, %v2549
  %v2600 = vpack.c.b16 %v2550, %v2550
  %v2601 = vpack.c.b16 %v2551, %v2551
  %v2602 = vpack.c.b16 %v2552, %v2552
  %v2603 = vpack.c.b16 %v2553, %v2553
  %v2604 = vpack.c.b16 %v2554, %v2554
  %v2605 = vpack.c.b16 %v2555, %v2555
  %v2606 = vpack.c.b16 %v2556, %v2556
  %v2607 = vpack.c.b16 %v2557, %v2557
  %v2608 = vpack.c.b16 %v2558, %v2558
  %v2609 = vpack.c.b16 %v2559, %v2559
  %v2610 = vpack.c.b16 %v2560, %v2560
  %v2611 = vpack.c.b16 %v2561, %v2561
  %v2612 = vpack.c.b16 %v2562, %v2562
  %v2613 = vpack.c.b16 %v2563, %v2563
  %v2614 = vpack.c.b16 %v2564, %v2564
  %v2615 = vpack.c.b16 %v2565, %v2565
  %v2616 = vpack.c.b16 %v2566, %v2566
  %v2617 = vpack.c.b16 %v2567, %v2567
  %v2618 = vpack.c.b16 %v2568, %v2568
  %v2619 = vpack.c.b16 %v2569, %v2569
  %v2620 = vpack.c.b16 %v2570, %v2570
  %v2621 = vpack.c.b16 %v2571, %v2571
  %vm2672 = vcmask 44032
  %2673 = vst.msk [vmem:[%s3] sm:$0xf] %vm2672, %v2572
  %2674 = vst.msk [vmem:[%s3 + $0x4] sm:$0xf] %vm2672, %v2573
  %2675 = vst.msk [vmem:[%s3 + $0x8] sm:$0xf] %vm2672, %v2574
  %2676 = vst.msk [vmem:[%s3 + $0xc] sm:$0xf] %vm2672, %v2575
  %2677 = vst.msk [vmem:[%s3 + $0x10] sm:$0xf] %vm2672, %v2576
  %2678 = vst.msk [vmem:[%s3 + $0x14] sm:$0xf] %vm2672, %v2577
  %2679 = vst.msk [vmem:[%s3 + $0x18] sm:$0xf] %vm2672, %v2578
  %2680 = vst.msk [vmem:[%s3 + $0x1c] sm:$0xf] %vm2672, %v2579
  %2681 = vst.msk [vmem:[%s3 + $0x20] sm:$0xf] %vm2672, %v2580
  %2682 = vst.msk [vmem:[%s3 + $0x24] sm:$0xf] %vm2672, %v2581
  %2683 = vst.msk [vmem:[%s3 + $0x28] sm:$0xf] %vm2672, %v2582
  %2684 = vst.msk [vmem:[%s3 + $0x2c] sm:$0xf] %vm2672, %v2583
  %2685 = vst.msk [vmem:[%s3 + $0x30] sm:$0xf] %vm2672, %v2584
  %2686 = vst.msk [vmem:[%s3 + $0x34] sm:$0xf] %vm2672, %v2585
  %2687 = vst.msk [vmem:[%s3 + $0x38] sm:$0xf] %vm2672, %v2586
  %2688 = vst.msk [vmem:[%s3 + $0x3c] sm:$0xf] %vm2672, %v2587
  %2689 = vst.msk [vmem:[%s3 + $0x40] sm:$0xf] %vm2672, %v2588
  %2690 = vst.msk [vmem:[%s3 + $0x44] sm:$0xf] %vm2672, %v2589
  %2691 = vst.msk [vmem:[%s3 + $0x48] sm:$0xf] %vm2672, %v2590
  %2692 = vst.msk [vmem:[%s3 + $0x4c] sm:$0xf] %vm2672, %v2591
  %2693 = vst.msk [vmem:[%s3 + $0x50] sm:$0xf] %vm2672, %v2592
  %2694 = vst.msk [vmem:[%s3 + $0x54] sm:$0xf] %vm2672, %v2593
  %2695 = vst.msk [vmem:[%s3 + $0x58] sm:$0xf] %vm2672, %v2594
  %2696 = vst.msk [vmem:[%s3 + $0x5c] sm:$0xf] %vm2672, %v2595
  %2697 = vst.msk [vmem:[%s3 + $0x60] sm:$0xf] %vm2672, %v2596
  %2698 = vst.msk [vmem:[%s3 + $0x64] sm:$0xf] %vm2672, %v2597
  %2699 = vst.msk [vmem:[%s3 + $0x68] sm:$0xf] %vm2672, %v2598
  %2700 = vst.msk [vmem:[%s3 + $0x6c] sm:$0xf] %vm2672, %v2599
  %2701 = vst.msk [vmem:[%s3 + $0x70] sm:$0xf] %vm2672, %v2600
  %2702 = vst.msk [vmem:[%s3 + $0x74] sm:$0xf] %vm2672, %v2601
  %2703 = vst.msk [vmem:[%s3 + $0x78] sm:$0xf] %vm2672, %v2602
  %2704 = vst.msk [vmem:[%s3 + $0x7c] sm:$0xf] %vm2672, %v2603
  %2705 = vst.msk [vmem:[%s3 + $0x80] sm:$0xf] %vm2672, %v2604
  %2706 = vst.msk [vmem:[%s3 + $0x84] sm:$0xf] %vm2672, %v2605
  %2707 = vst.msk [vmem:[%s3 + $0x88] sm:$0xf] %vm2672, %v2606
  %2708 = vst.msk [vmem:[%s3 + $0x8c] sm:$0xf] %vm2672, %v2607
  %2709 = vst.msk [vmem:[%s3 + $0x90] sm:$0xf] %vm2672, %v2608
  %2710 = vst.msk [vmem:[%s3 + $0x94] sm:$0xf] %vm2672, %v2609
  %2711 = vst.msk [vmem:[%s3 + $0x98] sm:$0xf] %vm2672, %v2610
  %2712 = vst.msk [vmem:[%s3 + $0x9c] sm:$0xf] %vm2672, %v2611
  %2713 = vst.msk [vmem:[%s3 + $0xa0] sm:$0xf] %vm2672, %v2612
  %2714 = vst.msk [vmem:[%s3 + $0xa4] sm:$0xf] %vm2672, %v2613
  %2715 = vst.msk [vmem:[%s3 + $0xa8] sm:$0xf] %vm2672, %v2614
  %2716 = vst.msk [vmem:[%s3 + $0xac] sm:$0xf] %vm2672, %v2615
  %2717 = vst.msk [vmem:[%s3 + $0xb0] sm:$0xf] %vm2672, %v2616
  %2718 = vst.msk [vmem:[%s3 + $0xb4] sm:$0xf] %vm2672, %v2617
  %2719 = vst.msk [vmem:[%s3 + $0xb8] sm:$0xf] %vm2672, %v2618
  %2720 = vst.msk [vmem:[%s3 + $0xbc] sm:$0xf] %vm2672, %v2619
  %2721 = vst.msk [vmem:[%s3 + $0xc0] sm:$0xf] %vm2672, %v2620
  %2722 = vst.msk [vmem:[%s3 + $0xc4] sm:$0xf] %vm2672, %v2621
  // Predicated region
  $region14: #{lenet_forward.3} parent=0 // pred_check
    _
  $region15: #{lenet_forward.3} parent=0 // pred_check_branch
    %2724 = sbr.rel (0) target = $region17
  $region16: #{lenet_forward.3} parent=0 // pred_region
    _
  $region17: #{lenet_forward.3} parent=0 // pred_fallthru
    _
  // Predicated region
  $region18: #{lenet_forward.3} parent=0 // pred_check
    _
  $region19: #{lenet_forward.3} parent=0 // pred_check_branch
    %2726 = sbr.rel (0) target = $region21
  $region20: #{lenet_forward.3} parent=0 // pred_region
    _
  $region21: #{lenet_forward.3} parent=0 // pred_fallthru
    _

// kernel: lenet_forward.4
$region0: #{lenet_forward.4}
  #allocation0 [shape = 'u32[]', space=smem, size = 0x4, offset = 0x4, fixed_abs, tag = 'smem constant byte address 0x4 - core index']
  #allocation1 [shape = 'u32[144,128]{1,0:T(1,128)}', space=vmem, size = 0x12000, scoped, tag = 'internal scratch']
  %s0 = inlined_call_operand.vmem [shape: bf16[4,64,160], index: 0, kind: input, shape index: {}]
  %s1 = inlined_call_operand.vmem [shape: bf16[160,128], index: 1, kind: input, shape index: {}]
  %s2 = inlined_call_operand.vmem [shape: f32[1,128], index: 2, kind: input, shape index: {}]
  %s3 = inlined_call_operand.vmem [shape: bf16[64,16], index: 3, kind: output, shape index: {}]
  %s4 = sld [smem:[#allocation0]]
  $region22: #{lenet_forward.4} parent=0
    _
  %s6 = ssub.s32 1, %s4
  %s7 = scalar_select 0, %s6, %s4
  // Predicated region
  $region2: #{lenet_forward.4} parent=0 // pred_check
    _
  $region3: #{lenet_forward.4} parent=0 // pred_check_branch
    %9 = sbr.rel (0) target = $region5
  $region4: #{lenet_forward.4} parent=0 // pred_region
    _
  $region5: #{lenet_forward.4} parent=0 // pred_fallthru
    _
  // Predicated region
  $region6: #{lenet_forward.4} parent=0 // pred_check
    _
  $region7: #{lenet_forward.4} parent=0 // pred_check_branch
    %11 = sbr.rel (0) target = $region9
  $region8: #{lenet_forward.4} parent=0 // pred_region
    _
  $region9: #{lenet_forward.4} parent=0 // pred_fallthru
    _
  // Predicated region
  $region10: #{lenet_forward.4} parent=0 // pred_check
    _
  $region11: #{lenet_forward.4} parent=0 // pred_check_branch
    %13 = sbr.rel (0) target = $region13
  $region12: #{lenet_forward.4} parent=0 // pred_region
    _
  $region13: #{lenet_forward.4} parent=0 // pred_fallthru
    _
  %v15 = vld [vmem:[%s0] sm:$0xff]
  %v16 = vld [vmem:[%s0 + $0x8] sm:$0xff]
  %v17 = vld [vmem:[%s0 + $0x10] sm:$0xff]
  %v18 = vld [vmem:[%s0 + $0x18] sm:$0xff]
  %v19 = vld [vmem:[%s0 + $0x20] sm:$0xff]
  %v20 = vld [vmem:[%s0 + $0x28] sm:$0xff]
  %v21 = vld [vmem:[%s0 + $0x30] sm:$0xff]
  %v22 = vld [vmem:[%s0 + $0x38] sm:$0xff]
  %v23 = vld [vmem:[%s0 + $0x40] sm:$0xff]
  %v24 = vld [vmem:[%s0 + $0x48] sm:$0xff]
  %v25 = vld [vmem:[%s0 + $0x50] sm:$0xff]
  %v26 = vld [vmem:[%s0 + $0x58] sm:$0xff]
  %v27 = vld [vmem:[%s0 + $0x60] sm:$0xff]
  %v28 = vld [vmem:[%s0 + $0x68] sm:$0xff]
  %v29 = vld [vmem:[%s0 + $0x70] sm:$0xff]
  %v30 = vld [vmem:[%s0 + $0x78] sm:$0xff]
  %v31 = vld [vmem:[%s0 + $0x80] sm:$0xff]
  %v32 = vld [vmem:[%s0 + $0x88] sm:$0xff]
  %v33 = vld [vmem:[%s0 + $0x90] sm:$0xff]
  %v34 = vld [vmem:[%s0 + $0x98] sm:$0xff]
  %v35 = vld [vmem:[%s0 + $0xa0] sm:$0xff]
  %v36 = vld [vmem:[%s0 + $0xa8] sm:$0xff]
  %v37 = vld [vmem:[%s0 + $0xb0] sm:$0xff]
  %v38 = vld [vmem:[%s0 + $0xb8] sm:$0xff]
  %v39 = vld [vmem:[%s0 + $0xc0] sm:$0xff]
  %v40 = vld [vmem:[%s0 + $0xc8] sm:$0xff]
  %v41 = vld [vmem:[%s0 + $0xd0] sm:$0xff]
  %v42 = vld [vmem:[%s0 + $0xd8] sm:$0xff]
  %v43 = vld [vmem:[%s0 + $0xe0] sm:$0xff]
  %v44 = vld [vmem:[%s0 + $0xe8] sm:$0xff]
  %v45 = vld [vmem:[%s0 + $0xf0] sm:$0xff]
  %v46 = vld [vmem:[%s0 + $0xf8] sm:$0xff]
  %v47 = vld [vmem:[%s1] sm:$0xf]
  %v48 = vld [vmem:[%s1 + $0x4] sm:$0xf]
  %v49 = vld [vmem:[%s1 + $0x8] sm:$0xf]
  %v50 = vld [vmem:[%s1 + $0xc] sm:$0xf]
  %v51 = vld [vmem:[%s1 + $0x10] sm:$0xf]
  %v52 = vld [vmem:[%s1 + $0x14] sm:$0xf]
  %v53 = vld [vmem:[%s1 + $0x18] sm:$0xf]
  %v54 = vld [vmem:[%s1 + $0x1c] sm:$0xf]
  %v55 = vld [vmem:[%s1 + $0x20] sm:$0xf]
  %v56 = vld [vmem:[%s1 + $0x24] sm:$0xf]
  %v57 = vld [vmem:[%s1 + $0x28] sm:$0xf]
  %v58 = vld [vmem:[%s1 + $0x2c] sm:$0xf]
  %v59 = vld [vmem:[%s1 + $0x30] sm:$0xf]
  %v60 = vld [vmem:[%s1 + $0x34] sm:$0xf]
  %v61 = vld [vmem:[%s1 + $0x38] sm:$0xf]
  %v62 = vld [vmem:[%s1 + $0x3c] sm:$0xf]
  %v63 = vld [vmem:[%s1 + $0x40] sm:$0xf]
  %v64 = vld [vmem:[%s1 + $0x44] sm:$0xf]
  %v65 = vld [vmem:[%s1 + $0x48] sm:$0xf]
  %v66 = vld [vmem:[%s1 + $0x4c] sm:$0xf]
  %v67 = vld [vmem:[%s2] sm:$0x1]
  %v69 = vlaneseq
  %v70 = vshrl.u32 %v69, 7
  %v71 = vsub.s32 0, %v70
  %v72 = vrot.slane %v67, %v71
  %v106 = vunpack.c.l.b16 %v15
  %v107 = vunpack.c.h.b16 %v15
  %v108 = vunpack.c.l.b16 %v16
  %v109 = vunpack.c.h.b16 %v16
  %v110 = vunpack.c.l.b16 %v17
  %v111 = vunpack.c.h.b16 %v17
  %v112 = vunpack.c.l.b16 %v18
  %v113 = vunpack.c.h.b16 %v18
  %v114 = vunpack.c.l.b16 %v19
  %v115 = vunpack.c.h.b16 %v19
  %v116 = vunpack.c.l.b16 %v20
  %v117 = vunpack.c.h.b16 %v20
  %v118 = vunpack.c.l.b16 %v21
  %v119 = vunpack.c.h.b16 %v21
  %v120 = vunpack.c.l.b16 %v22
  %v121 = vunpack.c.h.b16 %v22
  %v122 = vunpack.c.l.b16 %v23
  %v123 = vunpack.c.h.b16 %v23
  %v124 = vunpack.c.l.b16 %v24
  %v125 = vunpack.c.h.b16 %v24
  %v126 = vunpack.c.l.b16 %v25
  %v127 = vunpack.c.h.b16 %v25
  %v128 = vunpack.c.l.b16 %v26
  %v129 = vunpack.c.h.b16 %v26
  %v130 = vunpack.c.l.b16 %v27
  %v131 = vunpack.c.h.b16 %v27
  %v132 = vunpack.c.l.b16 %v28
  %v133 = vunpack.c.h.b16 %v28
  %v134 = vunpack.c.l.b16 %v29
  %v135 = vunpack.c.h.b16 %v29
  %v136 = vunpack.c.l.b16 %v30
  %v137 = vunpack.c.h.b16 %v30
  %v138 = vunpack.c.l.b16 %v31
  %v139 = vunpack.c.h.b16 %v31
  %v140 = vunpack.c.l.b16 %v32
  %v141 = vunpack.c.h.b16 %v32
  %v142 = vunpack.c.l.b16 %v33
  %v143 = vunpack.c.h.b16 %v33
  %v144 = vunpack.c.l.b16 %v34
  %v145 = vunpack.c.h.b16 %v34
  %v146 = vunpack.c.l.b16 %v35
  %v147 = vunpack.c.h.b16 %v35
  %v148 = vunpack.c.l.b16 %v36
  %v149 = vunpack.c.h.b16 %v36
  %v150 = vunpack.c.l.b16 %v37
  %v151 = vunpack.c.h.b16 %v37
  %v152 = vunpack.c.l.b16 %v38
  %v153 = vunpack.c.h.b16 %v38
  %v154 = vunpack.c.l.b16 %v39
  %v155 = vunpack.c.h.b16 %v39
  %v156 = vunpack.c.l.b16 %v40
  %v157 = vunpack.c.h.b16 %v40
  %v158 = vunpack.c.l.b16 %v41
  %v159 = vunpack.c.h.b16 %v41
  %v160 = vunpack.c.l.b16 %v42
  %v161 = vunpack.c.h.b16 %v42
  %v162 = vunpack.c.l.b16 %v43
  %v163 = vunpack.c.h.b16 %v43
  %v164 = vunpack.c.l.b16 %v44
  %v165 = vunpack.c.h.b16 %v44
  %v166 = vunpack.c.l.b16 %v45
  %v167 = vunpack.c.h.b16 %v45
  %v168 = vunpack.c.l.b16 %v46
  %v169 = vunpack.c.h.b16 %v46
  %v170 = vpack.c.b16 %v108, %v106
  %v171 = vpack.c.b16 %v109, %v107
  %v172 = vpack.c.b16 %v112, %v110
  %v173 = vpack.c.b16 %v113, %v111
  %v174 = vpack.c.b16 %v116, %v114
  %v175 = vpack.c.b16 %v117, %v115
  %v176 = vpack.c.b16 %v120, %v118
  %v177 = vpack.c.b16 %v121, %v119
  %v178 = vpack.c.b16 %v124, %v122
  %v179 = vpack.c.b16 %v125, %v123
  %v180 = vpack.c.b16 %v128, %v126
  %v181 = vpack.c.b16 %v129, %v127
  %v182 = vpack.c.b16 %v132, %v130
  %v183 = vpack.c.b16 %v133, %v131
  %v184 = vpack.c.b16 %v136, %v134
  %v185 = vpack.c.b16 %v137, %v135
  %v186 = vpack.c.b16 %v140, %v138
  %v187 = vpack.c.b16 %v141, %v139
  %v188 = vpack.c.b16 %v144, %v142
  %v189 = vpack.c.b16 %v145, %v143
  %v190 = vpack.c.b16 %v148, %v146
  %v191 = vpack.c.b16 %v149, %v147
  %v192 = vpack.c.b16 %v152, %v150
  %v193 = vpack.c.b16 %v153, %v151
  %v194 = vpack.c.b16 %v156, %v154
  %v195 = vpack.c.b16 %v157, %v155
  %v196 = vpack.c.b16 %v160, %v158
  %v197 = vpack.c.b16 %v161, %v159
  %v198 = vpack.c.b16 %v164, %v162
  %v199 = vpack.c.b16 %v165, %v163
  %v200 = vpack.c.b16 %v168, %v166
  %v201 = vpack.c.b16 %v169, %v167
  %v238 = vunpack.c.l.b16 %v47
  %v239 = vunpack.c.l.b16 %v48
  %v240 = vunpack.c.l.b16 %v49
  %v241 = vunpack.c.l.b16 %v50
  %v242 = vunpack.c.l.b16 %v51
  %v243 = vunpack.c.l.b16 %v52
  %v244 = vunpack.c.l.b16 %v53
  %v245 = vunpack.c.l.b16 %v54
  %v246 = vunpack.c.l.b16 %v55
  %v247 = vunpack.c.l.b16 %v56
  %v248 = vunpack.c.l.b16 %v57
  %v249 = vunpack.c.l.b16 %v58
  %v250 = vunpack.c.l.b16 %v59
  %v251 = vunpack.c.l.b16 %v60
  %v252 = vunpack.c.l.b16 %v61
  %v253 = vunpack.c.l.b16 %v62
  %v254 = vunpack.c.l.b16 %v63
  %v255 = vunpack.c.l.b16 %v64
  %v256 = vunpack.c.l.b16 %v65
  %v257 = vunpack.c.l.b16 %v66
  %v258 = vpack.c.b16 %v239, %v238
  %v259 = vpack.c.b16 %v241, %v240
  %v260 = vpack.c.b16 %v243, %v242
  %v261 = vpack.c.b16 %v245, %v244
  %v262 = vpack.c.b16 %v247, %v246
  %v263 = vpack.c.b16 %v249, %v248
  %v264 = vpack.c.b16 %v251, %v250
  %v265 = vpack.c.b16 %v253, %v252
  %v266 = vpack.c.b16 %v255, %v254
  %v267 = vpack.c.b16 %v257, %v256
  %vm278 = vcmask 261120
  %v280 = vsel %vm278, %v171, 0
  %v283 = vsel %vm278, %v173, 0
  %v286 = vsel %vm278, %v175, 0
  %v289 = vsel %vm278, %v177, 0
  %v292 = vsel %vm278, %v179, 0
  %v295 = vsel %vm278, %v181, 0
  %v298 = vsel %vm278, %v183, 0
  %v301 = vsel %vm278, %v185, 0
  %v304 = vsel %vm278, %v187, 0
  %v307 = vsel %vm278, %v189, 0
  %v310 = vsel %vm278, %v191, 0
  %v313 = vsel %vm278, %v193, 0
  %v316 = vsel %vm278, %v195, 0
  %v319 = vsel %vm278, %v197, 0
  %v322 = vsel %vm278, %v199, 0
  %v325 = vsel %vm278, %v201, 0
  %327 = vmatprep.subr.bf16.mxu0 0
  %328 = vmatpush1.bf16.msra.mxu0 %v258
  %329 = vmatprep.subr.bf16.mxu0 0
  %330 = vmatpush1.bf16.msra.mxu0 %v259
  %331 = vmatprep.subr.bf16.mxu0 0
  %332 = vmatpush1.bf16.msra.mxu0 %v260
  %333 = vmatprep.subr.bf16.mxu0 0
  %334 = vmatpush1.bf16.msra.mxu0 %v261
  %335 = vmatprep.subr.bf16.mxu0 0
  %336 = vmatpush1.bf16.msra.mxu0 %v262
  %337 = vmatprep.subr.bf16.mxu0 0
  %338 = vmatpush1.bf16.msra.mxu0 %v263
  %339 = vmatprep.subr.bf16.mxu0 0
  %340 = vmatpush1.bf16.msra.mxu0 %v264
  %341 = vmatprep.subr.bf16.mxu0 0
  %342 = vmatpush1.bf16.msra.mxu0 %v265
  %343 = vmatprep.subr.bf16.mxu0 0
  %344 = vmatpush1.bf16.msra.mxu0 %v266
  %345 = vmatprep.subr.bf16.mxu0 0
  %346 = vmatpush1.bf16.msra.mxu0 %v267
  %347 = vmatprep.subr.bf16.mxu0 0
  %348 = vmatpush1.bf16.msra.mxu0 0
  %349 = vmatprep.subr.bf16.mxu0 0
  %350 = vmatpush1.bf16.msra.mxu0 0
  %351 = vmatprep.subr.bf16.mxu0 0
  %352 = vmatpush1.bf16.msra.mxu0 0
  %353 = vmatprep.subr.bf16.mxu0 0
  %354 = vmatpush1.bf16.msra.mxu0 0
  %355 = vmatprep.subr.bf16.mxu0 0
  %356 = vmatpush1.bf16.msra.mxu0 0
  %357 = vmatprep.subr.bf16.mxu0 0
  %358 = vmatpush1.bf16.msra.mxu0 0
  %359 = vmatprep.mubr.bf16.mxu0 %v280
  %360 = vmatmul.mubr.bf16.gmra.mrb[0].mxu0 %v170
  %v361 = vpop.f32.mrb[0].mxu0
  %v362 = vadd.f32 %v72, %v361
  %v363 = vpop.f32.mrb[0].mxu0
  %v364 = vpop.f32.mrb[0].mxu0
  %v365 = vadd.f32 %v72, %v364
  %v366 = vpop.f32.mrb[0].mxu0
  %367 = vmatprep.mubr.bf16.mxu0 %v283
  %368 = vmatmul.mubr.bf16.gmra.mrb[0].mxu0 %v172
  %v369 = vpop.f32.mrb[0].mxu0
  %v370 = vadd.f32 %v72, %v369
  %v371 = vpop.f32.mrb[0].mxu0
  %v372 = vpop.f32.mrb[0].mxu0
  %v373 = vadd.f32 %v72, %v372
  %v374 = vpop.f32.mrb[0].mxu0
  %375 = vmatprep.mubr.bf16.mxu0 %v286
  %376 = vmatmul.mubr.bf16.gmra.mrb[0].mxu0 %v174
  %v377 = vpop.f32.mrb[0].mxu0
  %v378 = vadd.f32 %v72, %v377
  %v379 = vpop.f32.mrb[0].mxu0
  %v380 = vpop.f32.mrb[0].mxu0
  %v381 = vadd.f32 %v72, %v380
  %v382 = vpop.f32.mrb[0].mxu0
  %383 = vmatprep.mubr.bf16.mxu0 %v289
  %384 = vmatmul.mubr.bf16.gmra.mrb[0].mxu0 %v176
  %v385 = vpop.f32.mrb[0].mxu0
  %v386 = vadd.f32 %v72, %v385
  %v387 = vpop.f32.mrb[0].mxu0
  %v388 = vpop.f32.mrb[0].mxu0
  %v389 = vadd.f32 %v72, %v388
  %v390 = vpop.f32.mrb[0].mxu0
  %391 = vmatprep.mubr.bf16.mxu0 %v292
  %392 = vmatmul.mubr.bf16.gmra.mrb[0].mxu0 %v178
  %v393 = vpop.f32.mrb[0].mxu0
  %v394 = vadd.f32 %v72, %v393
  %v395 = vpop.f32.mrb[0].mxu0
  %v396 = vpop.f32.mrb[0].mxu0
  %v397 = vadd.f32 %v72, %v396
  %v398 = vpop.f32.mrb[0].mxu0
  %399 = vmatprep.mubr.bf16.mxu0 %v295
  %400 = vmatmul.mubr.bf16.gmra.mrb[0].mxu0 %v180
  %v401 = vpop.f32.mrb[0].mxu0
  %v402 = vadd.f32 %v72, %v401
  %v403 = vpop.f32.mrb[0].mxu0
  %v404 = vpop.f32.mrb[0].mxu0
  %v405 = vadd.f32 %v72, %v404
  %v406 = vpop.f32.mrb[0].mxu0
  %407 = vmatprep.mubr.bf16.mxu0 %v298
  %408 = vmatmul.mubr.bf16.gmra.mrb[0].mxu0 %v182
  %v409 = vpop.f32.mrb[0].mxu0
  %v410 = vadd.f32 %v72, %v409
  %v411 = vpop.f32.mrb[0].mxu0
  %v412 = vpop.f32.mrb[0].mxu0
  %v413 = vadd.f32 %v72, %v412
  %v414 = vpop.f32.mrb[0].mxu0
  %415 = vmatprep.mubr.bf16.mxu0 %v301
  %416 = vmatmul.mubr.bf16.gmra.mrb[0].mxu0 %v184
  %v417 = vpop.f32.mrb[0].mxu0
  %v418 = vadd.f32 %v72, %v417
  %v419 = vpop.f32.mrb[0].mxu0
  %v420 = vpop.f32.mrb[0].mxu0
  %v421 = vadd.f32 %v72, %v420
  %v422 = vpop.f32.mrb[0].mxu0
  %423 = vmatprep.mubr.bf16.mxu0 %v304
  %424 = vmatmul.mubr.bf16.gmra.mrb[0].mxu0 %v186
  %v425 = vpop.f32.mrb[0].mxu0
  %v426 = vadd.f32 %v72, %v425
  %v427 = vpop.f32.mrb[0].mxu0
  %v428 = vpop.f32.mrb[0].mxu0
  %v429 = vadd.f32 %v72, %v428
  %v430 = vpop.f32.mrb[0].mxu0
  %431 = vmatprep.mubr.bf16.mxu0 %v307
  %432 = vmatmul.mubr.bf16.gmra.mrb[0].mxu0 %v188
  %v433 = vpop.f32.mrb[0].mxu0
  %v434 = vadd.f32 %v72, %v433
  %v435 = vpop.f32.mrb[0].mxu0
  %v436 = vpop.f32.mrb[0].mxu0
  %v437 = vadd.f32 %v72, %v436
  %v438 = vpop.f32.mrb[0].mxu0
  %439 = vmatprep.mubr.bf16.mxu0 %v310
  %440 = vmatmul.mubr.bf16.gmra.mrb[0].mxu0 %v190
  %v441 = vpop.f32.mrb[0].mxu0
  %v442 = vadd.f32 %v72, %v441
  %v443 = vpop.f32.mrb[0].mxu0
  %v444 = vpop.f32.mrb[0].mxu0
  %v445 = vadd.f32 %v72, %v444
  %v446 = vpop.f32.mrb[0].mxu0
  %447 = vmatprep.mubr.bf16.mxu0 %v313
  %448 = vmatmul.mubr.bf16.gmra.mrb[0].mxu0 %v192
  %v449 = vpop.f32.mrb[0].mxu0
  %v450 = vadd.f32 %v72, %v449
  %v451 = vpop.f32.mrb[0].mxu0
  %v452 = vpop.f32.mrb[0].mxu0
  %v453 = vadd.f32 %v72, %v452
  %v454 = vpop.f32.mrb[0].mxu0
  %455 = vmatprep.mubr.bf16.mxu0 %v316
  %456 = vmatmul.mubr.bf16.gmra.mrb[0].mxu0 %v194
  %v457 = vpop.f32.mrb[0].mxu0
  %v458 = vadd.f32 %v72, %v457
  %v459 = vpop.f32.mrb[0].mxu0
  %v460 = vpop.f32.mrb[0].mxu0
  %v461 = vadd.f32 %v72, %v460
  %v462 = vpop.f32.mrb[0].mxu0
  %463 = vmatprep.mubr.bf16.mxu0 %v319
  %464 = vmatmul.mubr.bf16.gmra.mrb[0].mxu0 %v196
  %v465 = vpop.f32.mrb[0].mxu0
  %v466 = vadd.f32 %v72, %v465
  %v467 = vpop.f32.mrb[0].mxu0
  %v468 = vpop.f32.mrb[0].mxu0
  %v469 = vadd.f32 %v72, %v468
  %v470 = vpop.f32.mrb[0].mxu0
  %471 = vmatprep.mubr.bf16.mxu0 %v322
  %472 = vmatmul.mubr.bf16.gmra.mrb[0].mxu0 %v198
  %v473 = vpop.f32.mrb[0].mxu0
  %v474 = vadd.f32 %v72, %v473
  %v475 = vpop.f32.mrb[0].mxu0
  %v476 = vpop.f32.mrb[0].mxu0
  %v477 = vadd.f32 %v72, %v476
  %v478 = vpop.f32.mrb[0].mxu0
  %479 = vmatprep.mubr.bf16.mxu0 %v325
  %480 = vmatmul.mubr.bf16.gmra.mrb[0].mxu0 %v200
  %v481 = vpop.f32.mrb[0].mxu0
  %v482 = vadd.f32 %v72, %v481
  %v483 = vpop.f32.mrb[0].mxu0
  %v484 = vpop.f32.mrb[0].mxu0
  %v485 = vadd.f32 %v72, %v484
  %v486 = vpop.f32.mrb[0].mxu0
  %487 = vdwg.mxu0
  %v488 = vmax.f32 %v362, 0.0
  %v489 = vmax.f32 %v365, 0.0
  %v490 = vmax.f32 %v370, 0.0
  %v491 = vmax.f32 %v373, 0.0
  %v492 = vmax.f32 %v378, 0.0
  %v493 = vmax.f32 %v381, 0.0
  %v494 = vmax.f32 %v386, 0.0
  %v495 = vmax.f32 %v389, 0.0
  %v496 = vmax.f32 %v394, 0.0
  %v497 = vmax.f32 %v397, 0.0
  %v498 = vmax.f32 %v402, 0.0
  %v499 = vmax.f32 %v405, 0.0
  %v500 = vmax.f32 %v410, 0.0
  %v501 = vmax.f32 %v413, 0.0
  %v502 = vmax.f32 %v418, 0.0
  %v503 = vmax.f32 %v421, 0.0
  %v504 = vmax.f32 %v426, 0.0
  %v505 = vmax.f32 %v429, 0.0
  %v506 = vmax.f32 %v434, 0.0
  %v507 = vmax.f32 %v437, 0.0
  %v508 = vmax.f32 %v442, 0.0
  %v509 = vmax.f32 %v445, 0.0
  %v510 = vmax.f32 %v450, 0.0
  %v511 = vmax.f32 %v453, 0.0
  %v512 = vmax.f32 %v458, 0.0
  %v513 = vmax.f32 %v461, 0.0
  %v514 = vmax.f32 %v466, 0.0
  %v515 = vmax.f32 %v469, 0.0
  %v516 = vmax.f32 %v474, 0.0
  %v517 = vmax.f32 %v477, 0.0
  %v518 = vmax.f32 %v482, 0.0
  %v519 = vmax.f32 %v485, 0.0
  %v520 = vmin.f32 %v488, 1.0
  %v521 = vmin.f32 %v489, 1.0
  %v522 = vmin.f32 %v490, 1.0
  %v523 = vmin.f32 %v491, 1.0
  %v524 = vmin.f32 %v492, 1.0
  %v525 = vmin.f32 %v493, 1.0
  %v526 = vmin.f32 %v494, 1.0
  %v527 = vmin.f32 %v495, 1.0
  %v528 = vmin.f32 %v496, 1.0
  %v529 = vmin.f32 %v497, 1.0
  %v530 = vmin.f32 %v498, 1.0
  %v531 = vmin.f32 %v499, 1.0
  %v532 = vmin.f32 %v500, 1.0
  %v533 = vmin.f32 %v501, 1.0
  %v534 = vmin.f32 %v502, 1.0
  %v535 = vmin.f32 %v503, 1.0
  %v536 = vmin.f32 %v504, 1.0
  %v537 = vmin.f32 %v505, 1.0
  %v538 = vmin.f32 %v506, 1.0
  %v539 = vmin.f32 %v507, 1.0
  %v540 = vmin.f32 %v508, 1.0
  %v541 = vmin.f32 %v509, 1.0
  %v542 = vmin.f32 %v510, 1.0
  %v543 = vmin.f32 %v511, 1.0
  %v544 = vmin.f32 %v512, 1.0
  %v545 = vmin.f32 %v513, 1.0
  %v546 = vmin.f32 %v514, 1.0
  %v547 = vmin.f32 %v515, 1.0
  %v548 = vmin.f32 %v516, 1.0
  %v549 = vmin.f32 %v517, 1.0
  %v550 = vmin.f32 %v518, 1.0
  %v551 = vmin.f32 %v519, 1.0
  %v552 = vadd.f32 %v520, %v528
  %v553 = vadd.f32 %v521, %v529
  %v554 = vadd.f32 %v522, %v530
  %v555 = vadd.f32 %v523, %v531
  %v556 = vadd.f32 %v524, %v532
  %v557 = vadd.f32 %v525, %v533
  %v558 = vadd.f32 %v526, %v534
  %v559 = vadd.f32 %v527, %v535
  %v560 = vadd.f32 %v552, %v536
  %v561 = vadd.f32 %v553, %v537
  %v562 = vadd.f32 %v554, %v538
  %v563 = vadd.f32 %v555, %v539
  %v564 = vadd.f32 %v556, %v540
  %v565 = vadd.f32 %v557, %v541
  %v566 = vadd.f32 %v558, %v542
  %v567 = vadd.f32 %v559, %v543
  %v568 = vadd.f32 %v560, %v544
  %v569 = vadd.f32 %v561, %v545
  %v570 = vadd.f32 %v562, %v546
  %v571 = vadd.f32 %v563, %v547
  %v572 = vadd.f32 %v564, %v548
  %v573 = vadd.f32 %v565, %v549
  %v574 = vadd.f32 %v566, %v550
  %v575 = vadd.f32 %v567, %v551
  %v576 = vmul.f32 %v568, 0.25
  %v577 = vmul.f32 %v569, 0.25
  %v578 = vmul.f32 %v570, 0.25
  %v579 = vmul.f32 %v571, 0.25
  %v580 = vmul.f32 %v572, 0.25
  %v581 = vmul.f32 %v573, 0.25
  %v582 = vmul.f32 %v574, 0.25
  %v583 = vmul.f32 %v575, 0.25
  %v584 = vpack.c.bf16 %v577, %v576
  %v585 = vpack.c.bf16 %v579, %v578
  %v586 = vpack.c.bf16 %v581, %v580
  %v587 = vpack.c.bf16 %v583, %v582
  %v592 = vunpack.c.l.b16 %v584
  %v593 = vunpack.c.h.b16 %v584
  %v594 = vunpack.c.l.b16 %v585
  %v595 = vunpack.c.h.b16 %v585
  %v596 = vunpack.c.l.b16 %v586
  %v597 = vunpack.c.h.b16 %v586
  %v598 = vunpack.c.l.b16 %v587
  %v599 = vunpack.c.h.b16 %v587
  %v600 = vpack.c.b16 %v592, %v592
  %v601 = vpack.c.b16 %v593, %v593
  %v602 = vpack.c.b16 %v594, %v594
  %v603 = vpack.c.b16 %v595, %v595
  %v604 = vpack.c.b16 %v596, %v596
  %v605 = vpack.c.b16 %v597, %v597
  %v606 = vpack.c.b16 %v598, %v598
  %v607 = vpack.c.b16 %v599, %v599
  %vm616 = vcmask 125952
  %617 = vst.msk [vmem:[%s3] sm:$0xf] %vm616, %v600
  %618 = vst.msk [vmem:[%s3 + $0x4] sm:$0xf] %vm616, %v601
  %619 = vst.msk [vmem:[%s3 + $0x8] sm:$0xf] %vm616, %v602
  %620 = vst.msk [vmem:[%s3 + $0xc] sm:$0xf] %vm616, %v603
  %621 = vst.msk [vmem:[%s3 + $0x10] sm:$0xf] %vm616, %v604
  %622 = vst.msk [vmem:[%s3 + $0x14] sm:$0xf] %vm616, %v605
  %623 = vst.msk [vmem:[%s3 + $0x18] sm:$0xf] %vm616, %v606
  %624 = vst.msk [vmem:[%s3 + $0x1c] sm:$0xf] %vm616, %v607
  // Predicated region
  $region14: #{lenet_forward.4} parent=0 // pred_check
    _
  $region15: #{lenet_forward.4} parent=0 // pred_check_branch
    %626 = sbr.rel (0) target = $region17
  $region16: #{lenet_forward.4} parent=0 // pred_region
    _
  $region17: #{lenet_forward.4} parent=0 // pred_fallthru
    _
  // Predicated region
  $region18: #{lenet_forward.4} parent=0 // pred_check
    _
  $region19: #{lenet_forward.4} parent=0 // pred_check_branch
    %628 = sbr.rel (0) target = $region21
  $region20: #{lenet_forward.4} parent=0 // pred_region
    _
  $region21: #{lenet_forward.4} parent=0 // pred_fallthru
    _

// kernel: lenet_forward.5
$region0: #{lenet_forward.5}
  #allocation0 [shape = 'u32[]', space=smem, size = 0x4, offset = 0x4, fixed_abs, tag = 'smem constant byte address 0x4 - core index']
  #allocation1 [shape = 'u32[144,128]{1,0:T(1,128)}', space=vmem, size = 0x12000, scoped, tag = 'internal scratch']
  %s0 = inlined_call_operand.vmem [shape: bf16[16,400], index: 0, kind: input, shape index: {}]
  %s1 = inlined_call_operand.vmem [shape: bf16[400,128], index: 1, kind: input, shape index: {}]
  %s2 = inlined_call_operand.vmem [shape: f32[1,128], index: 2, kind: input, shape index: {}]
  %s3 = inlined_call_operand.vmem [shape: bf16[128,128], index: 3, kind: input, shape index: {}]
  %s4 = inlined_call_operand.vmem [shape: f32[1,128], index: 4, kind: input, shape index: {}]
  %s5 = inlined_call_operand.vmem [shape: bf16[128,128], index: 5, kind: input, shape index: {}]
  %s6 = inlined_call_operand.vmem [shape: f32[1,128], index: 6, kind: input, shape index: {}]
  %s7 = inlined_call_operand.vmem [shape: f32[16,10], index: 7, kind: output, shape index: {}]
  %s8 = sld [smem:[#allocation0]]
  $region38: #{lenet_forward.5} parent=0
    _
  %s10 = ssub.s32 1, %s8
  %s11 = scalar_select 0, %s10, %s8
  // Predicated region
  $region2: #{lenet_forward.5} parent=0 // pred_check
    _
  $region3: #{lenet_forward.5} parent=0 // pred_check_branch
    %13 = sbr.rel (0) target = $region5
  $region4: #{lenet_forward.5} parent=0 // pred_region
    _
  $region5: #{lenet_forward.5} parent=0 // pred_fallthru
    _
  // Predicated region
  $region6: #{lenet_forward.5} parent=0 // pred_check
    _
  $region7: #{lenet_forward.5} parent=0 // pred_check_branch
    %15 = sbr.rel (0) target = $region9
  $region8: #{lenet_forward.5} parent=0 // pred_region
    _
  $region9: #{lenet_forward.5} parent=0 // pred_fallthru
    _
  // Predicated region
  $region10: #{lenet_forward.5} parent=0 // pred_check
    _
  $region11: #{lenet_forward.5} parent=0 // pred_check_branch
    %17 = sbr.rel (0) target = $region13
  $region12: #{lenet_forward.5} parent=0 // pred_region
    _
  $region13: #{lenet_forward.5} parent=0 // pred_fallthru
    _
  // Predicated region
  $region14: #{lenet_forward.5} parent=0 // pred_check
    _
  $region15: #{lenet_forward.5} parent=0 // pred_check_branch
    %19 = sbr.rel (0) target = $region17
  $region16: #{lenet_forward.5} parent=0 // pred_region
    _
  $region17: #{lenet_forward.5} parent=0 // pred_fallthru
    _
  // Predicated region
  $region18: #{lenet_forward.5} parent=0 // pred_check
    _
  $region19: #{lenet_forward.5} parent=0 // pred_check_branch
    %21 = sbr.rel (0) target = $region21
  $region20: #{lenet_forward.5} parent=0 // pred_region
    _
  $region21: #{lenet_forward.5} parent=0 // pred_fallthru
    _
  // Predicated region
  $region22: #{lenet_forward.5} parent=0 // pred_check
    _
  $region23: #{lenet_forward.5} parent=0 // pred_check_branch
    %23 = sbr.rel (0) target = $region25
  $region24: #{lenet_forward.5} parent=0 // pred_region
    _
  $region25: #{lenet_forward.5} parent=0 // pred_fallthru
    _
  // Predicated region
  $region26: #{lenet_forward.5} parent=0 // pred_check
    _
  $region27: #{lenet_forward.5} parent=0 // pred_check_branch
    %25 = sbr.rel (0) target = $region29
  $region28: #{lenet_forward.5} parent=0 // pred_region
    _
  $region29: #{lenet_forward.5} parent=0 // pred_fallthru
    _
  %v27 = vld [vmem:[%s0] sm:$0xff]
  %v28 = vld [vmem:[%s0 + $0x8] sm:$0xff]
  %v29 = vld [vmem:[%s0 + $0x10] sm:$0xff]
  %v30 = vld [vmem:[%s0 + $0x18] sm:$0xff]
  %v31 = vld [vmem:[%s1] sm:$0xf]
  %v32 = vld [vmem:[%s1 + $0x4] sm:$0xf]
  %v33 = vld [vmem:[%s1 + $0x8] sm:$0xf]
  %v34 = vld [vmem:[%s1 + $0xc] sm:$0xf]
  %v35 = vld [vmem:[%s1 + $0x10] sm:$0xf]
  %v36 = vld [vmem:[%s1 + $0x14] sm:$0xf]
  %v37 = vld [vmem:[%s1 + $0x18] sm:$0xf]
  %v38 = vld [vmem:[%s1 + $0x1c] sm:$0xf]
  %v39 = vld [vmem:[%s1 + $0x20] sm:$0xf]
  %v40 = vld [vmem:[%s1 + $0x24] sm:$0xf]
  %v41 = vld [vmem:[%s1 + $0x28] sm:$0xf]
  %v42 = vld [vmem:[%s1 + $0x2c] sm:$0xf]
  %v43 = vld [vmem:[%s1 + $0x30] sm:$0xf]
  %v44 = vld [vmem:[%s1 + $0x34] sm:$0xf]
  %v45 = vld [vmem:[%s1 + $0x38] sm:$0xf]
  %v46 = vld [vmem:[%s1 + $0x3c] sm:$0xf]
  %v47 = vld [vmem:[%s1 + $0x40] sm:$0xf]
  %v48 = vld [vmem:[%s1 + $0x44] sm:$0xf]
  %v49 = vld [vmem:[%s1 + $0x48] sm:$0xf]
  %v50 = vld [vmem:[%s1 + $0x4c] sm:$0xf]
  %v51 = vld [vmem:[%s1 + $0x50] sm:$0xf]
  %v52 = vld [vmem:[%s1 + $0x54] sm:$0xf]
  %v53 = vld [vmem:[%s1 + $0x58] sm:$0xf]
  %v54 = vld [vmem:[%s1 + $0x5c] sm:$0xf]
  %v55 = vld [vmem:[%s1 + $0x60] sm:$0xf]
  %v56 = vld [vmem:[%s1 + $0x64] sm:$0xf]
  %v57 = vld [vmem:[%s1 + $0x68] sm:$0xf]
  %v58 = vld [vmem:[%s1 + $0x6c] sm:$0xf]
  %v59 = vld [vmem:[%s1 + $0x70] sm:$0xf]
  %v60 = vld [vmem:[%s1 + $0x74] sm:$0xf]
  %v61 = vld [vmem:[%s1 + $0x78] sm:$0xf]
  %v62 = vld [vmem:[%s1 + $0x7c] sm:$0xf]
  %v63 = vld [vmem:[%s1 + $0x80] sm:$0xf]
  %v64 = vld [vmem:[%s1 + $0x84] sm:$0xf]
  %v65 = vld [vmem:[%s1 + $0x88] sm:$0xf]
  %v66 = vld [vmem:[%s1 + $0x8c] sm:$0xf]
  %v67 = vld [vmem:[%s1 + $0x90] sm:$0xf]
  %v68 = vld [vmem:[%s1 + $0x94] sm:$0xf]
  %v69 = vld [vmem:[%s1 + $0x98] sm:$0xf]
  %v70 = vld [vmem:[%s1 + $0x9c] sm:$0xf]
  %v71 = vld [vmem:[%s1 + $0xa0] sm:$0xf]
  %v72 = vld [vmem:[%s1 + $0xa4] sm:$0xf]
  %v73 = vld [vmem:[%s1 + $0xa8] sm:$0xf]
  %v74 = vld [vmem:[%s1 + $0xac] sm:$0xf]
  %v75 = vld [vmem:[%s1 + $0xb0] sm:$0xf]
  %v76 = vld [vmem:[%s1 + $0xb4] sm:$0xf]
  %v77 = vld [vmem:[%s1 + $0xb8] sm:$0xf]
  %v78 = vld [vmem:[%s1 + $0xbc] sm:$0xf]
  %v79 = vld [vmem:[%s1 + $0xc0] sm:$0xf]
  %v80 = vld [vmem:[%s1 + $0xc4] sm:$0xf]
  %v81 = vld [vmem:[%s2] sm:$0x1]
  %v83 = vlaneseq
  %v84 = vshrl.u32 %v83, 7
  %v85 = vsub.s32 0, %v84
  %v86 = vrot.slane %v81, %v85
  %v92 = vunpack.c.l.b16 %v27
  %v93 = vunpack.c.h.b16 %v27
  %v94 = vunpack.c.l.b16 %v28
  %v95 = vunpack.c.h.b16 %v28
  %v96 = vunpack.c.l.b16 %v29
  %v97 = vunpack.c.h.b16 %v29
  %v98 = vunpack.c.l.b16 %v30
  %v99 = vunpack.c.h.b16 %v30
  %v100 = vpack.c.b16 %v96, %v92
  %v101 = vpack.c.b16 %v97, %v93
  %v102 = vpack.c.b16 %v98, %v94
  %v103 = vpack.c.b16 %v99, %v95
  %v157 = vunpack.c.l.b16 %v31
  %v158 = vunpack.c.l.b16 %v32
  %v159 = vunpack.c.l.b16 %v33
  %v160 = vunpack.c.l.b16 %v34
  %v161 = vunpack.c.l.b16 %v35
  %v162 = vunpack.c.l.b16 %v36
  %v163 = vunpack.c.l.b16 %v37
  %v164 = vunpack.c.l.b16 %v38
  %v165 = vunpack.c.l.b16 %v39
  %v166 = vunpack.c.l.b16 %v40
  %v167 = vunpack.c.l.b16 %v41
  %v168 = vunpack.c.l.b16 %v42
  %v169 = vunpack.c.l.b16 %v43
  %v170 = vunpack.c.l.b16 %v44
  %v171 = vunpack.c.l.b16 %v45
  %v172 = vunpack.c.l.b16 %v46
  %v173 = vunpack.c.l.b16 %v47
  %v174 = vunpack.c.l.b16 %v48
  %v175 = vunpack.c.l.b16 %v49
  %v176 = vunpack.c.l.b16 %v50
  %v177 = vunpack.c.l.b16 %v51
  %v178 = vunpack.c.l.b16 %v52
  %v179 = vunpack.c.l.b16 %v53
  %v180 = vunpack.c.l.b16 %v54
  %v181 = vunpack.c.l.b16 %v55
  %v182 = vunpack.c.l.b16 %v56
  %v183 = vunpack.c.l.b16 %v57
  %v184 = vunpack.c.l.b16 %v58
  %v185 = vunpack.c.l.b16 %v59
  %v186 = vunpack.c.l.b16 %v60
  %v187 = vunpack.c.l.b16 %v61
  %v188 = vunpack.c.l.b16 %v62
  %v189 = vunpack.c.l.b16 %v63
  %v190 = vunpack.c.l.b16 %v64
  %v191 = vunpack.c.l.b16 %v65
  %v192 = vunpack.c.l.b16 %v66
  %v193 = vunpack.c.l.b16 %v67
  %v194 = vunpack.c.l.b16 %v68
  %v195 = vunpack.c.l.b16 %v69
  %v196 = vunpack.c.l.b16 %v70
  %v197 = vunpack.c.l.b16 %v71
  %v198 = vunpack.c.l.b16 %v72
  %v199 = vunpack.c.l.b16 %v73
  %v200 = vunpack.c.l.b16 %v74
  %v201 = vunpack.c.l.b16 %v75
  %v202 = vunpack.c.l.b16 %v76
  %v203 = vunpack.c.l.b16 %v77
  %v204 = vunpack.c.l.b16 %v78
  %v205 = vunpack.c.l.b16 %v79
  %v206 = vunpack.c.l.b16 %v80
  %v207 = vpack.c.b16 %v158, %v157
  %v208 = vpack.c.b16 %v160, %v159
  %v209 = vpack.c.b16 %v162, %v161
  %v210 = vpack.c.b16 %v164, %v163
  %v211 = vpack.c.b16 %v166, %v165
  %v212 = vpack.c.b16 %v168, %v167
  %v213 = vpack.c.b16 %v170, %v169
  %v214 = vpack.c.b16 %v172, %v171
  %v215 = vpack.c.b16 %v174, %v173
  %v216 = vpack.c.b16 %v176, %v175
  %v217 = vpack.c.b16 %v178, %v177
  %v218 = vpack.c.b16 %v180, %v179
  %v219 = vpack.c.b16 %v182, %v181
  %v220 = vpack.c.b16 %v184, %v183
  %v221 = vpack.c.b16 %v186, %v185
  %v222 = vpack.c.b16 %v188, %v187
  %v223 = vpack.c.b16 %v190, %v189
  %v224 = vpack.c.b16 %v192, %v191
  %v225 = vpack.c.b16 %v194, %v193
  %v226 = vpack.c.b16 %v196, %v195
  %v227 = vpack.c.b16 %v198, %v197
  %v228 = vpack.c.b16 %v200, %v199
  %v229 = vpack.c.b16 %v202, %v201
  %v230 = vpack.c.b16 %v204, %v203
  %v231 = vpack.c.b16 %v206, %v205
  %vm257 = vcmask 130048
  %v259 = vsel %vm257, %v103, 0
  %261 = vmatprep.subr.bf16.mxu0 0
  %262 = vmatpush1.bf16.msra.mxu0 %v207
  %263 = vmatprep.subr.bf16.mxu0 0
  %264 = vmatpush1.bf16.msra.mxu0 %v208
  %265 = vmatprep.subr.bf16.mxu0 0
  %266 = vmatpush1.bf16.msra.mxu0 %v209
  %267 = vmatprep.subr.bf16.mxu0 0
  %268 = vmatpush1.bf16.msra.mxu0 %v210
  %269 = vmatprep.subr.bf16.mxu0 0
  %270 = vmatpush1.bf16.msra.mxu0 %v211
  %271 = vmatprep.subr.bf16.mxu0 0
  %272 = vmatpush1.bf16.msra.mxu0 %v212
  %273 = vmatprep.subr.bf16.mxu0 0
  %274 = vmatpush1.bf16.msra.mxu0 %v213
  %275 = vmatprep.subr.bf16.mxu0 0
  %276 = vmatpush1.bf16.msra.mxu0 %v214
  %277 = vmatprep.subr.bf16.mxu0 0
  %278 = vmatpush1.bf16.msra.mxu0 %v215
  %279 = vmatprep.subr.bf16.mxu0 0
  %280 = vmatpush1.bf16.msra.mxu0 %v216
  %281 = vmatprep.subr.bf16.mxu0 0
  %282 = vmatpush1.bf16.msra.mxu0 %v217
  %283 = vmatprep.subr.bf16.mxu0 0
  %284 = vmatpush1.bf16.msra.mxu0 %v218
  %285 = vmatprep.subr.bf16.mxu0 0
  %286 = vmatpush1.bf16.msra.mxu0 %v219
  %287 = vmatprep.subr.bf16.mxu0 0
  %288 = vmatpush1.bf16.msra.mxu0 %v220
  %289 = vmatprep.subr.bf16.mxu0 0
  %290 = vmatpush1.bf16.msra.mxu0 %v221
  %291 = vmatprep.subr.bf16.mxu0 0
  %292 = vmatpush1.bf16.msra.mxu0 %v222
  %293 = vmatprep.mubr.bf16.mxu0 %v101
  %294 = vmatmul.mubr.bf16.gmra.mrb[0].mxu0 %v100
  %v295 = vpop.f32.mrb[0].mxu0
  %v296 = vadd.f32 %v86, %v295
  %v297 = vpop.f32.mrb[0].mxu0
  %v298 = vpop.f32.mrb[0].mxu0
  %v299 = vadd.f32 %v86, %v298
  %v300 = vpop.f32.mrb[0].mxu0
  %301 = vdwg.mxu0
  %302 = vmatprep.subr.bf16.mxu0 0
  %303 = vmatpush1.bf16.msra.mxu0 %v223
  %304 = vmatprep.subr.bf16.mxu0 0
  %305 = vmatpush1.bf16.msra.mxu0 %v224
  %306 = vmatprep.subr.bf16.mxu0 0
  %307 = vmatpush1.bf16.msra.mxu0 %v225
  %308 = vmatprep.subr.bf16.mxu0 0
  %309 = vmatpush1.bf16.msra.mxu0 %v226
  %310 = vmatprep.subr.bf16.mxu0 0
  %311 = vmatpush1.bf16.msra.mxu0 %v227
  %312 = vmatprep.subr.bf16.mxu0 0
  %313 = vmatpush1.bf16.msra.mxu0 %v228
  %314 = vmatprep.subr.bf16.mxu0 0
  %315 = vmatpush1.bf16.msra.mxu0 %v229
  %316 = vmatprep.subr.bf16.mxu0 0
  %317 = vmatpush1.bf16.msra.mxu0 %v230
  %318 = vmatprep.subr.bf16.mxu0 0
  %319 = vmatpush1.bf16.msra.mxu0 %v231
  %320 = vmatprep.subr.bf16.mxu0 0
  %321 = vmatpush1.bf16.msra.mxu0 0
  %322 = vmatprep.subr.bf16.mxu0 0
  %323 = vmatpush1.bf16.msra.mxu0 0
  %324 = vmatprep.subr.bf16.mxu0 0
  %325 = vmatpush1.bf16.msra.mxu0 0
  %326 = vmatprep.subr.bf16.mxu0 0
  %327 = vmatpush1.bf16.msra.mxu0 0
  %328 = vmatprep.subr.bf16.mxu0 0
  %329 = vmatpush1.bf16.msra.mxu0 0
  %330 = vmatprep.subr.bf16.mxu0 0
  %331 = vmatpush1.bf16.msra.mxu0 0
  %332 = vmatprep.subr.bf16.mxu0 0
  %333 = vmatpush1.bf16.msra.mxu0 0
  %334 = vmatprep.mubr.bf16.mxu0 %v259
  %335 = vmatmul.mubr.bf16.gmra.mrb[0].mxu0 %v102
  %v336 = vpop.f32.mrb[0].mxu0
  %v337 = vadd.f32 %v296, %v336
  %v338 = vpop.f32.mrb[0].mxu0
  %v339 = vpop.f32.mrb[0].mxu0
  %v340 = vadd.f32 %v299, %v339
  %v341 = vpop.f32.mrb[0].mxu0
  %342 = vdwg.mxu0
  %v343 = vmax.f32 %v337, 0.0
  %v344 = vmax.f32 %v340, 0.0
  %v345 = vmin.f32 %v343, 1.0
  %v346 = vmin.f32 %v344, 1.0
  %v347 = vpack.c.bf16 %v346, %v345
  %v348 = vld [vmem:[%s3] sm:$0xf]
  %v349 = vld [vmem:[%s3 + $0x4] sm:$0xf]
  %v350 = vld [vmem:[%s3 + $0x8] sm:$0xf]
  %v351 = vld [vmem:[%s3 + $0xc] sm:$0xf]
  %v352 = vld [vmem:[%s3 + $0x10] sm:$0xf]
  %v353 = vld [vmem:[%s3 + $0x14] sm:$0xf]
  %v354 = vld [vmem:[%s3 + $0x18] sm:$0xf]
  %v355 = vld [vmem:[%s3 + $0x1c] sm:$0xf]
  %v356 = vld [vmem:[%s3 + $0x20] sm:$0xf]
  %v357 = vld [vmem:[%s3 + $0x24] sm:$0xf]
  %v358 = vld [vmem:[%s3 + $0x28] sm:$0xf]
  %v359 = vld [vmem:[%s3 + $0x2c] sm:$0xf]
  %v360 = vld [vmem:[%s3 + $0x30] sm:$0xf]
  %v361 = vld [vmem:[%s3 + $0x34] sm:$0xf]
  %v362 = vld [vmem:[%s3 + $0x38] sm:$0xf]
  %v363 = vld [vmem:[%s3 + $0x3c] sm:$0xf]
  %v364 = vld [vmem:[%s4] sm:$0x1]
  %v366 = vlaneseq
  %v367 = vshrl.u32 %v366, 7
  %v368 = vsub.s32 0, %v367
  %v369 = vrot.slane %v364, %v368
  %v387 = vunpack.c.l.b16 %v348
  %v388 = vunpack.c.l.b16 %v349
  %v389 = vunpack.c.l.b16 %v350
  %v390 = vunpack.c.l.b16 %v351
  %v391 = vunpack.c.l.b16 %v352
  %v392 = vunpack.c.l.b16 %v353
  %v393 = vunpack.c.l.b16 %v354
  %v394 = vunpack.c.l.b16 %v355
  %v395 = vunpack.c.l.b16 %v356
  %v396 = vunpack.c.l.b16 %v357
  %v397 = vunpack.c.l.b16 %v358
  %v398 = vunpack.c.l.b16 %v359
  %v399 = vunpack.c.l.b16 %v360
  %v400 = vunpack.c.l.b16 %v361
  %v401 = vunpack.c.l.b16 %v362
  %v402 = vunpack.c.l.b16 %v363
  %v403 = vpack.c.b16 %v388, %v387
  %v404 = vpack.c.b16 %v390, %v389
  %v405 = vpack.c.b16 %v392, %v391
  %v406 = vpack.c.b16 %v394, %v393
  %v407 = vpack.c.b16 %v396, %v395
  %v408 = vpack.c.b16 %v398, %v397
  %v409 = vpack.c.b16 %v400, %v399
  %v410 = vpack.c.b16 %v402, %v401
  %419 = vmatprep.subr.bf16.mxu0 0
  %420 = vmatpush1.bf16.msra.mxu0 %v403
  %421 = vmatprep.subr.bf16.mxu0 0
  %422 = vmatpush1.bf16.msra.mxu0 %v404
  %423 = vmatprep.subr.bf16.mxu0 0
  %424 = vmatpush1.bf16.msra.mxu0 %v405
  %425 = vmatprep.subr.bf16.mxu0 0
  %426 = vmatpush1.bf16.msra.mxu0 %v406
  %427 = vmatprep.subr.bf16.mxu0 0
  %428 = vmatpush1.bf16.msra.mxu0 %v407
  %429 = vmatprep.subr.bf16.mxu0 0
  %430 = vmatpush1.bf16.msra.mxu0 %v408
  %431 = vmatprep.subr.bf16.mxu0 0
  %432 = vmatpush1.bf16.msra.mxu0 %v409
  %433 = vmatprep.subr.bf16.mxu0 0
  %434 = vmatpush1.bf16.msra.mxu0 %v410
  %435 = vmatprep.subr.bf16.mxu0 0
  %436 = vmatpush1.bf16.msra.mxu0 0
  %437 = vmatprep.subr.bf16.mxu0 0
  %438 = vmatpush1.bf16.msra.mxu0 0
  %439 = vmatprep.subr.bf16.mxu0 0
  %440 = vmatpush1.bf16.msra.mxu0 0
  %441 = vmatprep.subr.bf16.mxu0 0
  %442 = vmatpush1.bf16.msra.mxu0 0
  %443 = vmatprep.subr.bf16.mxu0 0
  %444 = vmatpush1.bf16.msra.mxu0 0
  %445 = vmatprep.subr.bf16.mxu0 0
  %446 = vmatpush1.bf16.msra.mxu0 0
  %447 = vmatprep.subr.bf16.mxu0 0
  %448 = vmatpush1.bf16.msra.mxu0 0
  %449 = vmatprep.subr.bf16.mxu0 0
  %450 = vmatpush1.bf16.msra.mxu0 0
  %451 = vmatprep.mubr.bf16.mxu0 0
  %452 = vmatmul.mubr.bf16.gmra.mrb[0].mxu0 %v347
  %v453 = vpop.f32.mrb[0].mxu0
  %v454 = vadd.f32 %v369, %v453
  %v455 = vpop.f32.mrb[0].mxu0
  %v456 = vpop.f32.mrb[0].mxu0
  %v457 = vadd.f32 %v369, %v456
  %v458 = vpop.f32.mrb[0].mxu0
  %459 = vdwg.mxu0
  %v460 = vmax.f32 %v454, 0.0
  %v461 = vmax.f32 %v457, 0.0
  %v462 = vmin.f32 %v460, 1.0
  %v463 = vmin.f32 %v461, 1.0
  %v464 = vpack.c.bf16 %v463, %v462
  %v465 = vld [vmem:[%s5] sm:$0xf]
  %v466 = vld [vmem:[%s5 + $0x4] sm:$0xf]
  %v467 = vld [vmem:[%s5 + $0x8] sm:$0xf]
  %v468 = vld [vmem:[%s5 + $0xc] sm:$0xf]
  %v469 = vld [vmem:[%s5 + $0x10] sm:$0xf]
  %v470 = vld [vmem:[%s5 + $0x14] sm:$0xf]
  %v471 = vld [vmem:[%s5 + $0x18] sm:$0xf]
  %v472 = vld [vmem:[%s5 + $0x1c] sm:$0xf]
  %v473 = vld [vmem:[%s5 + $0x20] sm:$0xf]
  %v474 = vld [vmem:[%s5 + $0x24] sm:$0xf]
  %v475 = vld [vmem:[%s5 + $0x28] sm:$0xf]
  %v476 = vld [vmem:[%s5 + $0x2c] sm:$0xf]
  %v477 = vld [vmem:[%s5 + $0x30] sm:$0xf]
  %v478 = vld [vmem:[%s5 + $0x34] sm:$0xf]
  %v479 = vld [vmem:[%s5 + $0x38] sm:$0xf]
  %v480 = vld [vmem:[%s5 + $0x3c] sm:$0xf]
  %v481 = vld [vmem:[%s6] sm:$0x1]
  %v483 = vlaneseq
  %v484 = vshrl.u32 %v483, 7
  %v485 = vsub.s32 0, %v484
  %v486 = vrot.slane %v481, %v485
  %v504 = vunpack.c.l.b16 %v465
  %v505 = vunpack.c.l.b16 %v466
  %v506 = vunpack.c.l.b16 %v467
  %v507 = vunpack.c.l.b16 %v468
  %v508 = vunpack.c.l.b16 %v469
  %v509 = vunpack.c.l.b16 %v470
  %v510 = vunpack.c.l.b16 %v471
  %v511 = vunpack.c.l.b16 %v472
  %v512 = vunpack.c.l.b16 %v473
  %v513 = vunpack.c.l.b16 %v474
  %v514 = vunpack.c.l.b16 %v475
  %v515 = vunpack.c.l.b16 %v476
  %v516 = vunpack.c.l.b16 %v477
  %v517 = vunpack.c.l.b16 %v478
  %v518 = vunpack.c.l.b16 %v479
  %v519 = vunpack.c.l.b16 %v480
  %v520 = vpack.c.b16 %v505, %v504
  %v521 = vpack.c.b16 %v507, %v506
  %v522 = vpack.c.b16 %v509, %v508
  %v523 = vpack.c.b16 %v511, %v510
  %v524 = vpack.c.b16 %v513, %v512
  %v525 = vpack.c.b16 %v515, %v514
  %v526 = vpack.c.b16 %v517, %v516
  %v527 = vpack.c.b16 %v519, %v518
  %536 = vmatprep.subr.bf16.mxu0 0
  %537 = vmatpush1.bf16.msra.mxu0 %v520
  %538 = vmatprep.subr.bf16.mxu0 0
  %539 = vmatpush1.bf16.msra.mxu0 %v521
  %540 = vmatprep.subr.bf16.mxu0 0
  %541 = vmatpush1.bf16.msra.mxu0 %v522
  %542 = vmatprep.subr.bf16.mxu0 0
  %543 = vmatpush1.bf16.msra.mxu0 %v523
  %544 = vmatprep.subr.bf16.mxu0 0
  %545 = vmatpush1.bf16.msra.mxu0 %v524
  %546 = vmatprep.subr.bf16.mxu0 0
  %547 = vmatpush1.bf16.msra.mxu0 %v525
  %548 = vmatprep.subr.bf16.mxu0 0
  %549 = vmatpush1.bf16.msra.mxu0 %v526
  %550 = vmatprep.subr.bf16.mxu0 0
  %551 = vmatpush1.bf16.msra.mxu0 %v527
  %552 = vmatprep.subr.bf16.mxu0 0
  %553 = vmatpush1.bf16.msra.mxu0 0
  %554 = vmatprep.subr.bf16.mxu0 0
  %555 = vmatpush1.bf16.msra.mxu0 0
  %556 = vmatprep.subr.bf16.mxu0 0
  %557 = vmatpush1.bf16.msra.mxu0 0
  %558 = vmatprep.subr.bf16.mxu0 0
  %559 = vmatpush1.bf16.msra.mxu0 0
  %560 = vmatprep.subr.bf16.mxu0 0
  %561 = vmatpush1.bf16.msra.mxu0 0
  %562 = vmatprep.subr.bf16.mxu0 0
  %563 = vmatpush1.bf16.msra.mxu0 0
  %564 = vmatprep.subr.bf16.mxu0 0
  %565 = vmatpush1.bf16.msra.mxu0 0
  %566 = vmatprep.subr.bf16.mxu0 0
  %567 = vmatpush1.bf16.msra.mxu0 0
  %568 = vmatprep.mubr.bf16.mxu0 0
  %569 = vmatmul.mubr.bf16.gmra.mrb[0].mxu0 %v464
  %v570 = vpop.f32.mrb[0].mxu0
  %v571 = vadd.f32 %v486, %v570
  %v572 = vpop.f32.mrb[0].mxu0
  %v573 = vpop.f32.mrb[0].mxu0
  %v574 = vadd.f32 %v486, %v573
  %v575 = vpop.f32.mrb[0].mxu0
  %576 = vdwg.mxu0
  %vm577 = vcmask 80896
  %578 = vst.msk [vmem:[%s7] sm:$0xff] %vm577, %v571
  %579 = vst.msk [vmem:[%s7 + $0x8] sm:$0xff] %vm577, %v574
  // Predicated region
  $region30: #{lenet_forward.5} parent=0 // pred_check
    _
  $region31: #{lenet_forward.5} parent=0 // pred_check_branch
    %581 = sbr.rel (0) target = $region33
  $region32: #{lenet_forward.5} parent=0 // pred_region
    _
  $region33: #{lenet_forward.5} parent=0 // pred_fallthru
    _
  // Predicated region
  $region34: #{lenet_forward.5} parent=0 // pred_check
    _
  $region35: #{lenet_forward.5} parent=0 // pred_check_branch
    %583 = sbr.rel (0) target = $region37
  $region36: #{lenet_forward.5} parent=0 // pred_region
    _
  $region37: #{lenet_forward.5} parent=0 // pred_fallthru
    _

</llo_original>
